<compile_context>
chip_gen: v6e
topology: v6e:2x2x1
jax: 0.10.0
libtpu: 0.0.40
codegen_flags: <defaults>
</compile_context>

<pallas_src>
import math
from functools import partial

import jax
import jax.numpy as jnp
import numpy as np
from jax.experimental import pallas as pl
from jax.experimental.pallas import tpu as pltpu

IN_SHAPE = 2
OUT_SHAPE = 2
NUM_LAYERS = 2
CHANNELS = 128
BATCH = 8
ACT_W = 8          # narrow lane-padded activation slab: col0=cond, cols1..=inputs


def _round_up(x, m):
    return -(-x // m) * m


def _row_layout(num_layers, in_dim):
    """Row indices inside the coalesced 'small stack' (each row is (1, C))."""
    rows = {"coeff": 0, "phase": 1, "b_t1": 2, "b_t2_in": 3}
    for l in range(num_layers):
        rows[f"b_l{l}"] = 4 + l
    for d in range(in_dim):
        rows[f"w_in{d}"] = 4 + num_layers + d
    n_rows = _round_up(4 + num_layers + in_dim, 8)
    return rows, n_rows


# ---------------------------------------------------------------------------
# Exact-erf GELU (PyTorch nn.GELU() default). erf via Abramowitz-Stegun 7.1.26
# (max abs error 1.5e-7) so it lowers in Pallas without relying on lax.erf.
# The same helper is used by the pure-JAX reference, so kernel-vs-reference
# differences reflect only matmul precision / summation order.
# ---------------------------------------------------------------------------
_ERF_A = (0.254829592, -0.284496736, 1.421413741, -1.453152027, 1.061405429)
_ERF_P = 0.3275911


def _erf(x):
    a1, a2, a3, a4, a5 = _ERF_A
    ax = jnp.abs(x)
    t = 1.0 / (1.0 + _ERF_P * ax)
    poly = ((((a5 * t + a4) * t + a3) * t + a2) * t + a1) * t
    y = 1.0 - poly * jnp.exp(-(ax * ax))
    return jnp.where(x < 0.0, -y, y)


def _gelu_exact(x):
    return 0.5 * x * (1.0 + _erf(x * (1.0 / math.sqrt(2.0))))


# ---------------------------------------------------------------------------
# Kernel
# ---------------------------------------------------------------------------
def fourier_mlp_kernel(act_ref, small_ref, w_t1_ref, big_ref, w_out_ref, b_out_ref,
                       o_ref, *, num_layers, in_dim, split_t1):
    rows, _ = _row_layout(num_layers, in_dim)
    small = small_ref[...]                                  # (n_rows, C) f32

    def row(name):
        r = rows[name]
        return small[r:r + 1, :]                            # (1, C)

    mm = w_t1_ref.dtype                                     # MXU operand dtype
    # Full f32 MXU passes only in the parity mode; bf16 uses native precision.
    prec = jax.lax.Precision.HIGHEST if mm == jnp.float32 else None
    C = small.shape[1]

    act = act_ref[...]                                      # (tb, ACT_W) narrow slab
    cond = act[:, 0:1]                                      # (tb, 1)

    # Fourier features: sin/cos(coeff * t + phase) -- VPU/EUP, f32.
    arg = cond * row("coeff") + row("phase")
    sin_e = jnp.sin(arg)
    cos_e = jnp.cos(arg)

    b_t1 = row("b_t1")
    if split_t1:
        # v5e path: two native K=128 contractions (4x128^2 MXU).
        h = (jnp.dot(sin_e.astype(mm), w_t1_ref[:C],
                     preferred_element_type=jnp.float32, precision=prec)
             + jnp.dot(cos_e.astype(mm), w_t1_ref[C:],
                       preferred_element_type=jnp.float32, precision=prec)
             + b_t1)
    else:
        # v6e/v7x path: one fused K=256 contraction (2x256^2 MXU); the lane
        # concat of two vreg-aligned (tb,128) arrays is layout-only.
        te = jnp.concatenate([sin_e, cos_e], axis=-1).astype(mm)   # (tb, 2C)
        h = jnp.dot(te, w_t1_ref[...],
                    preferred_element_type=jnp.float32, precision=prec) + b_t1
    h = _gelu_exact(h)

    # b_t2_in = b_t2 + b_in (folded on the host).
    embed_cond = (jnp.dot(h.astype(mm), big_ref[0],
                          preferred_element_type=jnp.float32, precision=prec)
                  + row("b_t2_in"))

    # input_embed Linear(in_dim, C): tiny K -> broadcast FMAs on the VPU (f32).
    embed_ins = act[:, 1:2] * row("w_in0")
    for d in range(1, in_dim):
        embed_ins = embed_ins + act[:, 1 + d:2 + d] * row(f"w_in{d}")

    # residual stack: GELU, [Linear(C,C) + GELU] * num_layers, Linear(C, out)
    z = _gelu_exact(embed_ins + embed_cond)
    for l in range(num_layers):
        z = _gelu_exact(
            jnp.dot(z.astype(mm), big_ref[1 + l],
                    preferred_element_type=jnp.float32, precision=prec)
            + row(f"b_l{l}"))

    # output head: weight padded only to 8 lanes -> 16x less HBM writeback
    # than a 128-lane slab; wrapper slices [:, :out_dim].
    out = (jnp.dot(z.astype(mm), w_out_ref[...],
                   preferred_element_type=jnp.float32, precision=prec)
           + b_out_ref[...])
    o_ref[...] = out.astype(o_ref.dtype)


# ---------------------------------------------------------------------------
# Host-side packing / wrapper
# ---------------------------------------------------------------------------
def pack_params(p, *, channels=CHANNELS, in_dim=IN_SHAPE, out_dim=OUT_SHAPE,
                num_layers=NUM_LAYERS, mm_dtype=jnp.bfloat16):
    """Coalesce all FourierMLP parameters into 5 arrays (done once on host).

    mm_dtype: dtype of the MXU weights (bf16 = fast path; f32 = 1e-5 parity).
    """
    C = channels
    assert C % 128 == 0, "channels must be a multiple of the 128-lane width"
    out_pad = max(8, _round_up(out_dim, 8))
    rows, n_rows = _row_layout(num_layers, in_dim)

    small = jnp.zeros((n_rows, C), jnp.float32)
    small = small.at[rows["coeff"]].set(p["coeff"].reshape(C))
    small = small.at[rows["phase"]].set(p["phase"].reshape(C))
    small = small.at[rows["b_t1"]].set(p["b_t1"].reshape(C))
    small = small.at[rows["b_t2_in"]].set((p["b_t2"] + p["b_in"]).reshape(C))
    for l in range(num_layers):
        small = small.at[rows[f"b_l{l}"]].set(p["b_l"][l].reshape(C))
    for d in range(in_dim):
        small = small.at[rows[f"w_in{d}"]].set(p["w_in"][d].reshape(C))

    w_t1 = p["w_t1"].astype(mm_dtype)                                   # (2C, C)
    big = jnp.stack([p["w_t2"]] + [p["w_l"][l] for l in range(num_layers)],
                    axis=0).astype(mm_dtype)                            # (1+L, C, C)
    w_out = (jnp.zeros((C, out_pad), jnp.float32)
             .at[:, :out_dim].set(p["w_out"]).astype(mm_dtype))         # (C, 8)
    b_out = (jnp.zeros((1, out_pad), jnp.float32)
             .at[0, :out_dim].set(p["b_out"].reshape(out_dim)))         # (1, 8) f32
    return dict(small=small, w_t1=w_t1, big=big, w_out=w_out, b_out=b_out)


def _default_split_t1():
    """K=128 split only on v5e (4x128^2 MXU); fused K=256 elsewhere."""
    try:
        kind = jax.devices()[0].device_kind.lower()
    except Exception:
        return False
    return ("v5 lite" in kind) or ("v5e" in kind) or ("v5litepod" in kind)


def _pick_tile(batch, batch_tile):
    # Guarantee >=2 grid steps whenever the batch can be split, so both v7x
    # TensorCores get work under "parallel" semantics; cap at batch_tile
    # (sweep 512/1024 for very large B) to amortize the ~0.35us/step cost.
    half = _round_up(max(1, -(-batch // 2)), 8)
    tb = max(8, min(batch_tile, half))
    b_pad = _round_up(batch, tb)
    return tb, b_pad


def fourier_mlp_forward(cond, inputs, packed, *, channels=CHANNELS,
                        in_dim=IN_SHAPE, out_dim=OUT_SHAPE,
                        num_layers=NUM_LAYERS, batch_tile=512, split_t1=None):
    """cond: () / (B,) / (B,1); inputs: (B, in_dim). Returns (B, out_dim)."""
    B = inputs.shape[0]
    out_pad = packed["w_out"].shape[1]
    assert in_dim + 1 <= ACT_W and out_dim <= out_pad
    if split_t1 is None:
        split_t1 = _default_split_t1()

    cond_flat = jnp.reshape(cond, (-1,)).astype(jnp.float32)
    if cond_flat.shape[0] == 1:
        cond_flat = jnp.broadcast_to(cond_flat, (B,))
    x = jnp.reshape(inputs, (B, -1)).astype(jnp.float32)

    tb, b_pad = _pick_tile(B, batch_tile)

    # Narrow lane slab: col 0 = cond, cols 1..in_dim = inputs (f32).
    act = jnp.zeros((b_pad, ACT_W), jnp.float32)
    act = act.at[:B, 0].set(cond_flat)
    act = act.at[:B, 1:1 + in_dim].set(x)

    kernel = partial(fourier_mlp_kernel, num_layers=num_layers, in_dim=in_dim,
                     split_t1=split_t1)
    out = pl.pallas_call(
        kernel,
        out_shape=jax.ShapeDtypeStruct((b_pad, out_pad), jnp.float32),
        grid_spec=pltpu.PrefetchScalarGridSpec(
            num_scalar_prefetch=0,
            grid=(b_pad // tb,),
            in_specs=[
                pl.BlockSpec((tb, ACT_W), lambda i: (i, 0)),        # batch-tiled acts
                # Constant index_map -> weights stay resident, no re-DMA per step.
                pl.BlockSpec(packed["small"].shape, lambda i: (0, 0)),
                pl.BlockSpec(packed["w_t1"].shape, lambda i: (0, 0)),
                pl.BlockSpec(packed["big"].shape, lambda i: (0, 0, 0)),
                pl.BlockSpec(packed["w_out"].shape, lambda i: (0, 0)),
                pl.BlockSpec(packed["b_out"].shape, lambda i: (0, 0)),
            ],
            out_specs=pl.BlockSpec((tb, out_pad), lambda i: (i, 0)),
        ),
        compiler_params=pltpu.CompilerParams(
            dimension_semantics=("parallel",)),                     # both v7x TCs
    )(act, packed["small"], packed["w_t1"], packed["big"],
      packed["w_out"], packed["b_out"])
    return out[:B, :out_dim]


# ---------------------------------------------------------------------------
# Params init + pure-JAX reference (mirrors the PyTorch forward)
# ---------------------------------------------------------------------------
def init_params(key, channels=CHANNELS, in_dim=IN_SHAPE, out_dim=OUT_SHAPE,
                num_layers=NUM_LAYERS, zero_init=True):
    ks = jax.random.split(key, 5 + num_layers)

    def lin(k, fan_in, fan_out):
        bound = 1.0 / math.sqrt(fan_in)
        kw, kb = jax.random.split(k)
        w = jax.random.uniform(kw, (fan_in, fan_out), jnp.float32, -bound, bound)
        b = jax.random.uniform(kb, (1, fan_out), jnp.float32, -bound, bound)
        return w, b

    coeff = jnp.linspace(0.1, 100.0, channels, dtype=jnp.float32)[None, :]
    phase = jax.random.normal(ks[0], (1, channels), jnp.float32)
    w_in, b_in = lin(ks[1], in_dim, channels)
    w_t1, b_t1 = lin(ks[2], 2 * channels, channels)
    w_t2, b_t2 = lin(ks[3], channels, channels)
    w_l, b_l = [], []
    for l in range(num_layers):
        w, b = lin(ks[4 + l], channels, channels)
        w_l.append(w)
        b_l.append(b)
    if zero_init:
        w_out = jnp.zeros((channels, out_dim), jnp.float32)
        b_out = jnp.zeros((1, out_dim), jnp.float32)
    else:
        w_out, b_out = lin(ks[4 + num_layers], channels, out_dim)
    return dict(coeff=coeff, phase=phase, w_in=w_in, b_in=b_in,
                w_t1=w_t1, b_t1=b_t1, w_t2=w_t2, b_t2=b_t2,
                w_l=w_l, b_l=b_l, w_out=w_out, b_out=b_out)


def fourier_mlp_reference(cond, inputs, p, num_layers=NUM_LAYERS):
    """Pure-JAX reference mirroring the PyTorch forward (HIGHEST-precision f32)."""
    hi = jax.lax.Precision.HIGHEST
    B = inputs.shape[0]
    cond2d = jnp.broadcast_to(jnp.reshape(cond, (-1, 1)), (B, 1)).astype(jnp.float32)
    arg = p["coeff"] * cond2d + p["phase"]
    te_in = jnp.concatenate([jnp.sin(arg), jnp.cos(arg)], axis=-1)
    h = _gelu_exact(jnp.dot(te_in, p["w_t1"], precision=hi) + p["b_t1"])
    embed_cond = jnp.dot(h, p["w_t2"], precision=hi) + p["b_t2"]
    embed_ins = jnp.dot(inputs.reshape(B, -1), p["w_in"], precision=hi) + p["b_in"]
    z = _gelu_exact(embed_ins + embed_cond)
    for l in range(num_layers):
        z = _gelu_exact(jnp.dot(z, p["w_l"][l], precision=hi) + p["b_l"][l])
    out_dim = p["w_out"].shape[1]
    return (jnp.dot(z, p["w_out"], precision=hi) + p["b_out"]).reshape(-1, out_dim)


if __name__ == "__main__":
    key = jax.random.PRNGKey(0)
    k_par, k_cond, k_x = jax.random.split(key, 3)

    # non-zero head so the output check is meaningful
    params = init_params(k_par, zero_init=False)
    cond = jax.random.uniform(k_cond, (BATCH,), jnp.float32)      # e.g. diffusion time
    inputs = jax.random.normal(k_x, (BATCH, IN_SHAPE), jnp.float32)

    ref = jax.block_until_ready(fourier_mlp_reference(cond, inputs, params))

    # 1) f32-MXU parity mode (exercises the v5e split-K path): ~1e-5 agreement.
    packed_f32 = pack_params(params, mm_dtype=jnp.float32)
    out_f32 = jax.block_until_ready(
        fourier_mlp_forward(cond, inputs, packed_f32, split_t1=True))
    assert out_f32.shape == (BATCH, OUT_SHAPE)
    np.testing.assert_allclose(np.asarray(out_f32), np.asarray(ref),
                               rtol=1e-5, atol=1e-5)

    # 2) Fast path: bf16 MXU operands / f32 accumulation, fused K=256 dot
    #    (v6e/v7x-style). Relaxed tolerance per the bf16 contraction error.
    packed_bf16 = pack_params(params, mm_dtype=jnp.bfloat16)
    fwd_fast = jax.jit(partial(fourier_mlp_forward, split_t1=False))
    out_bf16 = jax.block_until_ready(fwd_fast(cond, inputs, packed_bf16))
    assert out_bf16.shape == (BATCH, OUT_SHAPE)
    np.testing.assert_allclose(np.asarray(out_bf16), np.asarray(ref),
                               rtol=5e-2, atol=5e-2)

    print("KERNEL_OK")
</pallas_src>

<mosaic_0001>
module attributes {stable_mosaic.version = 11 : i64} {
  func.func @fourier_mlp_kernel(%arg0: i32, %arg1: memref<8x8xf32, #tpu.memory_space<vmem>>, %arg2: memref<8x128xf32, #tpu.memory_space<vmem>>, %arg3: memref<256x128xf32, #tpu.memory_space<vmem>>, %arg4: memref<3x128x128xf32, #tpu.memory_space<vmem>>, %arg5: memref<128x8xf32, #tpu.memory_space<vmem>>, %arg6: memref<1x8xf32, #tpu.memory_space<vmem>>, %arg7: memref<8x8xf32, #tpu.memory_space<vmem>>) attributes {dimension_semantics = [#tpu.dimension_semantics<parallel>], iteration_bounds = array<i64: 1>, scalar_prefetch = 0 : i64, scratch_operands = 0 : i64, tpu.core_type = #tpu.core_type<tc>, window_params = [{transform_indices = @transform_0, window_bounds = array<i64: 8, 8>}, {pipeline_mode = #tpu.pipeline_mode<synchronous>, transform_indices = @transform_1, window_bounds = array<i64: 8, 128>}, {pipeline_mode = #tpu.pipeline_mode<synchronous>, transform_indices = @transform_2, window_bounds = array<i64: 256, 128>}, {pipeline_mode = #tpu.pipeline_mode<synchronous>, transform_indices = @transform_3, window_bounds = array<i64: 3, 128, 128>}, {pipeline_mode = #tpu.pipeline_mode<synchronous>, transform_indices = @transform_4, window_bounds = array<i64: 128, 8>}, {pipeline_mode = #tpu.pipeline_mode<synchronous>, transform_indices = @transform_5, window_bounds = array<i64: 1, 8>}, {transform_indices = @transform_6, window_bounds = array<i64: 8, 8>}]} {
    %c0 = arith.constant 0 : index
    %c0_0 = arith.constant 0 : index
    %0 = vector.load %arg2[%c0, %c0_0] : memref<8x128xf32, #tpu.memory_space<vmem>>, vector<8x128xf32>
    %c0_1 = arith.constant 0 : index
    %c0_2 = arith.constant 0 : index
    %1 = vector.load %arg1[%c0_1, %c0_2] : memref<8x8xf32, #tpu.memory_space<vmem>>, vector<8x8xf32>
    %2 = vector.extract_strided_slice %1 {offsets = [0, 0], sizes = [8, 1], strides = [1, 1]} : vector<8x8xf32> to vector<8x1xf32>
    %3 = vector.extract_strided_slice %0 {offsets = [0, 0], sizes = [1, 128], strides = [1, 1]} : vector<8x128xf32> to vector<1x128xf32>
    %4 = vector.broadcast %2 : vector<8x1xf32> to vector<8x128xf32>
    %5 = vector.broadcast %3 : vector<1x128xf32> to vector<8x128xf32>
    %6 = arith.mulf %4, %5 : vector<8x128xf32>
    %7 = vector.extract_strided_slice %0 {offsets = [1, 0], sizes = [1, 128], strides = [1, 1]} : vector<8x128xf32> to vector<1x128xf32>
    %8 = vector.broadcast %7 : vector<1x128xf32> to vector<8x128xf32>
    %9 = arith.addf %6, %8 : vector<8x128xf32>
    %10 = math.sin %9 : vector<8x128xf32>
    %11 = math.cos %9 : vector<8x128xf32>
    %12 = vector.extract_strided_slice %0 {offsets = [2, 0], sizes = [1, 128], strides = [1, 1]} : vector<8x128xf32> to vector<1x128xf32>
    %c0_3 = arith.constant 0 : index
    %c0_4 = arith.constant 0 : index
    %13 = vector.load %arg3[%c0_3, %c0_4] : memref<256x128xf32, #tpu.memory_space<vmem>>, vector<128x128xf32>
    %cst = arith.constant dense<0.000000e+00> : vector<8x128xf32>
    %14 = tpu.matmul %10, %13, %cst {dimension_numbers = #tpu.dot_dimension_numbers<[1], [0], [0], [1], [0, 0, 1, 1], [], []>, precision = #tpu.contract_precision<fp32>} : vector<8x128xf32>, vector<128x128xf32>, vector<8x128xf32> -> vector<8x128xf32>
    %c128 = arith.constant 128 : index
    %c0_5 = arith.constant 0 : index
    %15 = vector.load %arg3[%c128, %c0_5] : memref<256x128xf32, #tpu.memory_space<vmem>>, vector<128x128xf32>
    %cst_6 = arith.constant dense<0.000000e+00> : vector<8x128xf32>
    %16 = tpu.matmul %11, %15, %cst_6 {dimension_numbers = #tpu.dot_dimension_numbers<[1], [0], [0], [1], [0, 0, 1, 1], [], []>, precision = #tpu.contract_precision<fp32>} : vector<8x128xf32>, vector<128x128xf32>, vector<8x128xf32> -> vector<8x128xf32>
    %17 = arith.addf %14, %16 : vector<8x128xf32>
    %18 = vector.broadcast %12 : vector<1x128xf32> to vector<8x128xf32>
    %19 = arith.addf %17, %18 : vector<8x128xf32>
    %cst_7 = arith.constant 5.000000e-01 : f32
    %20 = vector.broadcast %cst_7 : f32 to vector<8x128xf32>
    %21 = arith.mulf %20, %19 : vector<8x128xf32>
    %cst_8 = arith.constant 0.707106769 : f32
    %22 = vector.broadcast %cst_8 : f32 to vector<8x128xf32>
    %23 = arith.mulf %19, %22 : vector<8x128xf32>
    %24 = math.absf %23 : vector<8x128xf32>
    %cst_9 = arith.constant 0.327591091 : f32
    %25 = vector.broadcast %cst_9 : f32 to vector<8x128xf32>
    %26 = arith.mulf %25, %24 : vector<8x128xf32>
    %cst_10 = arith.constant 1.000000e+00 : f32
    %27 = vector.broadcast %cst_10 : f32 to vector<8x128xf32>
    %28 = arith.addf %27, %26 : vector<8x128xf32>
    %cst_11 = arith.constant 1.000000e+00 : f32
    %29 = vector.broadcast %cst_11 : f32 to vector<8x128xf32>
    %30 = arith.divf %29, %28 : vector<8x128xf32>
    %cst_12 = arith.constant 1.06140542 : f32
    %31 = vector.broadcast %cst_12 : f32 to vector<8x128xf32>
    %32 = arith.mulf %31, %30 : vector<8x128xf32>
    %cst_13 = arith.constant -1.45315206 : f32
    %33 = vector.broadcast %cst_13 : f32 to vector<8x128xf32>
    %34 = arith.addf %32, %33 : vector<8x128xf32>
    %35 = arith.mulf %34, %30 : vector<8x128xf32>
    %cst_14 = arith.constant 1.42141378 : f32
    %36 = vector.broadcast %cst_14 : f32 to vector<8x128xf32>
    %37 = arith.addf %35, %36 : vector<8x128xf32>
    %38 = arith.mulf %37, %30 : vector<8x128xf32>
    %cst_15 = arith.constant -0.284496725 : f32
    %39 = vector.broadcast %cst_15 : f32 to vector<8x128xf32>
    %40 = arith.addf %38, %39 : vector<8x128xf32>
    %41 = arith.mulf %40, %30 : vector<8x128xf32>
    %cst_16 = arith.constant 0.254829586 : f32
    %42 = vector.broadcast %cst_16 : f32 to vector<8x128xf32>
    %43 = arith.addf %41, %42 : vector<8x128xf32>
    %44 = arith.mulf %43, %30 : vector<8x128xf32>
    %45 = arith.mulf %24, %24 : vector<8x128xf32>
    %cst_17 = arith.constant 0.000000e+00 : f32
    %46 = vector.broadcast %cst_17 : f32 to vector<8x128xf32>
    %47 = arith.subf %46, %45 : vector<8x128xf32>
    %48 = math.exp %47 : vector<8x128xf32>
    %49 = arith.mulf %44, %48 : vector<8x128xf32>
    %cst_18 = arith.constant 1.000000e+00 : f32
    %50 = vector.broadcast %cst_18 : f32 to vector<8x128xf32>
    %51 = arith.subf %50, %49 : vector<8x128xf32>
    %cst_19 = arith.constant 0.000000e+00 : f32
    %52 = vector.broadcast %cst_19 : f32 to vector<8x128xf32>
    %53 = arith.cmpf olt, %23, %52 : vector<8x128xf32>
    %cst_20 = arith.constant 0.000000e+00 : f32
    %54 = vector.broadcast %cst_20 : f32 to vector<8x128xf32>
    %55 = arith.subf %54, %51 : vector<8x128xf32>
    %56 = arith.select %53, %55, %51 : vector<8x128xi1>, vector<8x128xf32>
    %cst_21 = arith.constant 1.000000e+00 : f32
    %57 = vector.broadcast %cst_21 : f32 to vector<8x128xf32>
    %58 = arith.addf %57, %56 : vector<8x128xf32>
    %59 = arith.mulf %21, %58 : vector<8x128xf32>
    %c0_22 = arith.constant 0 : index
    %c0_23 = arith.constant 0 : index
    %c0_24 = arith.constant 0 : index
    %60 = vector.load %arg4[%c0_22, %c0_23, %c0_24] : memref<3x128x128xf32, #tpu.memory_space<vmem>>, vector<1x128x128xf32>
    %61 = vector.shape_cast %60 : vector<1x128x128xf32> to vector<128x128xf32>
    %cst_25 = arith.constant dense<0.000000e+00> : vector<8x128xf32>
    %62 = tpu.matmul %59, %61, %cst_25 {dimension_numbers = #tpu.dot_dimension_numbers<[1], [0], [0], [1], [0, 0, 1, 1], [], []>, precision = #tpu.contract_precision<fp32>} : vector<8x128xf32>, vector<128x128xf32>, vector<8x128xf32> -> vector<8x128xf32>
    %63 = vector.extract_strided_slice %0 {offsets = [3, 0], sizes = [1, 128], strides = [1, 1]} : vector<8x128xf32> to vector<1x128xf32>
    %64 = vector.broadcast %63 : vector<1x128xf32> to vector<8x128xf32>
    %65 = arith.addf %62, %64 : vector<8x128xf32>
    %66 = vector.extract_strided_slice %1 {offsets = [0, 1], sizes = [8, 1], strides = [1, 1]} : vector<8x8xf32> to vector<8x1xf32>
    %67 = vector.extract_strided_slice %0 {offsets = [6, 0], sizes = [1, 128], strides = [1, 1]} : vector<8x128xf32> to vector<1x128xf32>
    %68 = vector.broadcast %66 : vector<8x1xf32> to vector<8x128xf32>
    %69 = vector.broadcast %67 : vector<1x128xf32> to vector<8x128xf32>
    %70 = arith.mulf %68, %69 : vector<8x128xf32>
    %71 = vector.extract_strided_slice %1 {offsets = [0, 2], sizes = [8, 1], strides = [1, 1]} : vector<8x8xf32> to vector<8x1xf32>
    %72 = vector.extract_strided_slice %0 {offsets = [7, 0], sizes = [1, 128], strides = [1, 1]} : vector<8x128xf32> to vector<1x128xf32>
    %73 = vector.broadcast %71 : vector<8x1xf32> to vector<8x128xf32>
    %74 = vector.broadcast %72 : vector<1x128xf32> to vector<8x128xf32>
    %75 = arith.mulf %73, %74 : vector<8x128xf32>
    %76 = arith.addf %70, %75 : vector<8x128xf32>
    %77 = arith.addf %76, %65 : vector<8x128xf32>
    %cst_26 = arith.constant 5.000000e-01 : f32
    %78 = vector.broadcast %cst_26 : f32 to vector<8x128xf32>
    %79 = arith.mulf %78, %77 : vector<8x128xf32>
    %cst_27 = arith.constant 0.707106769 : f32
    %80 = vector.broadcast %cst_27 : f32 to vector<8x128xf32>
    %81 = arith.mulf %77, %80 : vector<8x128xf32>
    %82 = math.absf %81 : vector<8x128xf32>
    %cst_28 = arith.constant 0.327591091 : f32
    %83 = vector.broadcast %cst_28 : f32 to vector<8x128xf32>
    %84 = arith.mulf %83, %82 : vector<8x128xf32>
    %cst_29 = arith.constant 1.000000e+00 : f32
    %85 = vector.broadcast %cst_29 : f32 to vector<8x128xf32>
    %86 = arith.addf %85, %84 : vector<8x128xf32>
    %cst_30 = arith.constant 1.000000e+00 : f32
    %87 = vector.broadcast %cst_30 : f32 to vector<8x128xf32>
    %88 = arith.divf %87, %86 : vector<8x128xf32>
    %cst_31 = arith.constant 1.06140542 : f32
    %89 = vector.broadcast %cst_31 : f32 to vector<8x128xf32>
    %90 = arith.mulf %89, %88 : vector<8x128xf32>
    %cst_32 = arith.constant -1.45315206 : f32
    %91 = vector.broadcast %cst_32 : f32 to vector<8x128xf32>
    %92 = arith.addf %90, %91 : vector<8x128xf32>
    %93 = arith.mulf %92, %88 : vector<8x128xf32>
    %cst_33 = arith.constant 1.42141378 : f32
    %94 = vector.broadcast %cst_33 : f32 to vector<8x128xf32>
    %95 = arith.addf %93, %94 : vector<8x128xf32>
    %96 = arith.mulf %95, %88 : vector<8x128xf32>
    %cst_34 = arith.constant -0.284496725 : f32
    %97 = vector.broadcast %cst_34 : f32 to vector<8x128xf32>
    %98 = arith.addf %96, %97 : vector<8x128xf32>
    %99 = arith.mulf %98, %88 : vector<8x128xf32>
    %cst_35 = arith.constant 0.254829586 : f32
    %100 = vector.broadcast %cst_35 : f32 to vector<8x128xf32>
    %101 = arith.addf %99, %100 : vector<8x128xf32>
    %102 = arith.mulf %101, %88 : vector<8x128xf32>
    %103 = arith.mulf %82, %82 : vector<8x128xf32>
    %cst_36 = arith.constant 0.000000e+00 : f32
    %104 = vector.broadcast %cst_36 : f32 to vector<8x128xf32>
    %105 = arith.subf %104, %103 : vector<8x128xf32>
    %106 = math.exp %105 : vector<8x128xf32>
    %107 = arith.mulf %102, %106 : vector<8x128xf32>
    %cst_37 = arith.constant 1.000000e+00 : f32
    %108 = vector.broadcast %cst_37 : f32 to vector<8x128xf32>
    %109 = arith.subf %108, %107 : vector<8x128xf32>
    %cst_38 = arith.constant 0.000000e+00 : f32
    %110 = vector.broadcast %cst_38 : f32 to vector<8x128xf32>
    %111 = arith.cmpf olt, %81, %110 : vector<8x128xf32>
    %cst_39 = arith.constant 0.000000e+00 : f32
    %112 = vector.broadcast %cst_39 : f32 to vector<8x128xf32>
    %113 = arith.subf %112, %109 : vector<8x128xf32>
    %114 = arith.select %111, %113, %109 : vector<8x128xi1>, vector<8x128xf32>
    %cst_40 = arith.constant 1.000000e+00 : f32
    %115 = vector.broadcast %cst_40 : f32 to vector<8x128xf32>
    %116 = arith.addf %115, %114 : vector<8x128xf32>
    %117 = arith.mulf %79, %116 : vector<8x128xf32>
    %c1 = arith.constant 1 : index
    %c0_41 = arith.constant 0 : index
    %c0_42 = arith.constant 0 : index
    %118 = vector.load %arg4[%c1, %c0_41, %c0_42] : memref<3x128x128xf32, #tpu.memory_space<vmem>>, vector<1x128x128xf32>
    %119 = vector.shape_cast %118 : vector<1x128x128xf32> to vector<128x128xf32>
    %cst_43 = arith.constant dense<0.000000e+00> : vector<8x128xf32>
    %120 = tpu.matmul %117, %119, %cst_43 {dimension_numbers = #tpu.dot_dimension_numbers<[1], [0], [0], [1], [0, 0, 1, 1], [], []>, precision = #tpu.contract_precision<fp32>} : vector<8x128xf32>, vector<128x128xf32>, vector<8x128xf32> -> vector<8x128xf32>
    %121 = vector.extract_strided_slice %0 {offsets = [4, 0], sizes = [1, 128], strides = [1, 1]} : vector<8x128xf32> to vector<1x128xf32>
    %122 = vector.broadcast %121 : vector<1x128xf32> to vector<8x128xf32>
    %123 = arith.addf %120, %122 : vector<8x128xf32>
    %cst_44 = arith.constant 5.000000e-01 : f32
    %124 = vector.broadcast %cst_44 : f32 to vector<8x128xf32>
    %125 = arith.mulf %124, %123 : vector<8x128xf32>
    %cst_45 = arith.constant 0.707106769 : f32
    %126 = vector.broadcast %cst_45 : f32 to vector<8x128xf32>
    %127 = arith.mulf %123, %126 : vector<8x128xf32>
    %128 = math.absf %127 : vector<8x128xf32>
    %cst_46 = arith.constant 0.327591091 : f32
    %129 = vector.broadcast %cst_46 : f32 to vector<8x128xf32>
    %130 = arith.mulf %129, %128 : vector<8x128xf32>
    %cst_47 = arith.constant 1.000000e+00 : f32
    %131 = vector.broadcast %cst_47 : f32 to vector<8x128xf32>
    %132 = arith.addf %131, %130 : vector<8x128xf32>
    %cst_48 = arith.constant 1.000000e+00 : f32
    %133 = vector.broadcast %cst_48 : f32 to vector<8x128xf32>
    %134 = arith.divf %133, %132 : vector<8x128xf32>
    %cst_49 = arith.constant 1.06140542 : f32
    %135 = vector.broadcast %cst_49 : f32 to vector<8x128xf32>
    %136 = arith.mulf %135, %134 : vector<8x128xf32>
    %cst_50 = arith.constant -1.45315206 : f32
    %137 = vector.broadcast %cst_50 : f32 to vector<8x128xf32>
    %138 = arith.addf %136, %137 : vector<8x128xf32>
    %139 = arith.mulf %138, %134 : vector<8x128xf32>
    %cst_51 = arith.constant 1.42141378 : f32
    %140 = vector.broadcast %cst_51 : f32 to vector<8x128xf32>
    %141 = arith.addf %139, %140 : vector<8x128xf32>
    %142 = arith.mulf %141, %134 : vector<8x128xf32>
    %cst_52 = arith.constant -0.284496725 : f32
    %143 = vector.broadcast %cst_52 : f32 to vector<8x128xf32>
    %144 = arith.addf %142, %143 : vector<8x128xf32>
    %145 = arith.mulf %144, %134 : vector<8x128xf32>
    %cst_53 = arith.constant 0.254829586 : f32
    %146 = vector.broadcast %cst_53 : f32 to vector<8x128xf32>
    %147 = arith.addf %145, %146 : vector<8x128xf32>
    %148 = arith.mulf %147, %134 : vector<8x128xf32>
    %149 = arith.mulf %128, %128 : vector<8x128xf32>
    %cst_54 = arith.constant 0.000000e+00 : f32
    %150 = vector.broadcast %cst_54 : f32 to vector<8x128xf32>
    %151 = arith.subf %150, %149 : vector<8x128xf32>
    %152 = math.exp %151 : vector<8x128xf32>
    %153 = arith.mulf %148, %152 : vector<8x128xf32>
    %cst_55 = arith.constant 1.000000e+00 : f32
    %154 = vector.broadcast %cst_55 : f32 to vector<8x128xf32>
    %155 = arith.subf %154, %153 : vector<8x128xf32>
    %cst_56 = arith.constant 0.000000e+00 : f32
    %156 = vector.broadcast %cst_56 : f32 to vector<8x128xf32>
    %157 = arith.cmpf olt, %127, %156 : vector<8x128xf32>
    %cst_57 = arith.constant 0.000000e+00 : f32
    %158 = vector.broadcast %cst_57 : f32 to vector<8x128xf32>
    %159 = arith.subf %158, %155 : vector<8x128xf32>
    %160 = arith.select %157, %159, %155 : vector<8x128xi1>, vector<8x128xf32>
    %cst_58 = arith.constant 1.000000e+00 : f32
    %161 = vector.broadcast %cst_58 : f32 to vector<8x128xf32>
    %162 = arith.addf %161, %160 : vector<8x128xf32>
    %163 = arith.mulf %125, %162 : vector<8x128xf32>
    %c2 = arith.constant 2 : index
    %c0_59 = arith.constant 0 : index
    %c0_60 = arith.constant 0 : index
    %164 = vector.load %arg4[%c2, %c0_59, %c0_60] : memref<3x128x128xf32, #tpu.memory_space<vmem>>, vector<1x128x128xf32>
    %165 = vector.shape_cast %164 : vector<1x128x128xf32> to vector<128x128xf32>
    %cst_61 = arith.constant dense<0.000000e+00> : vector<8x128xf32>
    %166 = tpu.matmul %163, %165, %cst_61 {dimension_numbers = #tpu.dot_dimension_numbers<[1], [0], [0], [1], [0, 0, 1, 1], [], []>, precision = #tpu.contract_precision<fp32>} : vector<8x128xf32>, vector<128x128xf32>, vector<8x128xf32> -> vector<8x128xf32>
    %167 = vector.extract_strided_slice %0 {offsets = [5, 0], sizes = [1, 128], strides = [1, 1]} : vector<8x128xf32> to vector<1x128xf32>
    %168 = vector.broadcast %167 : vector<1x128xf32> to vector<8x128xf32>
    %169 = arith.addf %166, %168 : vector<8x128xf32>
    %cst_62 = arith.constant 5.000000e-01 : f32
    %170 = vector.broadcast %cst_62 : f32 to vector<8x128xf32>
    %171 = arith.mulf %170, %169 : vector<8x128xf32>
    %cst_63 = arith.constant 0.707106769 : f32
    %172 = vector.broadcast %cst_63 : f32 to vector<8x128xf32>
    %173 = arith.mulf %169, %172 : vector<8x128xf32>
    %174 = math.absf %173 : vector<8x128xf32>
    %cst_64 = arith.constant 0.327591091 : f32
    %175 = vector.broadcast %cst_64 : f32 to vector<8x128xf32>
    %176 = arith.mulf %175, %174 : vector<8x128xf32>
    %cst_65 = arith.constant 1.000000e+00 : f32
    %177 = vector.broadcast %cst_65 : f32 to vector<8x128xf32>
    %178 = arith.addf %177, %176 : vector<8x128xf32>
    %cst_66 = arith.constant 1.000000e+00 : f32
    %179 = vector.broadcast %cst_66 : f32 to vector<8x128xf32>
    %180 = arith.divf %179, %178 : vector<8x128xf32>
    %cst_67 = arith.constant 1.06140542 : f32
    %181 = vector.broadcast %cst_67 : f32 to vector<8x128xf32>
    %182 = arith.mulf %181, %180 : vector<8x128xf32>
    %cst_68 = arith.constant -1.45315206 : f32
    %183 = vector.broadcast %cst_68 : f32 to vector<8x128xf32>
    %184 = arith.addf %182, %183 : vector<8x128xf32>
    %185 = arith.mulf %184, %180 : vector<8x128xf32>
    %cst_69 = arith.constant 1.42141378 : f32
    %186 = vector.broadcast %cst_69 : f32 to vector<8x128xf32>
    %187 = arith.addf %185, %186 : vector<8x128xf32>
    %188 = arith.mulf %187, %180 : vector<8x128xf32>
    %cst_70 = arith.constant -0.284496725 : f32
    %189 = vector.broadcast %cst_70 : f32 to vector<8x128xf32>
    %190 = arith.addf %188, %189 : vector<8x128xf32>
    %191 = arith.mulf %190, %180 : vector<8x128xf32>
    %cst_71 = arith.constant 0.254829586 : f32
    %192 = vector.broadcast %cst_71 : f32 to vector<8x128xf32>
    %193 = arith.addf %191, %192 : vector<8x128xf32>
    %194 = arith.mulf %193, %180 : vector<8x128xf32>
    %195 = arith.mulf %174, %174 : vector<8x128xf32>
    %cst_72 = arith.constant 0.000000e+00 : f32
    %196 = vector.broadcast %cst_72 : f32 to vector<8x128xf32>
    %197 = arith.subf %196, %195 : vector<8x128xf32>
    %198 = math.exp %197 : vector<8x128xf32>
    %199 = arith.mulf %194, %198 : vector<8x128xf32>
    %cst_73 = arith.constant 1.000000e+00 : f32
    %200 = vector.broadcast %cst_73 : f32 to vector<8x128xf32>
    %201 = arith.subf %200, %199 : vector<8x128xf32>
    %cst_74 = arith.constant 0.000000e+00 : f32
    %202 = vector.broadcast %cst_74 : f32 to vector<8x128xf32>
    %203 = arith.cmpf olt, %173, %202 : vector<8x128xf32>
    %cst_75 = arith.constant 0.000000e+00 : f32
    %204 = vector.broadcast %cst_75 : f32 to vector<8x128xf32>
    %205 = arith.subf %204, %201 : vector<8x128xf32>
    %206 = arith.select %203, %205, %201 : vector<8x128xi1>, vector<8x128xf32>
    %cst_76 = arith.constant 1.000000e+00 : f32
    %207 = vector.broadcast %cst_76 : f32 to vector<8x128xf32>
    %208 = arith.addf %207, %206 : vector<8x128xf32>
    %209 = arith.mulf %171, %208 : vector<8x128xf32>
    %c0_77 = arith.constant 0 : index
    %c0_78 = arith.constant 0 : index
    %210 = vector.load %arg5[%c0_77, %c0_78] : memref<128x8xf32, #tpu.memory_space<vmem>>, vector<128x8xf32>
    %cst_79 = arith.constant dense<0.000000e+00> : vector<8x8xf32>
    %211 = tpu.matmul %209, %210, %cst_79 {dimension_numbers = #tpu.dot_dimension_numbers<[1], [0], [0], [1], [0, 0, 1, 1], [], []>, precision = #tpu.contract_precision<fp32>} : vector<8x128xf32>, vector<128x8xf32>, vector<8x8xf32> -> vector<8x8xf32>
    %c0_80 = arith.constant 0 : index
    %c0_81 = arith.constant 0 : index
    %212 = vector.load %arg6[%c0_80, %c0_81] : memref<1x8xf32, #tpu.memory_space<vmem>>, vector<1x8xf32>
    %213 = vector.broadcast %212 : vector<1x8xf32> to vector<8x8xf32>
    %214 = arith.addf %211, %213 : vector<8x8xf32>
    %c0_82 = arith.constant 0 : index
    %c0_83 = arith.constant 0 : index
    %215 = vector.load %arg7[%c0_82, %c0_83] : memref<8x8xf32, #tpu.memory_space<vmem>>, vector<8x8xf32>
    tpu.vector_store %arg7[%c0_82, %c0_83], %214 {strides = array<i32>} : memref<8x8xf32, #tpu.memory_space<vmem>>, vector<8x8xf32>,
    return
  }
  func.func @transform_0(%arg0: i32) -> (i32, i32) {
    %c0_i32 = arith.constant 0 : i32
    %c0_i32_0 = arith.constant 0 : i32
    return %arg0, %c0_i32 : i32, i32
  }
  func.func @transform_1(%arg0: i32) -> (i32, i32) {
    %c0_i32 = arith.constant 0 : i32
    %c0_i32_0 = arith.constant 0 : i32
    %c0_i32_1 = arith.constant 0 : i32
    return %c0_i32, %c0_i32_0 : i32, i32
  }
  func.func @transform_2(%arg0: i32) -> (i32, i32) {
    %c0_i32 = arith.constant 0 : i32
    %c0_i32_0 = arith.constant 0 : i32
    %c0_i32_1 = arith.constant 0 : i32
    return %c0_i32, %c0_i32_0 : i32, i32
  }
  func.func @transform_3(%arg0: i32) -> (i32, i32, i32) {
    %c0_i32 = arith.constant 0 : i32
    %c0_i32_0 = arith.constant 0 : i32
    %c0_i32_1 = arith.constant 0 : i32
    %c0_i32_2 = arith.constant 0 : i32
    return %c0_i32, %c0_i32_0, %c0_i32_1 : i32, i32, i32
  }
  func.func @transform_4(%arg0: i32) -> (i32, i32) {
    %c0_i32 = arith.constant 0 : i32
    %c0_i32_0 = arith.constant 0 : i32
    %c0_i32_1 = arith.constant 0 : i32
    return %c0_i32, %c0_i32_0 : i32, i32
  }
  func.func @transform_5(%arg0: i32) -> (i32, i32) {
    %c0_i32 = arith.constant 0 : i32
    %c0_i32_0 = arith.constant 0 : i32
    %c0_i32_1 = arith.constant 0 : i32
    return %c0_i32, %c0_i32_0 : i32, i32
  }
  func.func @transform_6(%arg0: i32) -> (i32, i32) {
    %c0_i32 = arith.constant 0 : i32
    %c0_i32_0 = arith.constant 0 : i32
    return %arg0, %c0_i32 : i32, i32
  }
}

</mosaic_0001>

<llo_original>
// kernel: tpu_custom_call.1
$region0: #{tpu_custom_call.1}
  #allocation0 [shape = 'u32[]', space=smem, size = 0x4, offset = 0x4, fixed_abs, tag = 'smem constant byte address 0x4 - core index']
  #allocation1 [shape = 'u32[144,128]{1,0:T(1,128)}', space=vmem, size = 0x12000, scoped, tag = 'internal scratch']
  %s0 = inlined_call_operand.vmem [shape: f32[8,8], index: 0, kind: input, shape index: {}]
  %s1 = inlined_call_operand.vmem [shape: f32[8,128], index: 1, kind: input, shape index: {}]
  %s2 = inlined_call_operand.hbm [shape: f32[256,128], index: 2, kind: input, shape index: {}]
  %s3 = inlined_call_operand.hbm [shape: f32[3,128,128], index: 3, kind: input, shape index: {}]
  %s4 = inlined_call_operand.vmem [shape: f32[128,8], index: 4, kind: input, shape index: {}]
  %s5 = inlined_call_operand.vmem [shape: f32[1,8], index: 5, kind: input, shape index: {}]
  %s6 = inlined_call_operand.hbm [shape: f32[8,8], index: 6, kind: output, shape index: {}]
  %s7 = sld [smem:[#allocation0]]
  $region42: #{tpu_custom_call.1} parent=0
    _
  %s9 = ssub.s32 1, %s7
  %s10 = scalar_select 0, %s9, %s7
  $region1: #{tpu_custom_call.1} parent=0
    #allocation2 [shape = 'u8[131072]{0}', space=vmem, size = 0x20000, scoped, tag = 'input window, operand 2, single buffered']
    #allocation3 [shape = 's32[1]{0}', space=sflag, size = 0x4, scoped, tag = 'scoped memory for tpu_custom_call.1']
    #allocation4 [shape = 's32[1]{0}', space=sflag, size = 0x4, scoped, tag = 'scoped memory for tpu_custom_call.1']
    #allocation5 [shape = 'u8[196608]{0}', space=vmem, size = 0x30000, scoped, tag = 'input window, operand 3, single buffered']
    #allocation6 [shape = 's32[1]{0}', space=sflag, size = 0x4, scoped, tag = 'scoped memory for tpu_custom_call.1']
    #allocation7 [shape = 'u8[4096]{0}', space=vmem, size = 0x1000, scoped, tag = 'output window, operand 0, single buffered']
    %11 = vsyncpa [#allocation3], 0
    %12 = vsyncpa [#allocation6], 0
    %13 = vsyncpa [#allocation4], 0
    // Predicated region
    $region2: #{tpu_custom_call.1} parent=1 // pred_check
      _
    $region3: #{tpu_custom_call.1} parent=1 // pred_check_branch
      %15 = sbr.rel (0) target = $region5
    $region4: #{tpu_custom_call.1} parent=1 // pred_region
      _
    $region5: #{tpu_custom_call.1} parent=1 // pred_fallthru
      _
    // Predicated region
    $region6: #{tpu_custom_call.1} parent=1 // pred_check
      _
    $region7: #{tpu_custom_call.1} parent=1 // pred_check_branch
      %17 = sbr.rel (0) target = $region9
    $region8: #{tpu_custom_call.1} parent=1 // pred_region
      _
    $region9: #{tpu_custom_call.1} parent=1 // pred_fallthru
      _
    // Predicated region
    $region10: #{tpu_custom_call.1} parent=1 // pred_check
      _
    $region11: #{tpu_custom_call.1} parent=1 // pred_check_branch
      %19 = sbr.rel (0) target = $region13
    $region12: #{tpu_custom_call.1} parent=1 // pred_region
      %s21 = ssub.s32 4096, 4096
      %22 = vsyncadd [#allocation3], %s21
      %s23 = sshll.u32 [#allocation2], 4
      %s24 = int_to_ptr.vmem [resolvable:$true] %s23
      %29 = dma.hbm_to_vmem [thread:$0]  %s2, 4096, %s24, [#allocation3], 128, 128, 8
    $region13: #{tpu_custom_call.1} parent=1 // pred_fallthru
      _
    // Predicated region
    $region14: #{tpu_custom_call.1} parent=1 // pred_check
      _
    $region15: #{tpu_custom_call.1} parent=1 // pred_check_branch
      %31 = sbr.rel (0) target = $region17
    $region16: #{tpu_custom_call.1} parent=1 // pred_region
      %s33 = ssub.s32 6144, 6144
      %34 = vsyncadd [#allocation6], %s33
      %s35 = sshll.u32 [#allocation5], 4
      %s36 = int_to_ptr.vmem [resolvable:$true] %s35
      %41 = dma.hbm_to_vmem [thread:$0]  %s3, 6144, %s36, [#allocation6], 128, 128, 8
    $region17: #{tpu_custom_call.1} parent=1 // pred_fallthru
      _
    // Predicated region
    $region18: #{tpu_custom_call.1} parent=1 // pred_check
      _
    $region19: #{tpu_custom_call.1} parent=1 // pred_check_branch
      %43 = sbr.rel (0) target = $region21
    $region20: #{tpu_custom_call.1} parent=1 // pred_region
      _
    $region21: #{tpu_custom_call.1} parent=1 // pred_fallthru
      _
    // Predicated region
    $region22: #{tpu_custom_call.1} parent=1 // pred_check
      _
    $region23: #{tpu_custom_call.1} parent=1 // pred_check_branch
      %45 = sbr.rel (0) target = $region25
    $region24: #{tpu_custom_call.1} parent=1 // pred_region
      _
    $region25: #{tpu_custom_call.1} parent=1 // pred_fallthru
      _
    // Predicated region
    $region26: #{tpu_custom_call.1} parent=1 // pred_check
      _
    $region27: #{tpu_custom_call.1} parent=1 // pred_check_branch
      %47 = sbr.rel (0) target = $region29
    $region28: #{tpu_custom_call.1} parent=1 // pred_region
      %48 = dma.done [#allocation3], 4096
    $region29: #{tpu_custom_call.1} parent=1 // pred_fallthru
      _
    // Predicated region
    $region30: #{tpu_custom_call.1} parent=1 // pred_check
      _
    $region31: #{tpu_custom_call.1} parent=1 // pred_check_branch
      %50 = sbr.rel (0) target = $region33
    $region32: #{tpu_custom_call.1} parent=1 // pred_region
      %51 = dma.done [#allocation6], 6144
    $region33: #{tpu_custom_call.1} parent=1 // pred_fallthru
      _
    %v52 = vld [vmem:[%s1] sm:$0xff]
    %v53 = vld [vmem:[%s0] sm:$0xff]
    %55 = vset.pattern.permute.xlu0 0
    %56 = vperm.xlu0 %55, %v53
    %v57 = vpop.permute.xlu0 %56
    %v59 = vlaneseq
    %v60 = vshrl.u32 %v59, 7
    %v61 = vsub.s32 0, %v60
    %v62 = vrot.slane %v52, %v61
    %v63 = vmul.f32 %v57, %v62
    %v64 = vlaneseq
    %v65 = vshrl.u32 %v64, 7
    %v66 = vsub.s32 1, %v65
    %v67 = vrot.slane %v52, %v66
    %v68 = vadd.f32 %v63, %v67
    %v69 = vand.u32 2147483647, %v68
    %vm70 = vcmp.le.f32.partialorder %v69, 0.7853982
    %vm71 = vcmp.lt.s32.totalorder %v68, 0
    %v72 = vand.u32 %v68, 2139095040
    %v73 = vshrl.u32 %v72, 23
    %v74 = vsub.s32 %v73, 127
    %v75 = vand.u32 2147483647, %v68
    %v76 = vand.u32 %v75, 8388607
    %v77 = vor.u32 %v76, 8388608
    %v78 = vsub.s32 0, %v77
    %v79 = vadd.s32 %v74, 1
    %vm80 = vcmp.gt.s32.totalorder %v79, 0
    %v81 = vsel %vm80, %v79, 0
    %v82 = vshrl.u32 %v81, 5
    %v83 = vand.u32 %v81, 31
    %v84 = vsub.s32 32, %v83
    %v85 = vshrl.u32 683565275, %v84
    %v86 = vshll.u32 683565275, %v83
    %v87 = vshrl.u32 2475754826, %v84
    %v88 = vor.u32 %v86, %v87
    %v89 = vshll.u32 2475754826, %v83
    %v90 = vshrl.u32 2131351028, %v84
    %v91 = vor.u32 %v89, %v90
    %v92 = vshll.u32 2131351028, %v83
    %v93 = vshrl.u32 2102212464, %v84
    %v94 = vor.u32 %v92, %v93
    %v95 = vshll.u32 2102212464, %v83
    %v96 = vshrl.u32 920167782, %v84
    %v97 = vor.u32 %v95, %v96
    %v98 = vshll.u32 920167782, %v83
    %v99 = vshrl.u32 1326507024, %v84
    %v100 = vor.u32 %v98, %v99
    %vm101 = vcmp.lt.s32.totalorder %v82, 1
    %vm102 = vcmp.lt.s32.totalorder %v82, 2
    %vm103 = vcmp.lt.s32.totalorder %v82, 3
    %vm104 = vcmp.lt.s32.totalorder %v82, 4
    %v105 = vsel %vm101, %v85, %v88
    %v106 = vsel %vm104, %v94, 2102212464
    %v107 = vsel %vm103, %v91, %v106
    %v108 = vsel %vm102, %v105, %v107
    %v109 = vsel %vm101, %v88, %v91
    %v110 = vsel %vm104, %v97, 920167782
    %v111 = vsel %vm103, %v94, %v110
    %v112 = vsel %vm102, %v109, %v111
    %v113 = vsel %vm101, %v91, %v94
    %v114 = vsel %vm104, %v100, 1326507024
    %v115 = vsel %vm103, %v97, %v114
    %v116 = vsel %vm102, %v113, %v115
    %v117 = vshll.u32 %v77, 8
    %v118 = vmul.u32.u64.compose %v117, %v116
    %v119 = vextract.low.u32 %v118
    %v120 = vextract.high.u32 %v118
    %v121 = vmul.u32.u64.compose %v117, %v112
    %v122 = vextract.low.u32 %v121
    %v123 = vextract.high.u32 %v121
    %v124 = vmul.u32 %v117, %v108
    %v125 = vadd.s32 %v120, %v122
    %vm126 = vc.u32 %v120, %v122
    %v127 = vadd.s32 %v123, 1
    %v128 = vsel %vm126, %v127, %v123
    %v129 = vadd.s32 %v124, %v128
    %v130 = vadd.s32 %v129, 536870912
    %v131 = vshrl.u32 %v130, 30
    %v132 = vshll.u32 %v131, 30
    %v133 = vsub.s32 %v129, %v132
    %vm134 = vcmp.lt.s32.totalorder %v133, 0
    %v135 = vsub.s32 0, %v133
    %v136 = vsel %vm134, %v135, %v133
    %v137 = vclz %v136
    %v138 = vsub.s32 %v137, 2
    %vm139 = vcmp.gt.s32.totalorder 0, %v138
    %v140 = vsel %vm139, 0, %v138
    %v141 = vsub.s32 32, %v140
    %v142 = vshll.u32 %v133, %v140
    %v143 = vshrl.u32 %v125, %v141
    %v144 = vor.u32 %v142, %v143
    %v145 = vsub.s32 4294967266, %v140
    %v146 = vadd.s32 %v145, 127
    %v147 = vshll.u32 %v146, 23
    %v148 = vor.u32 4788187, %v147
    %v149 = vand.u32 2147483647, %v148
    %v151 = vcvt.s32.f32 %v144
    %v152 = vmul.f32 %v151, %v149
    %v153 = vxor.u32 %v152, 2147483648
    %v154 = vsel %vm71, %v153, %v152
    %v155 = vsub.s32 4, %v131
    %v156 = vsel %vm71, %v155, %v131
    %v157 = vsel %vm70, %v68, %v154
    %v158 = vsel %vm70, 0, %v156
    %v159 = vcosq.f32.pop %v157
    %v160 = vsinq.f32.pop %v157
    %vm161 = vweird.f32 %v68
    %v162 = vadd.s32 %v158, 3
    %v163 = vand.u32 %v162, 3
    %vm164 = vcmp.lt.s32.totalorder %v163, 2
    %vm165 = vcmp.eq.s32.totalorder %v163, 0
    %v166 = vxor.u32 %v160, 2147483648
    %v167 = vsel %vm165, %v159, %v166
    %vm168 = vcmp.eq.s32.totalorder %v163, 2
    %v169 = vxor.u32 %v159, 2147483648
    %v170 = vsel %vm168, %v169, %v160
    %v171 = vsel %vm164, %v167, %v170
    %v172 = vsel %vm161, nan, %v171
    %v173 = vand.u32 2147483647, %v68
    %vm174 = vcmp.le.f32.partialorder %v173, 0.7853982
    %vm175 = vcmp.lt.s32.totalorder %v68, 0
    %v176 = vand.u32 %v68, 2139095040
    %v177 = vshrl.u32 %v176, 23
    %v178 = vsub.s32 %v177, 127
    %v179 = vand.u32 2147483647, %v68
    %v180 = vand.u32 %v179, 8388607
    %v181 = vor.u32 %v180, 8388608
    %v182 = vsub.s32 0, %v181
    %v183 = vadd.s32 %v178, 1
    %vm184 = vcmp.gt.s32.totalorder %v183, 0
    %v185 = vsel %vm184, %v183, 0
    %v186 = vshrl.u32 %v185, 5
    %v187 = vand.u32 %v185, 31
    %v188 = vsub.s32 32, %v187
    %v189 = vshrl.u32 683565275, %v188
    %v190 = vshll.u32 683565275, %v187
    %v191 = vshrl.u32 2475754826, %v188
    %v192 = vor.u32 %v190, %v191
    %v193 = vshll.u32 2475754826, %v187
    %v194 = vshrl.u32 2131351028, %v188
    %v195 = vor.u32 %v193, %v194
    %v196 = vshll.u32 2131351028, %v187
    %v197 = vshrl.u32 2102212464, %v188
    %v198 = vor.u32 %v196, %v197
    %v199 = vshll.u32 2102212464, %v187
    %v200 = vshrl.u32 920167782, %v188
    %v201 = vor.u32 %v199, %v200
    %v202 = vshll.u32 920167782, %v187
    %v203 = vshrl.u32 1326507024, %v188
    %v204 = vor.u32 %v202, %v203
    %vm205 = vcmp.lt.s32.totalorder %v186, 1
    %vm206 = vcmp.lt.s32.totalorder %v186, 2
    %vm207 = vcmp.lt.s32.totalorder %v186, 3
    %vm208 = vcmp.lt.s32.totalorder %v186, 4
    %v209 = vsel %vm205, %v189, %v192
    %v210 = vsel %vm208, %v198, 2102212464
    %v211 = vsel %vm207, %v195, %v210
    %v212 = vsel %vm206, %v209, %v211
    %v213 = vsel %vm205, %v192, %v195
    %v214 = vsel %vm208, %v201, 920167782
    %v215 = vsel %vm207, %v198, %v214
    %v216 = vsel %vm206, %v213, %v215
    %v217 = vsel %vm205, %v195, %v198
    %v218 = vsel %vm208, %v204, 1326507024
    %v219 = vsel %vm207, %v201, %v218
    %v220 = vsel %vm206, %v217, %v219
    %v221 = vshll.u32 %v181, 8
    %v222 = vmul.u32.u64.compose %v221, %v220
    %v223 = vextract.low.u32 %v222
    %v224 = vextract.high.u32 %v222
    %v225 = vmul.u32.u64.compose %v221, %v216
    %v226 = vextract.low.u32 %v225
    %v227 = vextract.high.u32 %v225
    %v228 = vmul.u32 %v221, %v212
    %v229 = vadd.s32 %v224, %v226
    %vm230 = vc.u32 %v224, %v226
    %v231 = vadd.s32 %v227, 1
    %v232 = vsel %vm230, %v231, %v227
    %v233 = vadd.s32 %v228, %v232
    %v234 = vadd.s32 %v233, 536870912
    %v235 = vshrl.u32 %v234, 30
    %v236 = vshll.u32 %v235, 30
    %v237 = vsub.s32 %v233, %v236
    %vm238 = vcmp.lt.s32.totalorder %v237, 0
    %v239 = vsub.s32 0, %v237
    %v240 = vsel %vm238, %v239, %v237
    %v241 = vclz %v240
    %v242 = vsub.s32 %v241, 2
    %vm243 = vcmp.gt.s32.totalorder 0, %v242
    %v244 = vsel %vm243, 0, %v242
    %v245 = vsub.s32 32, %v244
    %v246 = vshll.u32 %v237, %v244
    %v247 = vshrl.u32 %v229, %v245
    %v248 = vor.u32 %v246, %v247
    %v249 = vsub.s32 4294967266, %v244
    %v250 = vadd.s32 %v249, 127
    %v251 = vshll.u32 %v250, 23
    %v252 = vor.u32 4788187, %v251
    %v253 = vand.u32 2147483647, %v252
    %v255 = vcvt.s32.f32 %v248
    %v256 = vmul.f32 %v255, %v253
    %v257 = vxor.u32 %v256, 2147483648
    %v258 = vsel %vm175, %v257, %v256
    %v259 = vsub.s32 4, %v235
    %v260 = vsel %vm175, %v259, %v235
    %v261 = vsel %vm174, %v68, %v258
    %v262 = vsel %vm174, 0, %v260
    %v263 = vcosq.f32.pop %v261
    %v264 = vsinq.f32.pop %v261
    %vm265 = vweird.f32 %v68
    %v266 = vand.u32 %v262, 3
    %vm267 = vcmp.lt.s32.totalorder %v266, 2
    %vm268 = vcmp.eq.s32.totalorder %v266, 0
    %v269 = vxor.u32 %v264, 2147483648
    %v270 = vsel %vm268, %v263, %v269
    %vm271 = vcmp.eq.s32.totalorder %v266, 2
    %v272 = vxor.u32 %v263, 2147483648
    %v273 = vsel %vm271, %v272, %v264
    %v274 = vsel %vm267, %v270, %v273
    %v275 = vsel %vm265, nan, %v274
    %v276 = vld [vmem:[#allocation2] sm:$0xff]
    %v277 = vld [vmem:[#allocation2 + $0x8] sm:$0xff]
    %v278 = vld [vmem:[#allocation2 + $0x10] sm:$0xff]
    %v279 = vld [vmem:[#allocation2 + $0x18] sm:$0xff]
    %v280 = vld [vmem:[#allocation2 + $0x20] sm:$0xff]
    %v281 = vld [vmem:[#allocation2 + $0x28] sm:$0xff]
    %v282 = vld [vmem:[#allocation2 + $0x30] sm:$0xff]
    %v283 = vld [vmem:[#allocation2 + $0x38] sm:$0xff]
    %v284 = vld [vmem:[#allocation2 + $0x40] sm:$0xff]
    %v285 = vld [vmem:[#allocation2 + $0x48] sm:$0xff]
    %v286 = vld [vmem:[#allocation2 + $0x50] sm:$0xff]
    %v287 = vld [vmem:[#allocation2 + $0x58] sm:$0xff]
    %v288 = vld [vmem:[#allocation2 + $0x60] sm:$0xff]
    %v289 = vld [vmem:[#allocation2 + $0x68] sm:$0xff]
    %v290 = vld [vmem:[#allocation2 + $0x70] sm:$0xff]
    %v291 = vld [vmem:[#allocation2 + $0x78] sm:$0xff]
    %v292 = vld [vmem:[#allocation2 + $0x80] sm:$0xff]
    %v293 = vld [vmem:[#allocation2 + $0x88] sm:$0xff]
    %v294 = vld [vmem:[#allocation2 + $0x90] sm:$0xff]
    %v295 = vld [vmem:[#allocation2 + $0x98] sm:$0xff]
    %v296 = vld [vmem:[#allocation2 + $0xa0] sm:$0xff]
    %v297 = vld [vmem:[#allocation2 + $0xa8] sm:$0xff]
    %v298 = vld [vmem:[#allocation2 + $0xb0] sm:$0xff]
    %v299 = vld [vmem:[#allocation2 + $0xb8] sm:$0xff]
    %v300 = vld [vmem:[#allocation2 + $0xc0] sm:$0xff]
    %v301 = vld [vmem:[#allocation2 + $0xc8] sm:$0xff]
    %v302 = vld [vmem:[#allocation2 + $0xd0] sm:$0xff]
    %v303 = vld [vmem:[#allocation2 + $0xd8] sm:$0xff]
    %v304 = vld [vmem:[#allocation2 + $0xe0] sm:$0xff]
    %v305 = vld [vmem:[#allocation2 + $0xe8] sm:$0xff]
    %v306 = vld [vmem:[#allocation2 + $0xf0] sm:$0xff]
    %v307 = vld [vmem:[#allocation2 + $0xf8] sm:$0xff]
    %308 = vmatprep.subr.mxu0 0.0
    %v309 = vand.u32 %v307, 4294901760
    %310 = vmatpush1.msra.mxu0 %v309
    %311 = vmatprep.subr.mxu0 0.0
    %v312 = vand.u32 %v306, 4294901760
    %313 = vmatpush1.msra.mxu0 %v312
    %314 = vmatprep.subr.mxu0 0.0
    %v315 = vand.u32 %v305, 4294901760
    %316 = vmatpush1.msra.mxu0 %v315
    %317 = vmatprep.subr.mxu0 0.0
    %v318 = vand.u32 %v304, 4294901760
    %319 = vmatpush1.msra.mxu0 %v318
    %320 = vmatprep.subr.mxu0 0.0
    %v321 = vand.u32 %v303, 4294901760
    %322 = vmatpush1.msra.mxu0 %v321
    %323 = vmatprep.subr.mxu0 0.0
    %v324 = vand.u32 %v302, 4294901760
    %325 = vmatpush1.msra.mxu0 %v324
    %326 = vmatprep.subr.mxu0 0.0
    %v327 = vand.u32 %v301, 4294901760
    %328 = vmatpush1.msra.mxu0 %v327
    %329 = vmatprep.subr.mxu0 0.0
    %v330 = vand.u32 %v300, 4294901760
    %331 = vmatpush1.msra.mxu0 %v330
    %332 = vmatprep.subr.mxu0 0.0
    %v333 = vand.u32 %v299, 4294901760
    %334 = vmatpush1.msra.mxu0 %v333
    %335 = vmatprep.subr.mxu0 0.0
    %v336 = vand.u32 %v298, 4294901760
    %337 = vmatpush1.msra.mxu0 %v336
    %338 = vmatprep.subr.mxu0 0.0
    %v339 = vand.u32 %v297, 4294901760
    %340 = vmatpush1.msra.mxu0 %v339
    %341 = vmatprep.subr.mxu0 0.0
    %v342 = vand.u32 %v296, 4294901760
    %343 = vmatpush1.msra.mxu0 %v342
    %344 = vmatprep.subr.mxu0 0.0
    %v345 = vand.u32 %v295, 4294901760
    %346 = vmatpush1.msra.mxu0 %v345
    %347 = vmatprep.subr.mxu0 0.0
    %v348 = vand.u32 %v294, 4294901760
    %349 = vmatpush1.msra.mxu0 %v348
    %350 = vmatprep.subr.mxu0 0.0
    %v351 = vand.u32 %v293, 4294901760
    %352 = vmatpush1.msra.mxu0 %v351
    %353 = vmatprep.subr.mxu0 0.0
    %v354 = vand.u32 %v292, 4294901760
    %355 = vmatpush1.msra.mxu0 %v354
    %356 = vmatprep.subr.mxu0 0.0
    %357 = vmatpush2.msra.mxu0 0.0
    %358 = vmatprep.subr.mxu0 0.0
    %359 = vmatpush2.msra.mxu0 0.0
    %360 = vmatprep.subr.mxu0 0.0
    %361 = vmatpush2.msra.mxu0 0.0
    %362 = vmatprep.subr.mxu0 0.0
    %363 = vmatpush2.msra.mxu0 0.0
    %364 = vmatprep.subr.mxu0 0.0
    %365 = vmatpush2.msra.mxu0 0.0
    %366 = vmatprep.subr.mxu0 0.0
    %367 = vmatpush2.msra.mxu0 0.0
    %368 = vmatprep.subr.mxu0 0.0
    %369 = vmatpush2.msra.mxu0 0.0
    %370 = vmatprep.subr.mxu0 0.0
    %371 = vmatpush2.msra.mxu0 0.0
    %372 = vmatprep.subr.mxu0 0.0
    %373 = vmatpush2.msra.mxu0 0.0
    %374 = vmatprep.subr.mxu0 0.0
    %375 = vmatpush2.msra.mxu0 0.0
    %376 = vmatprep.subr.mxu0 0.0
    %377 = vmatpush2.msra.mxu0 0.0
    %378 = vmatprep.subr.mxu0 0.0
    %379 = vmatpush2.msra.mxu0 0.0
    %380 = vmatprep.subr.mxu0 0.0
    %381 = vmatpush2.msra.mxu0 0.0
    %382 = vmatprep.subr.mxu0 0.0
    %383 = vmatpush2.msra.mxu0 0.0
    %384 = vmatprep.subr.mxu0 0.0
    %385 = vmatpush2.msra.mxu0 0.0
    %386 = vmatprep.subr.mxu0 0.0
    %387 = vmatpush2.msra.mxu0 0.0
    %388 = vmatprep.mubr.f32.mxu0 0.0
    %v389 = vand.u32 %v275, 4294901760
    %v390 = vsub.f32 %v275, %v389
    %v391 = vand.u32 %v390, 4294901760
    %v392 = vsub.f32 %v390, %v391
    %v393 = vand.u32 %v392, 4294901760
    %394 = vmatmul.mubr.f32.gmra.mxu0 %v393
    %v395 = vpop.f32.mrf.mxu0
    %v396 = vadd.f32 0.0, %v395
    %v397 = vpop.f32.mrf.mxu0
    %398 = vdwg.mxu0
    %399 = vmatprep.subr.mxu0 0.0
    %v400 = vand.u32 %v307, 4294901760
    %v401 = vsub.f32 %v307, %v400
    %v402 = vand.u32 %v401, 4294901760
    %v403 = vsub.f32 %v401, %v402
    %v404 = vand.u32 %v403, 4294901760
    %405 = vmatpush1.msra.mxu0 %v404
    %406 = vmatprep.subr.mxu0 0.0
    %v407 = vand.u32 %v306, 4294901760
    %v408 = vsub.f32 %v306, %v407
    %v409 = vand.u32 %v408, 4294901760
    %v410 = vsub.f32 %v408, %v409
    %v411 = vand.u32 %v410, 4294901760
    %412 = vmatpush1.msra.mxu0 %v411
    %413 = vmatprep.subr.mxu0 0.0
    %v414 = vand.u32 %v305, 4294901760
    %v415 = vsub.f32 %v305, %v414
    %v416 = vand.u32 %v415, 4294901760
    %v417 = vsub.f32 %v415, %v416
    %v418 = vand.u32 %v417, 4294901760
    %419 = vmatpush1.msra.mxu0 %v418
    %420 = vmatprep.subr.mxu0 0.0
    %v421 = vand.u32 %v304, 4294901760
    %v422 = vsub.f32 %v304, %v421
    %v423 = vand.u32 %v422, 4294901760
    %v424 = vsub.f32 %v422, %v423
    %v425 = vand.u32 %v424, 4294901760
    %426 = vmatpush1.msra.mxu0 %v425
    %427 = vmatprep.subr.mxu0 0.0
    %v428 = vand.u32 %v303, 4294901760
    %v429 = vsub.f32 %v303, %v428
    %v430 = vand.u32 %v429, 4294901760
    %v431 = vsub.f32 %v429, %v430
    %v432 = vand.u32 %v431, 4294901760
    %433 = vmatpush1.msra.mxu0 %v432
    %434 = vmatprep.subr.mxu0 0.0
    %v435 = vand.u32 %v302, 4294901760
    %v436 = vsub.f32 %v302, %v435
    %v437 = vand.u32 %v436, 4294901760
    %v438 = vsub.f32 %v436, %v437
    %v439 = vand.u32 %v438, 4294901760
    %440 = vmatpush1.msra.mxu0 %v439
    %441 = vmatprep.subr.mxu0 0.0
    %v442 = vand.u32 %v301, 4294901760
    %v443 = vsub.f32 %v301, %v442
    %v444 = vand.u32 %v443, 4294901760
    %v445 = vsub.f32 %v443, %v444
    %v446 = vand.u32 %v445, 4294901760
    %447 = vmatpush1.msra.mxu0 %v446
    %448 = vmatprep.subr.mxu0 0.0
    %v449 = vand.u32 %v300, 4294901760
    %v450 = vsub.f32 %v300, %v449
    %v451 = vand.u32 %v450, 4294901760
    %v452 = vsub.f32 %v450, %v451
    %v453 = vand.u32 %v452, 4294901760
    %454 = vmatpush1.msra.mxu0 %v453
    %455 = vmatprep.subr.mxu0 0.0
    %v456 = vand.u32 %v299, 4294901760
    %v457 = vsub.f32 %v299, %v456
    %v458 = vand.u32 %v457, 4294901760
    %v459 = vsub.f32 %v457, %v458
    %v460 = vand.u32 %v459, 4294901760
    %461 = vmatpush1.msra.mxu0 %v460
    %462 = vmatprep.subr.mxu0 0.0
    %v463 = vand.u32 %v298, 4294901760
    %v464 = vsub.f32 %v298, %v463
    %v465 = vand.u32 %v464, 4294901760
    %v466 = vsub.f32 %v464, %v465
    %v467 = vand.u32 %v466, 4294901760
    %468 = vmatpush1.msra.mxu0 %v467
    %469 = vmatprep.subr.mxu0 0.0
    %v470 = vand.u32 %v297, 4294901760
    %v471 = vsub.f32 %v297, %v470
    %v472 = vand.u32 %v471, 4294901760
    %v473 = vsub.f32 %v471, %v472
    %v474 = vand.u32 %v473, 4294901760
    %475 = vmatpush1.msra.mxu0 %v474
    %476 = vmatprep.subr.mxu0 0.0
    %v477 = vand.u32 %v296, 4294901760
    %v478 = vsub.f32 %v296, %v477
    %v479 = vand.u32 %v478, 4294901760
    %v480 = vsub.f32 %v478, %v479
    %v481 = vand.u32 %v480, 4294901760
    %482 = vmatpush1.msra.mxu0 %v481
    %483 = vmatprep.subr.mxu0 0.0
    %v484 = vand.u32 %v295, 4294901760
    %v485 = vsub.f32 %v295, %v484
    %v486 = vand.u32 %v485, 4294901760
    %v487 = vsub.f32 %v485, %v486
    %v488 = vand.u32 %v487, 4294901760
    %489 = vmatpush1.msra.mxu0 %v488
    %490 = vmatprep.subr.mxu0 0.0
    %v491 = vand.u32 %v294, 4294901760
    %v492 = vsub.f32 %v294, %v491
    %v493 = vand.u32 %v492, 4294901760
    %v494 = vsub.f32 %v492, %v493
    %v495 = vand.u32 %v494, 4294901760
    %496 = vmatpush1.msra.mxu0 %v495
    %497 = vmatprep.subr.mxu0 0.0
    %v498 = vand.u32 %v293, 4294901760
    %v499 = vsub.f32 %v293, %v498
    %v500 = vand.u32 %v499, 4294901760
    %v501 = vsub.f32 %v499, %v500
    %v502 = vand.u32 %v501, 4294901760
    %503 = vmatpush1.msra.mxu0 %v502
    %504 = vmatprep.subr.mxu0 0.0
    %v505 = vand.u32 %v292, 4294901760
    %v506 = vsub.f32 %v292, %v505
    %v507 = vand.u32 %v506, 4294901760
    %v508 = vsub.f32 %v506, %v507
    %v509 = vand.u32 %v508, 4294901760
    %510 = vmatpush1.msra.mxu0 %v509
    %511 = vmatprep.subr.mxu0 0.0
    %512 = vmatpush2.msra.mxu0 0.0
    %513 = vmatprep.subr.mxu0 0.0
    %514 = vmatpush2.msra.mxu0 0.0
    %515 = vmatprep.subr.mxu0 0.0
    %516 = vmatpush2.msra.mxu0 0.0
    %517 = vmatprep.subr.mxu0 0.0
    %518 = vmatpush2.msra.mxu0 0.0
    %519 = vmatprep.subr.mxu0 0.0
    %520 = vmatpush2.msra.mxu0 0.0
    %521 = vmatprep.subr.mxu0 0.0
    %522 = vmatpush2.msra.mxu0 0.0
    %523 = vmatprep.subr.mxu0 0.0
    %524 = vmatpush2.msra.mxu0 0.0
    %525 = vmatprep.subr.mxu0 0.0
    %526 = vmatpush2.msra.mxu0 0.0
    %527 = vmatprep.subr.mxu0 0.0
    %528 = vmatpush2.msra.mxu0 0.0
    %529 = vmatprep.subr.mxu0 0.0
    %530 = vmatpush2.msra.mxu0 0.0
    %531 = vmatprep.subr.mxu0 0.0
    %532 = vmatpush2.msra.mxu0 0.0
    %533 = vmatprep.subr.mxu0 0.0
    %534 = vmatpush2.msra.mxu0 0.0
    %535 = vmatprep.subr.mxu0 0.0
    %536 = vmatpush2.msra.mxu0 0.0
    %537 = vmatprep.subr.mxu0 0.0
    %538 = vmatpush2.msra.mxu0 0.0
    %539 = vmatprep.subr.mxu0 0.0
    %540 = vmatpush2.msra.mxu0 0.0
    %541 = vmatprep.subr.mxu0 0.0
    %542 = vmatpush2.msra.mxu0 0.0
    %543 = vmatprep.mubr.f32.mxu0 0.0
    %v544 = vand.u32 %v275, 4294901760
    %545 = vmatmul.mubr.f32.gmra.mxu0 %v544
    %v546 = vpop.f32.mrf.mxu0
    %v547 = vadd.f32 %v396, %v546
    %v548 = vpop.f32.mrf.mxu0
    %549 = vdwg.mxu0
    %550 = vmatprep.subr.mxu0 0.0
    %v551 = vand.u32 %v307, 4294901760
    %v552 = vsub.f32 %v307, %v551
    %553 = vmatpush1.msra.mxu0 %v552
    %554 = vmatprep.subr.mxu0 0.0
    %v555 = vand.u32 %v306, 4294901760
    %v556 = vsub.f32 %v306, %v555
    %557 = vmatpush1.msra.mxu0 %v556
    %558 = vmatprep.subr.mxu0 0.0
    %v559 = vand.u32 %v305, 4294901760
    %v560 = vsub.f32 %v305, %v559
    %561 = vmatpush1.msra.mxu0 %v560
    %562 = vmatprep.subr.mxu0 0.0
    %v563 = vand.u32 %v304, 4294901760
    %v564 = vsub.f32 %v304, %v563
    %565 = vmatpush1.msra.mxu0 %v564
    %566 = vmatprep.subr.mxu0 0.0
    %v567 = vand.u32 %v303, 4294901760
    %v568 = vsub.f32 %v303, %v567
    %569 = vmatpush1.msra.mxu0 %v568
    %570 = vmatprep.subr.mxu0 0.0
    %v571 = vand.u32 %v302, 4294901760
    %v572 = vsub.f32 %v302, %v571
    %573 = vmatpush1.msra.mxu0 %v572
    %574 = vmatprep.subr.mxu0 0.0
    %v575 = vand.u32 %v301, 4294901760
    %v576 = vsub.f32 %v301, %v575
    %577 = vmatpush1.msra.mxu0 %v576
    %578 = vmatprep.subr.mxu0 0.0
    %v579 = vand.u32 %v300, 4294901760
    %v580 = vsub.f32 %v300, %v579
    %581 = vmatpush1.msra.mxu0 %v580
    %582 = vmatprep.subr.mxu0 0.0
    %v583 = vand.u32 %v299, 4294901760
    %v584 = vsub.f32 %v299, %v583
    %585 = vmatpush1.msra.mxu0 %v584
    %586 = vmatprep.subr.mxu0 0.0
    %v587 = vand.u32 %v298, 4294901760
    %v588 = vsub.f32 %v298, %v587
    %589 = vmatpush1.msra.mxu0 %v588
    %590 = vmatprep.subr.mxu0 0.0
    %v591 = vand.u32 %v297, 4294901760
    %v592 = vsub.f32 %v297, %v591
    %593 = vmatpush1.msra.mxu0 %v592
    %594 = vmatprep.subr.mxu0 0.0
    %v595 = vand.u32 %v296, 4294901760
    %v596 = vsub.f32 %v296, %v595
    %597 = vmatpush1.msra.mxu0 %v596
    %598 = vmatprep.subr.mxu0 0.0
    %v599 = vand.u32 %v295, 4294901760
    %v600 = vsub.f32 %v295, %v599
    %601 = vmatpush1.msra.mxu0 %v600
    %602 = vmatprep.subr.mxu0 0.0
    %v603 = vand.u32 %v294, 4294901760
    %v604 = vsub.f32 %v294, %v603
    %605 = vmatpush1.msra.mxu0 %v604
    %606 = vmatprep.subr.mxu0 0.0
    %v607 = vand.u32 %v293, 4294901760
    %v608 = vsub.f32 %v293, %v607
    %609 = vmatpush1.msra.mxu0 %v608
    %610 = vmatprep.subr.mxu0 0.0
    %v611 = vand.u32 %v292, 4294901760
    %v612 = vsub.f32 %v292, %v611
    %613 = vmatpush1.msra.mxu0 %v612
    %614 = vmatprep.subr.mxu0 0.0
    %615 = vmatpush2.msra.mxu0 0.0
    %616 = vmatprep.subr.mxu0 0.0
    %617 = vmatpush2.msra.mxu0 0.0
    %618 = vmatprep.subr.mxu0 0.0
    %619 = vmatpush2.msra.mxu0 0.0
    %620 = vmatprep.subr.mxu0 0.0
    %621 = vmatpush2.msra.mxu0 0.0
    %622 = vmatprep.subr.mxu0 0.0
    %623 = vmatpush2.msra.mxu0 0.0
    %624 = vmatprep.subr.mxu0 0.0
    %625 = vmatpush2.msra.mxu0 0.0
    %626 = vmatprep.subr.mxu0 0.0
    %627 = vmatpush2.msra.mxu0 0.0
    %628 = vmatprep.subr.mxu0 0.0
    %629 = vmatpush2.msra.mxu0 0.0
    %630 = vmatprep.subr.mxu0 0.0
    %631 = vmatpush2.msra.mxu0 0.0
    %632 = vmatprep.subr.mxu0 0.0
    %633 = vmatpush2.msra.mxu0 0.0
    %634 = vmatprep.subr.mxu0 0.0
    %635 = vmatpush2.msra.mxu0 0.0
    %636 = vmatprep.subr.mxu0 0.0
    %637 = vmatpush2.msra.mxu0 0.0
    %638 = vmatprep.subr.mxu0 0.0
    %639 = vmatpush2.msra.mxu0 0.0
    %640 = vmatprep.subr.mxu0 0.0
    %641 = vmatpush2.msra.mxu0 0.0
    %642 = vmatprep.subr.mxu0 0.0
    %643 = vmatpush2.msra.mxu0 0.0
    %644 = vmatprep.subr.mxu0 0.0
    %645 = vmatpush2.msra.mxu0 0.0
    %646 = vmatprep.mubr.f32.mxu0 0.0
    %v647 = vand.u32 %v275, 4294901760
    %v648 = vsub.f32 %v275, %v647
    %649 = vmatmul.mubr.f32.gmra.mxu0 %v648
    %v650 = vpop.f32.mrf.mxu0
    %v651 = vadd.f32 %v547, %v650
    %v652 = vpop.f32.mrf.mxu0
    %653 = vdwg.mxu0
    %654 = vmatprep.subr.mxu0 0.0
    %v655 = vand.u32 %v307, 4294901760
    %656 = vmatpush1.msra.mxu0 %v655
    %657 = vmatprep.subr.mxu0 0.0
    %v658 = vand.u32 %v306, 4294901760
    %659 = vmatpush1.msra.mxu0 %v658
    %660 = vmatprep.subr.mxu0 0.0
    %v661 = vand.u32 %v305, 4294901760
    %662 = vmatpush1.msra.mxu0 %v661
    %663 = vmatprep.subr.mxu0 0.0
    %v664 = vand.u32 %v304, 4294901760
    %665 = vmatpush1.msra.mxu0 %v664
    %666 = vmatprep.subr.mxu0 0.0
    %v667 = vand.u32 %v303, 4294901760
    %668 = vmatpush1.msra.mxu0 %v667
    %669 = vmatprep.subr.mxu0 0.0
    %v670 = vand.u32 %v302, 4294901760
    %671 = vmatpush1.msra.mxu0 %v670
    %672 = vmatprep.subr.mxu0 0.0
    %v673 = vand.u32 %v301, 4294901760
    %674 = vmatpush1.msra.mxu0 %v673
    %675 = vmatprep.subr.mxu0 0.0
    %v676 = vand.u32 %v300, 4294901760
    %677 = vmatpush1.msra.mxu0 %v676
    %678 = vmatprep.subr.mxu0 0.0
    %v679 = vand.u32 %v299, 4294901760
    %680 = vmatpush1.msra.mxu0 %v679
    %681 = vmatprep.subr.mxu0 0.0
    %v682 = vand.u32 %v298, 4294901760
    %683 = vmatpush1.msra.mxu0 %v682
    %684 = vmatprep.subr.mxu0 0.0
    %v685 = vand.u32 %v297, 4294901760
    %686 = vmatpush1.msra.mxu0 %v685
    %687 = vmatprep.subr.mxu0 0.0
    %v688 = vand.u32 %v296, 4294901760
    %689 = vmatpush1.msra.mxu0 %v688
    %690 = vmatprep.subr.mxu0 0.0
    %v691 = vand.u32 %v295, 4294901760
    %692 = vmatpush1.msra.mxu0 %v691
    %693 = vmatprep.subr.mxu0 0.0
    %v694 = vand.u32 %v294, 4294901760
    %695 = vmatpush1.msra.mxu0 %v694
    %696 = vmatprep.subr.mxu0 0.0
    %v697 = vand.u32 %v293, 4294901760
    %698 = vmatpush1.msra.mxu0 %v697
    %699 = vmatprep.subr.mxu0 0.0
    %v700 = vand.u32 %v292, 4294901760
    %701 = vmatpush1.msra.mxu0 %v700
    %702 = vmatprep.subr.mxu0 0.0
    %703 = vmatpush2.msra.mxu0 0.0
    %704 = vmatprep.subr.mxu0 0.0
    %705 = vmatpush2.msra.mxu0 0.0
    %706 = vmatprep.subr.mxu0 0.0
    %707 = vmatpush2.msra.mxu0 0.0
    %708 = vmatprep.subr.mxu0 0.0
    %709 = vmatpush2.msra.mxu0 0.0
    %710 = vmatprep.subr.mxu0 0.0
    %711 = vmatpush2.msra.mxu0 0.0
    %712 = vmatprep.subr.mxu0 0.0
    %713 = vmatpush2.msra.mxu0 0.0
    %714 = vmatprep.subr.mxu0 0.0
    %715 = vmatpush2.msra.mxu0 0.0
    %716 = vmatprep.subr.mxu0 0.0
    %717 = vmatpush2.msra.mxu0 0.0
    %718 = vmatprep.subr.mxu0 0.0
    %719 = vmatpush2.msra.mxu0 0.0
    %720 = vmatprep.subr.mxu0 0.0
    %721 = vmatpush2.msra.mxu0 0.0
    %722 = vmatprep.subr.mxu0 0.0
    %723 = vmatpush2.msra.mxu0 0.0
    %724 = vmatprep.subr.mxu0 0.0
    %725 = vmatpush2.msra.mxu0 0.0
    %726 = vmatprep.subr.mxu0 0.0
    %727 = vmatpush2.msra.mxu0 0.0
    %728 = vmatprep.subr.mxu0 0.0
    %729 = vmatpush2.msra.mxu0 0.0
    %730 = vmatprep.subr.mxu0 0.0
    %731 = vmatpush2.msra.mxu0 0.0
    %732 = vmatprep.subr.mxu0 0.0
    %733 = vmatpush2.msra.mxu0 0.0
    %734 = vmatprep.mubr.f32.mxu0 0.0
    %v735 = vand.u32 %v275, 4294901760
    %v736 = vsub.f32 %v275, %v735
    %v737 = vand.u32 %v736, 4294901760
    %738 = vmatmul.mubr.f32.gmra.mxu0 %v737
    %v739 = vpop.f32.mrf.mxu0
    %v740 = vadd.f32 %v651, %v739
    %v741 = vpop.f32.mrf.mxu0
    %742 = vdwg.mxu0
    %743 = vmatprep.subr.mxu0 0.0
    %v744 = vand.u32 %v307, 4294901760
    %v745 = vsub.f32 %v307, %v744
    %v746 = vand.u32 %v745, 4294901760
    %747 = vmatpush1.msra.mxu0 %v746
    %748 = vmatprep.subr.mxu0 0.0
    %v749 = vand.u32 %v306, 4294901760
    %v750 = vsub.f32 %v306, %v749
    %v751 = vand.u32 %v750, 4294901760
    %752 = vmatpush1.msra.mxu0 %v751
    %753 = vmatprep.subr.mxu0 0.0
    %v754 = vand.u32 %v305, 4294901760
    %v755 = vsub.f32 %v305, %v754
    %v756 = vand.u32 %v755, 4294901760
    %757 = vmatpush1.msra.mxu0 %v756
    %758 = vmatprep.subr.mxu0 0.0
    %v759 = vand.u32 %v304, 4294901760
    %v760 = vsub.f32 %v304, %v759
    %v761 = vand.u32 %v760, 4294901760
    %762 = vmatpush1.msra.mxu0 %v761
    %763 = vmatprep.subr.mxu0 0.0
    %v764 = vand.u32 %v303, 4294901760
    %v765 = vsub.f32 %v303, %v764
    %v766 = vand.u32 %v765, 4294901760
    %767 = vmatpush1.msra.mxu0 %v766
    %768 = vmatprep.subr.mxu0 0.0
    %v769 = vand.u32 %v302, 4294901760
    %v770 = vsub.f32 %v302, %v769
    %v771 = vand.u32 %v770, 4294901760
    %772 = vmatpush1.msra.mxu0 %v771
    %773 = vmatprep.subr.mxu0 0.0
    %v774 = vand.u32 %v301, 4294901760
    %v775 = vsub.f32 %v301, %v774
    %v776 = vand.u32 %v775, 4294901760
    %777 = vmatpush1.msra.mxu0 %v776
    %778 = vmatprep.subr.mxu0 0.0
    %v779 = vand.u32 %v300, 4294901760
    %v780 = vsub.f32 %v300, %v779
    %v781 = vand.u32 %v780, 4294901760
    %782 = vmatpush1.msra.mxu0 %v781
    %783 = vmatprep.subr.mxu0 0.0
    %v784 = vand.u32 %v299, 4294901760
    %v785 = vsub.f32 %v299, %v784
    %v786 = vand.u32 %v785, 4294901760
    %787 = vmatpush1.msra.mxu0 %v786
    %788 = vmatprep.subr.mxu0 0.0
    %v789 = vand.u32 %v298, 4294901760
    %v790 = vsub.f32 %v298, %v789
    %v791 = vand.u32 %v790, 4294901760
    %792 = vmatpush1.msra.mxu0 %v791
    %793 = vmatprep.subr.mxu0 0.0
    %v794 = vand.u32 %v297, 4294901760
    %v795 = vsub.f32 %v297, %v794
    %v796 = vand.u32 %v795, 4294901760
    %797 = vmatpush1.msra.mxu0 %v796
    %798 = vmatprep.subr.mxu0 0.0
    %v799 = vand.u32 %v296, 4294901760
    %v800 = vsub.f32 %v296, %v799
    %v801 = vand.u32 %v800, 4294901760
    %802 = vmatpush1.msra.mxu0 %v801
    %803 = vmatprep.subr.mxu0 0.0
    %v804 = vand.u32 %v295, 4294901760
    %v805 = vsub.f32 %v295, %v804
    %v806 = vand.u32 %v805, 4294901760
    %807 = vmatpush1.msra.mxu0 %v806
    %808 = vmatprep.subr.mxu0 0.0
    %v809 = vand.u32 %v294, 4294901760
    %v810 = vsub.f32 %v294, %v809
    %v811 = vand.u32 %v810, 4294901760
    %812 = vmatpush1.msra.mxu0 %v811
    %813 = vmatprep.subr.mxu0 0.0
    %v814 = vand.u32 %v293, 4294901760
    %v815 = vsub.f32 %v293, %v814
    %v816 = vand.u32 %v815, 4294901760
    %817 = vmatpush1.msra.mxu0 %v816
    %818 = vmatprep.subr.mxu0 0.0
    %v819 = vand.u32 %v292, 4294901760
    %v820 = vsub.f32 %v292, %v819
    %v821 = vand.u32 %v820, 4294901760
    %822 = vmatpush1.msra.mxu0 %v821
    %823 = vmatprep.subr.mxu0 0.0
    %824 = vmatpush2.msra.mxu0 0.0
    %825 = vmatprep.subr.mxu0 0.0
    %826 = vmatpush2.msra.mxu0 0.0
    %827 = vmatprep.subr.mxu0 0.0
    %828 = vmatpush2.msra.mxu0 0.0
    %829 = vmatprep.subr.mxu0 0.0
    %830 = vmatpush2.msra.mxu0 0.0
    %831 = vmatprep.subr.mxu0 0.0
    %832 = vmatpush2.msra.mxu0 0.0
    %833 = vmatprep.subr.mxu0 0.0
    %834 = vmatpush2.msra.mxu0 0.0
    %835 = vmatprep.subr.mxu0 0.0
    %836 = vmatpush2.msra.mxu0 0.0
    %837 = vmatprep.subr.mxu0 0.0
    %838 = vmatpush2.msra.mxu0 0.0
    %839 = vmatprep.subr.mxu0 0.0
    %840 = vmatpush2.msra.mxu0 0.0
    %841 = vmatprep.subr.mxu0 0.0
    %842 = vmatpush2.msra.mxu0 0.0
    %843 = vmatprep.subr.mxu0 0.0
    %844 = vmatpush2.msra.mxu0 0.0
    %845 = vmatprep.subr.mxu0 0.0
    %846 = vmatpush2.msra.mxu0 0.0
    %847 = vmatprep.subr.mxu0 0.0
    %848 = vmatpush2.msra.mxu0 0.0
    %849 = vmatprep.subr.mxu0 0.0
    %850 = vmatpush2.msra.mxu0 0.0
    %851 = vmatprep.subr.mxu0 0.0
    %852 = vmatpush2.msra.mxu0 0.0
    %853 = vmatprep.subr.mxu0 0.0
    %854 = vmatpush2.msra.mxu0 0.0
    %855 = vmatprep.mubr.f32.mxu0 0.0
    %v856 = vand.u32 %v275, 4294901760
    %857 = vmatmul.mubr.f32.gmra.mxu0 %v856
    %v858 = vpop.f32.mrf.mxu0
    %v859 = vadd.f32 %v740, %v858
    %v860 = vpop.f32.mrf.mxu0
    %861 = vdwg.mxu0
    %862 = vmatprep.subr.mxu0 0.0
    %v863 = vand.u32 %v307, 4294901760
    %864 = vmatpush1.msra.mxu0 %v863
    %865 = vmatprep.subr.mxu0 0.0
    %v866 = vand.u32 %v306, 4294901760
    %867 = vmatpush1.msra.mxu0 %v866
    %868 = vmatprep.subr.mxu0 0.0
    %v869 = vand.u32 %v305, 4294901760
    %870 = vmatpush1.msra.mxu0 %v869
    %871 = vmatprep.subr.mxu0 0.0
    %v872 = vand.u32 %v304, 4294901760
    %873 = vmatpush1.msra.mxu0 %v872
    %874 = vmatprep.subr.mxu0 0.0
    %v875 = vand.u32 %v303, 4294901760
    %876 = vmatpush1.msra.mxu0 %v875
    %877 = vmatprep.subr.mxu0 0.0
    %v878 = vand.u32 %v302, 4294901760
    %879 = vmatpush1.msra.mxu0 %v878
    %880 = vmatprep.subr.mxu0 0.0
    %v881 = vand.u32 %v301, 4294901760
    %882 = vmatpush1.msra.mxu0 %v881
    %883 = vmatprep.subr.mxu0 0.0
    %v884 = vand.u32 %v300, 4294901760
    %885 = vmatpush1.msra.mxu0 %v884
    %886 = vmatprep.subr.mxu0 0.0
    %v887 = vand.u32 %v299, 4294901760
    %888 = vmatpush1.msra.mxu0 %v887
    %889 = vmatprep.subr.mxu0 0.0
    %v890 = vand.u32 %v298, 4294901760
    %891 = vmatpush1.msra.mxu0 %v890
    %892 = vmatprep.subr.mxu0 0.0
    %v893 = vand.u32 %v297, 4294901760
    %894 = vmatpush1.msra.mxu0 %v893
    %895 = vmatprep.subr.mxu0 0.0
    %v896 = vand.u32 %v296, 4294901760
    %897 = vmatpush1.msra.mxu0 %v896
    %898 = vmatprep.subr.mxu0 0.0
    %v899 = vand.u32 %v295, 4294901760
    %900 = vmatpush1.msra.mxu0 %v899
    %901 = vmatprep.subr.mxu0 0.0
    %v902 = vand.u32 %v294, 4294901760
    %903 = vmatpush1.msra.mxu0 %v902
    %904 = vmatprep.subr.mxu0 0.0
    %v905 = vand.u32 %v293, 4294901760
    %906 = vmatpush1.msra.mxu0 %v905
    %907 = vmatprep.subr.mxu0 0.0
    %v908 = vand.u32 %v292, 4294901760
    %909 = vmatpush1.msra.mxu0 %v908
    %910 = vmatprep.subr.mxu0 0.0
    %911 = vmatpush2.msra.mxu0 0.0
    %912 = vmatprep.subr.mxu0 0.0
    %913 = vmatpush2.msra.mxu0 0.0
    %914 = vmatprep.subr.mxu0 0.0
    %915 = vmatpush2.msra.mxu0 0.0
    %916 = vmatprep.subr.mxu0 0.0
    %917 = vmatpush2.msra.mxu0 0.0
    %918 = vmatprep.subr.mxu0 0.0
    %919 = vmatpush2.msra.mxu0 0.0
    %920 = vmatprep.subr.mxu0 0.0
    %921 = vmatpush2.msra.mxu0 0.0
    %922 = vmatprep.subr.mxu0 0.0
    %923 = vmatpush2.msra.mxu0 0.0
    %924 = vmatprep.subr.mxu0 0.0
    %925 = vmatpush2.msra.mxu0 0.0
    %926 = vmatprep.subr.mxu0 0.0
    %927 = vmatpush2.msra.mxu0 0.0
    %928 = vmatprep.subr.mxu0 0.0
    %929 = vmatpush2.msra.mxu0 0.0
    %930 = vmatprep.subr.mxu0 0.0
    %931 = vmatpush2.msra.mxu0 0.0
    %932 = vmatprep.subr.mxu0 0.0
    %933 = vmatpush2.msra.mxu0 0.0
    %934 = vmatprep.subr.mxu0 0.0
    %935 = vmatpush2.msra.mxu0 0.0
    %936 = vmatprep.subr.mxu0 0.0
    %937 = vmatpush2.msra.mxu0 0.0
    %938 = vmatprep.subr.mxu0 0.0
    %939 = vmatpush2.msra.mxu0 0.0
    %940 = vmatprep.subr.mxu0 0.0
    %941 = vmatpush2.msra.mxu0 0.0
    %942 = vmatprep.mubr.f32.mxu0 0.0
    %v943 = vand.u32 %v275, 4294901760
    %944 = vmatmul.mubr.f32.gmra.mxu0 %v943
    %v945 = vpop.f32.mrf.mxu0
    %v946 = vadd.f32 %v859, %v945
    %v947 = vpop.f32.mrf.mxu0
    %948 = vdwg.mxu0
    %949 = vmatprep.subr.mxu0 0.0
    %v950 = vand.u32 %v291, 4294901760
    %951 = vmatpush1.msra.mxu0 %v950
    %952 = vmatprep.subr.mxu0 0.0
    %v953 = vand.u32 %v290, 4294901760
    %954 = vmatpush1.msra.mxu0 %v953
    %955 = vmatprep.subr.mxu0 0.0
    %v956 = vand.u32 %v289, 4294901760
    %957 = vmatpush1.msra.mxu0 %v956
    %958 = vmatprep.subr.mxu0 0.0
    %v959 = vand.u32 %v288, 4294901760
    %960 = vmatpush1.msra.mxu0 %v959
    %961 = vmatprep.subr.mxu0 0.0
    %v962 = vand.u32 %v287, 4294901760
    %963 = vmatpush1.msra.mxu0 %v962
    %964 = vmatprep.subr.mxu0 0.0
    %v965 = vand.u32 %v286, 4294901760
    %966 = vmatpush1.msra.mxu0 %v965
    %967 = vmatprep.subr.mxu0 0.0
    %v968 = vand.u32 %v285, 4294901760
    %969 = vmatpush1.msra.mxu0 %v968
    %970 = vmatprep.subr.mxu0 0.0
    %v971 = vand.u32 %v284, 4294901760
    %972 = vmatpush1.msra.mxu0 %v971
    %973 = vmatprep.subr.mxu0 0.0
    %v974 = vand.u32 %v283, 4294901760
    %975 = vmatpush1.msra.mxu0 %v974
    %976 = vmatprep.subr.mxu0 0.0
    %v977 = vand.u32 %v282, 4294901760
    %978 = vmatpush1.msra.mxu0 %v977
    %979 = vmatprep.subr.mxu0 0.0
    %v980 = vand.u32 %v281, 4294901760
    %981 = vmatpush1.msra.mxu0 %v980
    %982 = vmatprep.subr.mxu0 0.0
    %v983 = vand.u32 %v280, 4294901760
    %984 = vmatpush1.msra.mxu0 %v983
    %985 = vmatprep.subr.mxu0 0.0
    %v986 = vand.u32 %v279, 4294901760
    %987 = vmatpush1.msra.mxu0 %v986
    %988 = vmatprep.subr.mxu0 0.0
    %v989 = vand.u32 %v278, 4294901760
    %990 = vmatpush1.msra.mxu0 %v989
    %991 = vmatprep.subr.mxu0 0.0
    %v992 = vand.u32 %v277, 4294901760
    %993 = vmatpush1.msra.mxu0 %v992
    %994 = vmatprep.subr.mxu0 0.0
    %v995 = vand.u32 %v276, 4294901760
    %996 = vmatpush1.msra.mxu0 %v995
    %997 = vmatprep.subr.mxu0 0.0
    %998 = vmatpush2.msra.mxu0 0.0
    %999 = vmatprep.subr.mxu0 0.0
    %1000 = vmatpush2.msra.mxu0 0.0
    %1001 = vmatprep.subr.mxu0 0.0
    %1002 = vmatpush2.msra.mxu0 0.0
    %1003 = vmatprep.subr.mxu0 0.0
    %1004 = vmatpush2.msra.mxu0 0.0
    %1005 = vmatprep.subr.mxu0 0.0
    %1006 = vmatpush2.msra.mxu0 0.0
    %1007 = vmatprep.subr.mxu0 0.0
    %1008 = vmatpush2.msra.mxu0 0.0
    %1009 = vmatprep.subr.mxu0 0.0
    %1010 = vmatpush2.msra.mxu0 0.0
    %1011 = vmatprep.subr.mxu0 0.0
    %1012 = vmatpush2.msra.mxu0 0.0
    %1013 = vmatprep.subr.mxu0 0.0
    %1014 = vmatpush2.msra.mxu0 0.0
    %1015 = vmatprep.subr.mxu0 0.0
    %1016 = vmatpush2.msra.mxu0 0.0
    %1017 = vmatprep.subr.mxu0 0.0
    %1018 = vmatpush2.msra.mxu0 0.0
    %1019 = vmatprep.subr.mxu0 0.0
    %1020 = vmatpush2.msra.mxu0 0.0
    %1021 = vmatprep.subr.mxu0 0.0
    %1022 = vmatpush2.msra.mxu0 0.0
    %1023 = vmatprep.subr.mxu0 0.0
    %1024 = vmatpush2.msra.mxu0 0.0
    %1025 = vmatprep.subr.mxu0 0.0
    %1026 = vmatpush2.msra.mxu0 0.0
    %1027 = vmatprep.subr.mxu0 0.0
    %1028 = vmatpush2.msra.mxu0 0.0
    %1029 = vmatprep.mubr.f32.mxu0 0.0
    %v1030 = vand.u32 %v172, 4294901760
    %v1031 = vsub.f32 %v172, %v1030
    %v1032 = vand.u32 %v1031, 4294901760
    %v1033 = vsub.f32 %v1031, %v1032
    %v1034 = vand.u32 %v1033, 4294901760
    %1035 = vmatmul.mubr.f32.gmra.mxu0 %v1034
    %v1036 = vpop.f32.mrf.mxu0
    %v1037 = vadd.f32 %v946, %v1036
    %v1038 = vpop.f32.mrf.mxu0
    %1039 = vdwg.mxu0
    %1040 = vmatprep.subr.mxu0 0.0
    %v1041 = vand.u32 %v291, 4294901760
    %v1042 = vsub.f32 %v291, %v1041
    %v1043 = vand.u32 %v1042, 4294901760
    %v1044 = vsub.f32 %v1042, %v1043
    %v1045 = vand.u32 %v1044, 4294901760
    %1046 = vmatpush1.msra.mxu0 %v1045
    %1047 = vmatprep.subr.mxu0 0.0
    %v1048 = vand.u32 %v290, 4294901760
    %v1049 = vsub.f32 %v290, %v1048
    %v1050 = vand.u32 %v1049, 4294901760
    %v1051 = vsub.f32 %v1049, %v1050
    %v1052 = vand.u32 %v1051, 4294901760
    %1053 = vmatpush1.msra.mxu0 %v1052
    %1054 = vmatprep.subr.mxu0 0.0
    %v1055 = vand.u32 %v289, 4294901760
    %v1056 = vsub.f32 %v289, %v1055
    %v1057 = vand.u32 %v1056, 4294901760
    %v1058 = vsub.f32 %v1056, %v1057
    %v1059 = vand.u32 %v1058, 4294901760
    %1060 = vmatpush1.msra.mxu0 %v1059
    %1061 = vmatprep.subr.mxu0 0.0
    %v1062 = vand.u32 %v288, 4294901760
    %v1063 = vsub.f32 %v288, %v1062
    %v1064 = vand.u32 %v1063, 4294901760
    %v1065 = vsub.f32 %v1063, %v1064
    %v1066 = vand.u32 %v1065, 4294901760
    %1067 = vmatpush1.msra.mxu0 %v1066
    %1068 = vmatprep.subr.mxu0 0.0
    %v1069 = vand.u32 %v287, 4294901760
    %v1070 = vsub.f32 %v287, %v1069
    %v1071 = vand.u32 %v1070, 4294901760
    %v1072 = vsub.f32 %v1070, %v1071
    %v1073 = vand.u32 %v1072, 4294901760
    %1074 = vmatpush1.msra.mxu0 %v1073
    %1075 = vmatprep.subr.mxu0 0.0
    %v1076 = vand.u32 %v286, 4294901760
    %v1077 = vsub.f32 %v286, %v1076
    %v1078 = vand.u32 %v1077, 4294901760
    %v1079 = vsub.f32 %v1077, %v1078
    %v1080 = vand.u32 %v1079, 4294901760
    %1081 = vmatpush1.msra.mxu0 %v1080
    %1082 = vmatprep.subr.mxu0 0.0
    %v1083 = vand.u32 %v285, 4294901760
    %v1084 = vsub.f32 %v285, %v1083
    %v1085 = vand.u32 %v1084, 4294901760
    %v1086 = vsub.f32 %v1084, %v1085
    %v1087 = vand.u32 %v1086, 4294901760
    %1088 = vmatpush1.msra.mxu0 %v1087
    %1089 = vmatprep.subr.mxu0 0.0
    %v1090 = vand.u32 %v284, 4294901760
    %v1091 = vsub.f32 %v284, %v1090
    %v1092 = vand.u32 %v1091, 4294901760
    %v1093 = vsub.f32 %v1091, %v1092
    %v1094 = vand.u32 %v1093, 4294901760
    %1095 = vmatpush1.msra.mxu0 %v1094
    %1096 = vmatprep.subr.mxu0 0.0
    %v1097 = vand.u32 %v283, 4294901760
    %v1098 = vsub.f32 %v283, %v1097
    %v1099 = vand.u32 %v1098, 4294901760
    %v1100 = vsub.f32 %v1098, %v1099
    %v1101 = vand.u32 %v1100, 4294901760
    %1102 = vmatpush1.msra.mxu0 %v1101
    %1103 = vmatprep.subr.mxu0 0.0
    %v1104 = vand.u32 %v282, 4294901760
    %v1105 = vsub.f32 %v282, %v1104
    %v1106 = vand.u32 %v1105, 4294901760
    %v1107 = vsub.f32 %v1105, %v1106
    %v1108 = vand.u32 %v1107, 4294901760
    %1109 = vmatpush1.msra.mxu0 %v1108
    %1110 = vmatprep.subr.mxu0 0.0
    %v1111 = vand.u32 %v281, 4294901760
    %v1112 = vsub.f32 %v281, %v1111
    %v1113 = vand.u32 %v1112, 4294901760
    %v1114 = vsub.f32 %v1112, %v1113
    %v1115 = vand.u32 %v1114, 4294901760
    %1116 = vmatpush1.msra.mxu0 %v1115
    %1117 = vmatprep.subr.mxu0 0.0
    %v1118 = vand.u32 %v280, 4294901760
    %v1119 = vsub.f32 %v280, %v1118
    %v1120 = vand.u32 %v1119, 4294901760
    %v1121 = vsub.f32 %v1119, %v1120
    %v1122 = vand.u32 %v1121, 4294901760
    %1123 = vmatpush1.msra.mxu0 %v1122
    %1124 = vmatprep.subr.mxu0 0.0
    %v1125 = vand.u32 %v279, 4294901760
    %v1126 = vsub.f32 %v279, %v1125
    %v1127 = vand.u32 %v1126, 4294901760
    %v1128 = vsub.f32 %v1126, %v1127
    %v1129 = vand.u32 %v1128, 4294901760
    %1130 = vmatpush1.msra.mxu0 %v1129
    %1131 = vmatprep.subr.mxu0 0.0
    %v1132 = vand.u32 %v278, 4294901760
    %v1133 = vsub.f32 %v278, %v1132
    %v1134 = vand.u32 %v1133, 4294901760
    %v1135 = vsub.f32 %v1133, %v1134
    %v1136 = vand.u32 %v1135, 4294901760
    %1137 = vmatpush1.msra.mxu0 %v1136
    %1138 = vmatprep.subr.mxu0 0.0
    %v1139 = vand.u32 %v277, 4294901760
    %v1140 = vsub.f32 %v277, %v1139
    %v1141 = vand.u32 %v1140, 4294901760
    %v1142 = vsub.f32 %v1140, %v1141
    %v1143 = vand.u32 %v1142, 4294901760
    %1144 = vmatpush1.msra.mxu0 %v1143
    %1145 = vmatprep.subr.mxu0 0.0
    %v1146 = vand.u32 %v276, 4294901760
    %v1147 = vsub.f32 %v276, %v1146
    %v1148 = vand.u32 %v1147, 4294901760
    %v1149 = vsub.f32 %v1147, %v1148
    %v1150 = vand.u32 %v1149, 4294901760
    %1151 = vmatpush1.msra.mxu0 %v1150
    %1152 = vmatprep.subr.mxu0 0.0
    %1153 = vmatpush2.msra.mxu0 0.0
    %1154 = vmatprep.subr.mxu0 0.0
    %1155 = vmatpush2.msra.mxu0 0.0
    %1156 = vmatprep.subr.mxu0 0.0
    %1157 = vmatpush2.msra.mxu0 0.0
    %1158 = vmatprep.subr.mxu0 0.0
    %1159 = vmatpush2.msra.mxu0 0.0
    %1160 = vmatprep.subr.mxu0 0.0
    %1161 = vmatpush2.msra.mxu0 0.0
    %1162 = vmatprep.subr.mxu0 0.0
    %1163 = vmatpush2.msra.mxu0 0.0
    %1164 = vmatprep.subr.mxu0 0.0
    %1165 = vmatpush2.msra.mxu0 0.0
    %1166 = vmatprep.subr.mxu0 0.0
    %1167 = vmatpush2.msra.mxu0 0.0
    %1168 = vmatprep.subr.mxu0 0.0
    %1169 = vmatpush2.msra.mxu0 0.0
    %1170 = vmatprep.subr.mxu0 0.0
    %1171 = vmatpush2.msra.mxu0 0.0
    %1172 = vmatprep.subr.mxu0 0.0
    %1173 = vmatpush2.msra.mxu0 0.0
    %1174 = vmatprep.subr.mxu0 0.0
    %1175 = vmatpush2.msra.mxu0 0.0
    %1176 = vmatprep.subr.mxu0 0.0
    %1177 = vmatpush2.msra.mxu0 0.0
    %1178 = vmatprep.subr.mxu0 0.0
    %1179 = vmatpush2.msra.mxu0 0.0
    %1180 = vmatprep.subr.mxu0 0.0
    %1181 = vmatpush2.msra.mxu0 0.0
    %1182 = vmatprep.subr.mxu0 0.0
    %1183 = vmatpush2.msra.mxu0 0.0
    %1184 = vmatprep.mubr.f32.mxu0 0.0
    %v1185 = vand.u32 %v172, 4294901760
    %1186 = vmatmul.mubr.f32.gmra.mxu0 %v1185
    %v1187 = vpop.f32.mrf.mxu0
    %v1188 = vadd.f32 %v1037, %v1187
    %v1189 = vpop.f32.mrf.mxu0
    %1190 = vdwg.mxu0
    %1191 = vmatprep.subr.mxu0 0.0
    %v1192 = vand.u32 %v291, 4294901760
    %v1193 = vsub.f32 %v291, %v1192
    %1194 = vmatpush1.msra.mxu0 %v1193
    %1195 = vmatprep.subr.mxu0 0.0
    %v1196 = vand.u32 %v290, 4294901760
    %v1197 = vsub.f32 %v290, %v1196
    %1198 = vmatpush1.msra.mxu0 %v1197
    %1199 = vmatprep.subr.mxu0 0.0
    %v1200 = vand.u32 %v289, 4294901760
    %v1201 = vsub.f32 %v289, %v1200
    %1202 = vmatpush1.msra.mxu0 %v1201
    %1203 = vmatprep.subr.mxu0 0.0
    %v1204 = vand.u32 %v288, 4294901760
    %v1205 = vsub.f32 %v288, %v1204
    %1206 = vmatpush1.msra.mxu0 %v1205
    %1207 = vmatprep.subr.mxu0 0.0
    %v1208 = vand.u32 %v287, 4294901760
    %v1209 = vsub.f32 %v287, %v1208
    %1210 = vmatpush1.msra.mxu0 %v1209
    %1211 = vmatprep.subr.mxu0 0.0
    %v1212 = vand.u32 %v286, 4294901760
    %v1213 = vsub.f32 %v286, %v1212
    %1214 = vmatpush1.msra.mxu0 %v1213
    %1215 = vmatprep.subr.mxu0 0.0
    %v1216 = vand.u32 %v285, 4294901760
    %v1217 = vsub.f32 %v285, %v1216
    %1218 = vmatpush1.msra.mxu0 %v1217
    %1219 = vmatprep.subr.mxu0 0.0
    %v1220 = vand.u32 %v284, 4294901760
    %v1221 = vsub.f32 %v284, %v1220
    %1222 = vmatpush1.msra.mxu0 %v1221
    %1223 = vmatprep.subr.mxu0 0.0
    %v1224 = vand.u32 %v283, 4294901760
    %v1225 = vsub.f32 %v283, %v1224
    %1226 = vmatpush1.msra.mxu0 %v1225
    %1227 = vmatprep.subr.mxu0 0.0
    %v1228 = vand.u32 %v282, 4294901760
    %v1229 = vsub.f32 %v282, %v1228
    %1230 = vmatpush1.msra.mxu0 %v1229
    %1231 = vmatprep.subr.mxu0 0.0
    %v1232 = vand.u32 %v281, 4294901760
    %v1233 = vsub.f32 %v281, %v1232
    %1234 = vmatpush1.msra.mxu0 %v1233
    %1235 = vmatprep.subr.mxu0 0.0
    %v1236 = vand.u32 %v280, 4294901760
    %v1237 = vsub.f32 %v280, %v1236
    %1238 = vmatpush1.msra.mxu0 %v1237
    %1239 = vmatprep.subr.mxu0 0.0
    %v1240 = vand.u32 %v279, 4294901760
    %v1241 = vsub.f32 %v279, %v1240
    %1242 = vmatpush1.msra.mxu0 %v1241
    %1243 = vmatprep.subr.mxu0 0.0
    %v1244 = vand.u32 %v278, 4294901760
    %v1245 = vsub.f32 %v278, %v1244
    %1246 = vmatpush1.msra.mxu0 %v1245
    %1247 = vmatprep.subr.mxu0 0.0
    %v1248 = vand.u32 %v277, 4294901760
    %v1249 = vsub.f32 %v277, %v1248
    %1250 = vmatpush1.msra.mxu0 %v1249
    %1251 = vmatprep.subr.mxu0 0.0
    %v1252 = vand.u32 %v276, 4294901760
    %v1253 = vsub.f32 %v276, %v1252
    %1254 = vmatpush1.msra.mxu0 %v1253
    %1255 = vmatprep.subr.mxu0 0.0
    %1256 = vmatpush2.msra.mxu0 0.0
    %1257 = vmatprep.subr.mxu0 0.0
    %1258 = vmatpush2.msra.mxu0 0.0
    %1259 = vmatprep.subr.mxu0 0.0
    %1260 = vmatpush2.msra.mxu0 0.0
    %1261 = vmatprep.subr.mxu0 0.0
    %1262 = vmatpush2.msra.mxu0 0.0
    %1263 = vmatprep.subr.mxu0 0.0
    %1264 = vmatpush2.msra.mxu0 0.0
    %1265 = vmatprep.subr.mxu0 0.0
    %1266 = vmatpush2.msra.mxu0 0.0
    %1267 = vmatprep.subr.mxu0 0.0
    %1268 = vmatpush2.msra.mxu0 0.0
    %1269 = vmatprep.subr.mxu0 0.0
    %1270 = vmatpush2.msra.mxu0 0.0
    %1271 = vmatprep.subr.mxu0 0.0
    %1272 = vmatpush2.msra.mxu0 0.0
    %1273 = vmatprep.subr.mxu0 0.0
    %1274 = vmatpush2.msra.mxu0 0.0
    %1275 = vmatprep.subr.mxu0 0.0
    %1276 = vmatpush2.msra.mxu0 0.0
    %1277 = vmatprep.subr.mxu0 0.0
    %1278 = vmatpush2.msra.mxu0 0.0
    %1279 = vmatprep.subr.mxu0 0.0
    %1280 = vmatpush2.msra.mxu0 0.0
    %1281 = vmatprep.subr.mxu0 0.0
    %1282 = vmatpush2.msra.mxu0 0.0
    %1283 = vmatprep.subr.mxu0 0.0
    %1284 = vmatpush2.msra.mxu0 0.0
    %1285 = vmatprep.subr.mxu0 0.0
    %1286 = vmatpush2.msra.mxu0 0.0
    %1287 = vmatprep.mubr.f32.mxu0 0.0
    %v1288 = vand.u32 %v172, 4294901760
    %v1289 = vsub.f32 %v172, %v1288
    %1290 = vmatmul.mubr.f32.gmra.mxu0 %v1289
    %v1291 = vpop.f32.mrf.mxu0
    %v1292 = vadd.f32 %v1188, %v1291
    %v1293 = vpop.f32.mrf.mxu0
    %1294 = vdwg.mxu0
    %1295 = vmatprep.subr.mxu0 0.0
    %v1296 = vand.u32 %v291, 4294901760
    %1297 = vmatpush1.msra.mxu0 %v1296
    %1298 = vmatprep.subr.mxu0 0.0
    %v1299 = vand.u32 %v290, 4294901760
    %1300 = vmatpush1.msra.mxu0 %v1299
    %1301 = vmatprep.subr.mxu0 0.0
    %v1302 = vand.u32 %v289, 4294901760
    %1303 = vmatpush1.msra.mxu0 %v1302
    %1304 = vmatprep.subr.mxu0 0.0
    %v1305 = vand.u32 %v288, 4294901760
    %1306 = vmatpush1.msra.mxu0 %v1305
    %1307 = vmatprep.subr.mxu0 0.0
    %v1308 = vand.u32 %v287, 4294901760
    %1309 = vmatpush1.msra.mxu0 %v1308
    %1310 = vmatprep.subr.mxu0 0.0
    %v1311 = vand.u32 %v286, 4294901760
    %1312 = vmatpush1.msra.mxu0 %v1311
    %1313 = vmatprep.subr.mxu0 0.0
    %v1314 = vand.u32 %v285, 4294901760
    %1315 = vmatpush1.msra.mxu0 %v1314
    %1316 = vmatprep.subr.mxu0 0.0
    %v1317 = vand.u32 %v284, 4294901760
    %1318 = vmatpush1.msra.mxu0 %v1317
    %1319 = vmatprep.subr.mxu0 0.0
    %v1320 = vand.u32 %v283, 4294901760
    %1321 = vmatpush1.msra.mxu0 %v1320
    %1322 = vmatprep.subr.mxu0 0.0
    %v1323 = vand.u32 %v282, 4294901760
    %1324 = vmatpush1.msra.mxu0 %v1323
    %1325 = vmatprep.subr.mxu0 0.0
    %v1326 = vand.u32 %v281, 4294901760
    %1327 = vmatpush1.msra.mxu0 %v1326
    %1328 = vmatprep.subr.mxu0 0.0
    %v1329 = vand.u32 %v280, 4294901760
    %1330 = vmatpush1.msra.mxu0 %v1329
    %1331 = vmatprep.subr.mxu0 0.0
    %v1332 = vand.u32 %v279, 4294901760
    %1333 = vmatpush1.msra.mxu0 %v1332
    %1334 = vmatprep.subr.mxu0 0.0
    %v1335 = vand.u32 %v278, 4294901760
    %1336 = vmatpush1.msra.mxu0 %v1335
    %1337 = vmatprep.subr.mxu0 0.0
    %v1338 = vand.u32 %v277, 4294901760
    %1339 = vmatpush1.msra.mxu0 %v1338
    %1340 = vmatprep.subr.mxu0 0.0
    %v1341 = vand.u32 %v276, 4294901760
    %1342 = vmatpush1.msra.mxu0 %v1341
    %1343 = vmatprep.subr.mxu0 0.0
    %1344 = vmatpush2.msra.mxu0 0.0
    %1345 = vmatprep.subr.mxu0 0.0
    %1346 = vmatpush2.msra.mxu0 0.0
    %1347 = vmatprep.subr.mxu0 0.0
    %1348 = vmatpush2.msra.mxu0 0.0
    %1349 = vmatprep.subr.mxu0 0.0
    %1350 = vmatpush2.msra.mxu0 0.0
    %1351 = vmatprep.subr.mxu0 0.0
    %1352 = vmatpush2.msra.mxu0 0.0
    %1353 = vmatprep.subr.mxu0 0.0
    %1354 = vmatpush2.msra.mxu0 0.0
    %1355 = vmatprep.subr.mxu0 0.0
    %1356 = vmatpush2.msra.mxu0 0.0
    %1357 = vmatprep.subr.mxu0 0.0
    %1358 = vmatpush2.msra.mxu0 0.0
    %1359 = vmatprep.subr.mxu0 0.0
    %1360 = vmatpush2.msra.mxu0 0.0
    %1361 = vmatprep.subr.mxu0 0.0
    %1362 = vmatpush2.msra.mxu0 0.0
    %1363 = vmatprep.subr.mxu0 0.0
    %1364 = vmatpush2.msra.mxu0 0.0
    %1365 = vmatprep.subr.mxu0 0.0
    %1366 = vmatpush2.msra.mxu0 0.0
    %1367 = vmatprep.subr.mxu0 0.0
    %1368 = vmatpush2.msra.mxu0 0.0
    %1369 = vmatprep.subr.mxu0 0.0
    %1370 = vmatpush2.msra.mxu0 0.0
    %1371 = vmatprep.subr.mxu0 0.0
    %1372 = vmatpush2.msra.mxu0 0.0
    %1373 = vmatprep.subr.mxu0 0.0
    %1374 = vmatpush2.msra.mxu0 0.0
    %1375 = vmatprep.mubr.f32.mxu0 0.0
    %v1376 = vand.u32 %v172, 4294901760
    %v1377 = vsub.f32 %v172, %v1376
    %v1378 = vand.u32 %v1377, 4294901760
    %1379 = vmatmul.mubr.f32.gmra.mxu0 %v1378
    %v1380 = vpop.f32.mrf.mxu0
    %v1381 = vadd.f32 %v1292, %v1380
    %v1382 = vpop.f32.mrf.mxu0
    %1383 = vdwg.mxu0
    %1384 = vmatprep.subr.mxu0 0.0
    %v1385 = vand.u32 %v291, 4294901760
    %v1386 = vsub.f32 %v291, %v1385
    %v1387 = vand.u32 %v1386, 4294901760
    %1388 = vmatpush1.msra.mxu0 %v1387
    %1389 = vmatprep.subr.mxu0 0.0
    %v1390 = vand.u32 %v290, 4294901760
    %v1391 = vsub.f32 %v290, %v1390
    %v1392 = vand.u32 %v1391, 4294901760
    %1393 = vmatpush1.msra.mxu0 %v1392
    %1394 = vmatprep.subr.mxu0 0.0
    %v1395 = vand.u32 %v289, 4294901760
    %v1396 = vsub.f32 %v289, %v1395
    %v1397 = vand.u32 %v1396, 4294901760
    %1398 = vmatpush1.msra.mxu0 %v1397
    %1399 = vmatprep.subr.mxu0 0.0
    %v1400 = vand.u32 %v288, 4294901760
    %v1401 = vsub.f32 %v288, %v1400
    %v1402 = vand.u32 %v1401, 4294901760
    %1403 = vmatpush1.msra.mxu0 %v1402
    %1404 = vmatprep.subr.mxu0 0.0
    %v1405 = vand.u32 %v287, 4294901760
    %v1406 = vsub.f32 %v287, %v1405
    %v1407 = vand.u32 %v1406, 4294901760
    %1408 = vmatpush1.msra.mxu0 %v1407
    %1409 = vmatprep.subr.mxu0 0.0
    %v1410 = vand.u32 %v286, 4294901760
    %v1411 = vsub.f32 %v286, %v1410
    %v1412 = vand.u32 %v1411, 4294901760
    %1413 = vmatpush1.msra.mxu0 %v1412
    %1414 = vmatprep.subr.mxu0 0.0
    %v1415 = vand.u32 %v285, 4294901760
    %v1416 = vsub.f32 %v285, %v1415
    %v1417 = vand.u32 %v1416, 4294901760
    %1418 = vmatpush1.msra.mxu0 %v1417
    %1419 = vmatprep.subr.mxu0 0.0
    %v1420 = vand.u32 %v284, 4294901760
    %v1421 = vsub.f32 %v284, %v1420
    %v1422 = vand.u32 %v1421, 4294901760
    %1423 = vmatpush1.msra.mxu0 %v1422
    %1424 = vmatprep.subr.mxu0 0.0
    %v1425 = vand.u32 %v283, 4294901760
    %v1426 = vsub.f32 %v283, %v1425
    %v1427 = vand.u32 %v1426, 4294901760
    %1428 = vmatpush1.msra.mxu0 %v1427
    %1429 = vmatprep.subr.mxu0 0.0
    %v1430 = vand.u32 %v282, 4294901760
    %v1431 = vsub.f32 %v282, %v1430
    %v1432 = vand.u32 %v1431, 4294901760
    %1433 = vmatpush1.msra.mxu0 %v1432
    %1434 = vmatprep.subr.mxu0 0.0
    %v1435 = vand.u32 %v281, 4294901760
    %v1436 = vsub.f32 %v281, %v1435
    %v1437 = vand.u32 %v1436, 4294901760
    %1438 = vmatpush1.msra.mxu0 %v1437
    %1439 = vmatprep.subr.mxu0 0.0
    %v1440 = vand.u32 %v280, 4294901760
    %v1441 = vsub.f32 %v280, %v1440
    %v1442 = vand.u32 %v1441, 4294901760
    %1443 = vmatpush1.msra.mxu0 %v1442
    %1444 = vmatprep.subr.mxu0 0.0
    %v1445 = vand.u32 %v279, 4294901760
    %v1446 = vsub.f32 %v279, %v1445
    %v1447 = vand.u32 %v1446, 4294901760
    %1448 = vmatpush1.msra.mxu0 %v1447
    %1449 = vmatprep.subr.mxu0 0.0
    %v1450 = vand.u32 %v278, 4294901760
    %v1451 = vsub.f32 %v278, %v1450
    %v1452 = vand.u32 %v1451, 4294901760
    %1453 = vmatpush1.msra.mxu0 %v1452
    %1454 = vmatprep.subr.mxu0 0.0
    %v1455 = vand.u32 %v277, 4294901760
    %v1456 = vsub.f32 %v277, %v1455
    %v1457 = vand.u32 %v1456, 4294901760
    %1458 = vmatpush1.msra.mxu0 %v1457
    %1459 = vmatprep.subr.mxu0 0.0
    %v1460 = vand.u32 %v276, 4294901760
    %v1461 = vsub.f32 %v276, %v1460
    %v1462 = vand.u32 %v1461, 4294901760
    %1463 = vmatpush1.msra.mxu0 %v1462
    %1464 = vmatprep.subr.mxu0 0.0
    %1465 = vmatpush2.msra.mxu0 0.0
    %1466 = vmatprep.subr.mxu0 0.0
    %1467 = vmatpush2.msra.mxu0 0.0
    %1468 = vmatprep.subr.mxu0 0.0
    %1469 = vmatpush2.msra.mxu0 0.0
    %1470 = vmatprep.subr.mxu0 0.0
    %1471 = vmatpush2.msra.mxu0 0.0
    %1472 = vmatprep.subr.mxu0 0.0
    %1473 = vmatpush2.msra.mxu0 0.0
    %1474 = vmatprep.subr.mxu0 0.0
    %1475 = vmatpush2.msra.mxu0 0.0
    %1476 = vmatprep.subr.mxu0 0.0
    %1477 = vmatpush2.msra.mxu0 0.0
    %1478 = vmatprep.subr.mxu0 0.0
    %1479 = vmatpush2.msra.mxu0 0.0
    %1480 = vmatprep.subr.mxu0 0.0
    %1481 = vmatpush2.msra.mxu0 0.0
    %1482 = vmatprep.subr.mxu0 0.0
    %1483 = vmatpush2.msra.mxu0 0.0
    %1484 = vmatprep.subr.mxu0 0.0
    %1485 = vmatpush2.msra.mxu0 0.0
    %1486 = vmatprep.subr.mxu0 0.0
    %1487 = vmatpush2.msra.mxu0 0.0
    %1488 = vmatprep.subr.mxu0 0.0
    %1489 = vmatpush2.msra.mxu0 0.0
    %1490 = vmatprep.subr.mxu0 0.0
    %1491 = vmatpush2.msra.mxu0 0.0
    %1492 = vmatprep.subr.mxu0 0.0
    %1493 = vmatpush2.msra.mxu0 0.0
    %1494 = vmatprep.subr.mxu0 0.0
    %1495 = vmatpush2.msra.mxu0 0.0
    %1496 = vmatprep.mubr.f32.mxu0 0.0
    %v1497 = vand.u32 %v172, 4294901760
    %1498 = vmatmul.mubr.f32.gmra.mxu0 %v1497
    %v1499 = vpop.f32.mrf.mxu0
    %v1500 = vadd.f32 %v1381, %v1499
    %v1501 = vpop.f32.mrf.mxu0
    %1502 = vdwg.mxu0
    %1503 = vmatprep.subr.mxu0 0.0
    %v1504 = vand.u32 %v291, 4294901760
    %1505 = vmatpush1.msra.mxu0 %v1504
    %1506 = vmatprep.subr.mxu0 0.0
    %v1507 = vand.u32 %v290, 4294901760
    %1508 = vmatpush1.msra.mxu0 %v1507
    %1509 = vmatprep.subr.mxu0 0.0
    %v1510 = vand.u32 %v289, 4294901760
    %1511 = vmatpush1.msra.mxu0 %v1510
    %1512 = vmatprep.subr.mxu0 0.0
    %v1513 = vand.u32 %v288, 4294901760
    %1514 = vmatpush1.msra.mxu0 %v1513
    %1515 = vmatprep.subr.mxu0 0.0
    %v1516 = vand.u32 %v287, 4294901760
    %1517 = vmatpush1.msra.mxu0 %v1516
    %1518 = vmatprep.subr.mxu0 0.0
    %v1519 = vand.u32 %v286, 4294901760
    %1520 = vmatpush1.msra.mxu0 %v1519
    %1521 = vmatprep.subr.mxu0 0.0
    %v1522 = vand.u32 %v285, 4294901760
    %1523 = vmatpush1.msra.mxu0 %v1522
    %1524 = vmatprep.subr.mxu0 0.0
    %v1525 = vand.u32 %v284, 4294901760
    %1526 = vmatpush1.msra.mxu0 %v1525
    %1527 = vmatprep.subr.mxu0 0.0
    %v1528 = vand.u32 %v283, 4294901760
    %1529 = vmatpush1.msra.mxu0 %v1528
    %1530 = vmatprep.subr.mxu0 0.0
    %v1531 = vand.u32 %v282, 4294901760
    %1532 = vmatpush1.msra.mxu0 %v1531
    %1533 = vmatprep.subr.mxu0 0.0
    %v1534 = vand.u32 %v281, 4294901760
    %1535 = vmatpush1.msra.mxu0 %v1534
    %1536 = vmatprep.subr.mxu0 0.0
    %v1537 = vand.u32 %v280, 4294901760
    %1538 = vmatpush1.msra.mxu0 %v1537
    %1539 = vmatprep.subr.mxu0 0.0
    %v1540 = vand.u32 %v279, 4294901760
    %1541 = vmatpush1.msra.mxu0 %v1540
    %1542 = vmatprep.subr.mxu0 0.0
    %v1543 = vand.u32 %v278, 4294901760
    %1544 = vmatpush1.msra.mxu0 %v1543
    %1545 = vmatprep.subr.mxu0 0.0
    %v1546 = vand.u32 %v277, 4294901760
    %1547 = vmatpush1.msra.mxu0 %v1546
    %1548 = vmatprep.subr.mxu0 0.0
    %v1549 = vand.u32 %v276, 4294901760
    %1550 = vmatpush1.msra.mxu0 %v1549
    %1551 = vmatprep.subr.mxu0 0.0
    %1552 = vmatpush2.msra.mxu0 0.0
    %1553 = vmatprep.subr.mxu0 0.0
    %1554 = vmatpush2.msra.mxu0 0.0
    %1555 = vmatprep.subr.mxu0 0.0
    %1556 = vmatpush2.msra.mxu0 0.0
    %1557 = vmatprep.subr.mxu0 0.0
    %1558 = vmatpush2.msra.mxu0 0.0
    %1559 = vmatprep.subr.mxu0 0.0
    %1560 = vmatpush2.msra.mxu0 0.0
    %1561 = vmatprep.subr.mxu0 0.0
    %1562 = vmatpush2.msra.mxu0 0.0
    %1563 = vmatprep.subr.mxu0 0.0
    %1564 = vmatpush2.msra.mxu0 0.0
    %1565 = vmatprep.subr.mxu0 0.0
    %1566 = vmatpush2.msra.mxu0 0.0
    %1567 = vmatprep.subr.mxu0 0.0
    %1568 = vmatpush2.msra.mxu0 0.0
    %1569 = vmatprep.subr.mxu0 0.0
    %1570 = vmatpush2.msra.mxu0 0.0
    %1571 = vmatprep.subr.mxu0 0.0
    %1572 = vmatpush2.msra.mxu0 0.0
    %1573 = vmatprep.subr.mxu0 0.0
    %1574 = vmatpush2.msra.mxu0 0.0
    %1575 = vmatprep.subr.mxu0 0.0
    %1576 = vmatpush2.msra.mxu0 0.0
    %1577 = vmatprep.subr.mxu0 0.0
    %1578 = vmatpush2.msra.mxu0 0.0
    %1579 = vmatprep.subr.mxu0 0.0
    %1580 = vmatpush2.msra.mxu0 0.0
    %1581 = vmatprep.subr.mxu0 0.0
    %1582 = vmatpush2.msra.mxu0 0.0
    %1583 = vmatprep.mubr.f32.mxu0 0.0
    %v1584 = vand.u32 %v172, 4294901760
    %1585 = vmatmul.mubr.f32.gmra.mxu0 %v1584
    %v1586 = vpop.f32.mrf.mxu0
    %v1587 = vadd.f32 %v1500, %v1586
    %v1588 = vpop.f32.mrf.mxu0
    %1589 = vdwg.mxu0
    %v1590 = vlaneseq
    %v1591 = vshrl.u32 %v1590, 7
    %v1592 = vsub.s32 2, %v1591
    %v1593 = vrot.slane %v52, %v1592
    %v1594 = vadd.f32 %v1587, %v1593
    %v1595 = vmul.f32 %v1594, 0.5
    %v1596 = vmul.f32 %v1594, 0.70710677
    %v1597 = vand.u32 2147483647, %v1596
    %v1598 = vmul.f32 %v1597, 0.3275911
    %v1599 = vadd.f32 %v1598, 1.0
    %v1600 = vrcp.pop %v1599
    %v1601 = vmul.f32 1.0, %v1600
    %v1602 = vmul.f32 %v1601, 1.0614054
    %v1603 = vadd.f32 %v1602, -1.4531521
    %v1604 = vmul.f32 %v1603, %v1601
    %v1605 = vadd.f32 %v1604, 1.4214138
    %v1606 = vmul.f32 %v1605, %v1601
    %v1607 = vadd.f32 %v1606, -0.28449672
    %v1608 = vmul.f32 %v1607, %v1601
    %v1609 = vadd.f32 %v1608, 0.2548296
    %v1610 = vmul.f32 %v1609, %v1601
    %v1611 = vmul.f32 %v1597, %v1597
    %v1612 = vsub.f32 0.0, %v1611
    %v1613 = vmul.f32 %v1612, 1.442695
    %v1614 = vpow.pop %v1613
    %v1615 = vmul.f32 %v1610, %v1614
    %v1616 = vsub.f32 1.0, %v1615
    %vm1617 = vcmp.lt.f32.partialorder %v1596, 0.0
    %v1618 = vsub.f32 0.0, %v1616
    %v1619 = vsel %vm1617, %v1618, %v1616
    %v1620 = vadd.f32 %v1619, 1.0
    %v1621 = vmul.f32 %v1595, %v1620
    %v1622 = vld [vmem:[#allocation5] sm:$0xff]
    %v1623 = vld [vmem:[#allocation5 + $0x8] sm:$0xff]
    %v1624 = vld [vmem:[#allocation5 + $0x10] sm:$0xff]
    %v1625 = vld [vmem:[#allocation5 + $0x18] sm:$0xff]
    %v1626 = vld [vmem:[#allocation5 + $0x20] sm:$0xff]
    %v1627 = vld [vmem:[#allocation5 + $0x28] sm:$0xff]
    %v1628 = vld [vmem:[#allocation5 + $0x30] sm:$0xff]
    %v1629 = vld [vmem:[#allocation5 + $0x38] sm:$0xff]
    %v1630 = vld [vmem:[#allocation5 + $0x40] sm:$0xff]
    %v1631 = vld [vmem:[#allocation5 + $0x48] sm:$0xff]
    %v1632 = vld [vmem:[#allocation5 + $0x50] sm:$0xff]
    %v1633 = vld [vmem:[#allocation5 + $0x58] sm:$0xff]
    %v1634 = vld [vmem:[#allocation5 + $0x60] sm:$0xff]
    %v1635 = vld [vmem:[#allocation5 + $0x68] sm:$0xff]
    %v1636 = vld [vmem:[#allocation5 + $0x70] sm:$0xff]
    %v1637 = vld [vmem:[#allocation5 + $0x78] sm:$0xff]
    %v1638 = vlaneseq
    %v1639 = vshrl.u32 %v1638, 7
    %v1640 = vsub.s32 3, %v1639
    %v1641 = vrot.slane %v52, %v1640
    %1642 = vmatprep.subr.mxu0 0.0
    %v1643 = vand.u32 %v1637, 4294901760
    %1644 = vmatpush1.msra.mxu0 %v1643
    %1645 = vmatprep.subr.mxu0 0.0
    %v1646 = vand.u32 %v1636, 4294901760
    %1647 = vmatpush1.msra.mxu0 %v1646
    %1648 = vmatprep.subr.mxu0 0.0
    %v1649 = vand.u32 %v1635, 4294901760
    %1650 = vmatpush1.msra.mxu0 %v1649
    %1651 = vmatprep.subr.mxu0 0.0
    %v1652 = vand.u32 %v1634, 4294901760
    %1653 = vmatpush1.msra.mxu0 %v1652
    %1654 = vmatprep.subr.mxu0 0.0
    %v1655 = vand.u32 %v1633, 4294901760
    %1656 = vmatpush1.msra.mxu0 %v1655
    %1657 = vmatprep.subr.mxu0 0.0
    %v1658 = vand.u32 %v1632, 4294901760
    %1659 = vmatpush1.msra.mxu0 %v1658
    %1660 = vmatprep.subr.mxu0 0.0
    %v1661 = vand.u32 %v1631, 4294901760
    %1662 = vmatpush1.msra.mxu0 %v1661
    %1663 = vmatprep.subr.mxu0 0.0
    %v1664 = vand.u32 %v1630, 4294901760
    %1665 = vmatpush1.msra.mxu0 %v1664
    %1666 = vmatprep.subr.mxu0 0.0
    %v1667 = vand.u32 %v1629, 4294901760
    %1668 = vmatpush1.msra.mxu0 %v1667
    %1669 = vmatprep.subr.mxu0 0.0
    %v1670 = vand.u32 %v1628, 4294901760
    %1671 = vmatpush1.msra.mxu0 %v1670
    %1672 = vmatprep.subr.mxu0 0.0
    %v1673 = vand.u32 %v1627, 4294901760
    %1674 = vmatpush1.msra.mxu0 %v1673
    %1675 = vmatprep.subr.mxu0 0.0
    %v1676 = vand.u32 %v1626, 4294901760
    %1677 = vmatpush1.msra.mxu0 %v1676
    %1678 = vmatprep.subr.mxu0 0.0
    %v1679 = vand.u32 %v1625, 4294901760
    %1680 = vmatpush1.msra.mxu0 %v1679
    %1681 = vmatprep.subr.mxu0 0.0
    %v1682 = vand.u32 %v1624, 4294901760
    %1683 = vmatpush1.msra.mxu0 %v1682
    %1684 = vmatprep.subr.mxu0 0.0
    %v1685 = vand.u32 %v1623, 4294901760
    %1686 = vmatpush1.msra.mxu0 %v1685
    %1687 = vmatprep.subr.mxu0 0.0
    %v1688 = vand.u32 %v1622, 4294901760
    %1689 = vmatpush1.msra.mxu0 %v1688
    %1690 = vmatprep.subr.mxu0 0.0
    %1691 = vmatpush2.msra.mxu0 0.0
    %1692 = vmatprep.subr.mxu0 0.0
    %1693 = vmatpush2.msra.mxu0 0.0
    %1694 = vmatprep.subr.mxu0 0.0
    %1695 = vmatpush2.msra.mxu0 0.0
    %1696 = vmatprep.subr.mxu0 0.0
    %1697 = vmatpush2.msra.mxu0 0.0
    %1698 = vmatprep.subr.mxu0 0.0
    %1699 = vmatpush2.msra.mxu0 0.0
    %1700 = vmatprep.subr.mxu0 0.0
    %1701 = vmatpush2.msra.mxu0 0.0
    %1702 = vmatprep.subr.mxu0 0.0
    %1703 = vmatpush2.msra.mxu0 0.0
    %1704 = vmatprep.subr.mxu0 0.0
    %1705 = vmatpush2.msra.mxu0 0.0
    %1706 = vmatprep.subr.mxu0 0.0
    %1707 = vmatpush2.msra.mxu0 0.0
    %1708 = vmatprep.subr.mxu0 0.0
    %1709 = vmatpush2.msra.mxu0 0.0
    %1710 = vmatprep.subr.mxu0 0.0
    %1711 = vmatpush2.msra.mxu0 0.0
    %1712 = vmatprep.subr.mxu0 0.0
    %1713 = vmatpush2.msra.mxu0 0.0
    %1714 = vmatprep.subr.mxu0 0.0
    %1715 = vmatpush2.msra.mxu0 0.0
    %1716 = vmatprep.subr.mxu0 0.0
    %1717 = vmatpush2.msra.mxu0 0.0
    %1718 = vmatprep.subr.mxu0 0.0
    %1719 = vmatpush2.msra.mxu0 0.0
    %1720 = vmatprep.subr.mxu0 0.0
    %1721 = vmatpush2.msra.mxu0 0.0
    %1722 = vmatprep.mubr.f32.mxu0 0.0
    %v1723 = vand.u32 %v1621, 4294901760
    %v1724 = vsub.f32 %v1621, %v1723
    %v1725 = vand.u32 %v1724, 4294901760
    %v1726 = vsub.f32 %v1724, %v1725
    %v1727 = vand.u32 %v1726, 4294901760
    %1728 = vmatmul.mubr.f32.gmra.mxu0 %v1727
    %v1729 = vpop.f32.mrf.mxu0
    %v1730 = vadd.f32 %v1641, %v1729
    %v1731 = vpop.f32.mrf.mxu0
    %1732 = vdwg.mxu0
    %1733 = vmatprep.subr.mxu0 0.0
    %v1734 = vand.u32 %v1637, 4294901760
    %v1735 = vsub.f32 %v1637, %v1734
    %v1736 = vand.u32 %v1735, 4294901760
    %v1737 = vsub.f32 %v1735, %v1736
    %v1738 = vand.u32 %v1737, 4294901760
    %1739 = vmatpush1.msra.mxu0 %v1738
    %1740 = vmatprep.subr.mxu0 0.0
    %v1741 = vand.u32 %v1636, 4294901760
    %v1742 = vsub.f32 %v1636, %v1741
    %v1743 = vand.u32 %v1742, 4294901760
    %v1744 = vsub.f32 %v1742, %v1743
    %v1745 = vand.u32 %v1744, 4294901760
    %1746 = vmatpush1.msra.mxu0 %v1745
    %1747 = vmatprep.subr.mxu0 0.0
    %v1748 = vand.u32 %v1635, 4294901760
    %v1749 = vsub.f32 %v1635, %v1748
    %v1750 = vand.u32 %v1749, 4294901760
    %v1751 = vsub.f32 %v1749, %v1750
    %v1752 = vand.u32 %v1751, 4294901760
    %1753 = vmatpush1.msra.mxu0 %v1752
    %1754 = vmatprep.subr.mxu0 0.0
    %v1755 = vand.u32 %v1634, 4294901760
    %v1756 = vsub.f32 %v1634, %v1755
    %v1757 = vand.u32 %v1756, 4294901760
    %v1758 = vsub.f32 %v1756, %v1757
    %v1759 = vand.u32 %v1758, 4294901760
    %1760 = vmatpush1.msra.mxu0 %v1759
    %1761 = vmatprep.subr.mxu0 0.0
    %v1762 = vand.u32 %v1633, 4294901760
    %v1763 = vsub.f32 %v1633, %v1762
    %v1764 = vand.u32 %v1763, 4294901760
    %v1765 = vsub.f32 %v1763, %v1764
    %v1766 = vand.u32 %v1765, 4294901760
    %1767 = vmatpush1.msra.mxu0 %v1766
    %1768 = vmatprep.subr.mxu0 0.0
    %v1769 = vand.u32 %v1632, 4294901760
    %v1770 = vsub.f32 %v1632, %v1769
    %v1771 = vand.u32 %v1770, 4294901760
    %v1772 = vsub.f32 %v1770, %v1771
    %v1773 = vand.u32 %v1772, 4294901760
    %1774 = vmatpush1.msra.mxu0 %v1773
    %1775 = vmatprep.subr.mxu0 0.0
    %v1776 = vand.u32 %v1631, 4294901760
    %v1777 = vsub.f32 %v1631, %v1776
    %v1778 = vand.u32 %v1777, 4294901760
    %v1779 = vsub.f32 %v1777, %v1778
    %v1780 = vand.u32 %v1779, 4294901760
    %1781 = vmatpush1.msra.mxu0 %v1780
    %1782 = vmatprep.subr.mxu0 0.0
    %v1783 = vand.u32 %v1630, 4294901760
    %v1784 = vsub.f32 %v1630, %v1783
    %v1785 = vand.u32 %v1784, 4294901760
    %v1786 = vsub.f32 %v1784, %v1785
    %v1787 = vand.u32 %v1786, 4294901760
    %1788 = vmatpush1.msra.mxu0 %v1787
    %1789 = vmatprep.subr.mxu0 0.0
    %v1790 = vand.u32 %v1629, 4294901760
    %v1791 = vsub.f32 %v1629, %v1790
    %v1792 = vand.u32 %v1791, 4294901760
    %v1793 = vsub.f32 %v1791, %v1792
    %v1794 = vand.u32 %v1793, 4294901760
    %1795 = vmatpush1.msra.mxu0 %v1794
    %1796 = vmatprep.subr.mxu0 0.0
    %v1797 = vand.u32 %v1628, 4294901760
    %v1798 = vsub.f32 %v1628, %v1797
    %v1799 = vand.u32 %v1798, 4294901760
    %v1800 = vsub.f32 %v1798, %v1799
    %v1801 = vand.u32 %v1800, 4294901760
    %1802 = vmatpush1.msra.mxu0 %v1801
    %1803 = vmatprep.subr.mxu0 0.0
    %v1804 = vand.u32 %v1627, 4294901760
    %v1805 = vsub.f32 %v1627, %v1804
    %v1806 = vand.u32 %v1805, 4294901760
    %v1807 = vsub.f32 %v1805, %v1806
    %v1808 = vand.u32 %v1807, 4294901760
    %1809 = vmatpush1.msra.mxu0 %v1808
    %1810 = vmatprep.subr.mxu0 0.0
    %v1811 = vand.u32 %v1626, 4294901760
    %v1812 = vsub.f32 %v1626, %v1811
    %v1813 = vand.u32 %v1812, 4294901760
    %v1814 = vsub.f32 %v1812, %v1813
    %v1815 = vand.u32 %v1814, 4294901760
    %1816 = vmatpush1.msra.mxu0 %v1815
    %1817 = vmatprep.subr.mxu0 0.0
    %v1818 = vand.u32 %v1625, 4294901760
    %v1819 = vsub.f32 %v1625, %v1818
    %v1820 = vand.u32 %v1819, 4294901760
    %v1821 = vsub.f32 %v1819, %v1820
    %v1822 = vand.u32 %v1821, 4294901760
    %1823 = vmatpush1.msra.mxu0 %v1822
    %1824 = vmatprep.subr.mxu0 0.0
    %v1825 = vand.u32 %v1624, 4294901760
    %v1826 = vsub.f32 %v1624, %v1825
    %v1827 = vand.u32 %v1826, 4294901760
    %v1828 = vsub.f32 %v1826, %v1827
    %v1829 = vand.u32 %v1828, 4294901760
    %1830 = vmatpush1.msra.mxu0 %v1829
    %1831 = vmatprep.subr.mxu0 0.0
    %v1832 = vand.u32 %v1623, 4294901760
    %v1833 = vsub.f32 %v1623, %v1832
    %v1834 = vand.u32 %v1833, 4294901760
    %v1835 = vsub.f32 %v1833, %v1834
    %v1836 = vand.u32 %v1835, 4294901760
    %1837 = vmatpush1.msra.mxu0 %v1836
    %1838 = vmatprep.subr.mxu0 0.0
    %v1839 = vand.u32 %v1622, 4294901760
    %v1840 = vsub.f32 %v1622, %v1839
    %v1841 = vand.u32 %v1840, 4294901760
    %v1842 = vsub.f32 %v1840, %v1841
    %v1843 = vand.u32 %v1842, 4294901760
    %1844 = vmatpush1.msra.mxu0 %v1843
    %1845 = vmatprep.subr.mxu0 0.0
    %1846 = vmatpush2.msra.mxu0 0.0
    %1847 = vmatprep.subr.mxu0 0.0
    %1848 = vmatpush2.msra.mxu0 0.0
    %1849 = vmatprep.subr.mxu0 0.0
    %1850 = vmatpush2.msra.mxu0 0.0
    %1851 = vmatprep.subr.mxu0 0.0
    %1852 = vmatpush2.msra.mxu0 0.0
    %1853 = vmatprep.subr.mxu0 0.0
    %1854 = vmatpush2.msra.mxu0 0.0
    %1855 = vmatprep.subr.mxu0 0.0
    %1856 = vmatpush2.msra.mxu0 0.0
    %1857 = vmatprep.subr.mxu0 0.0
    %1858 = vmatpush2.msra.mxu0 0.0
    %1859 = vmatprep.subr.mxu0 0.0
    %1860 = vmatpush2.msra.mxu0 0.0
    %1861 = vmatprep.subr.mxu0 0.0
    %1862 = vmatpush2.msra.mxu0 0.0
    %1863 = vmatprep.subr.mxu0 0.0
    %1864 = vmatpush2.msra.mxu0 0.0
    %1865 = vmatprep.subr.mxu0 0.0
    %1866 = vmatpush2.msra.mxu0 0.0
    %1867 = vmatprep.subr.mxu0 0.0
    %1868 = vmatpush2.msra.mxu0 0.0
    %1869 = vmatprep.subr.mxu0 0.0
    %1870 = vmatpush2.msra.mxu0 0.0
    %1871 = vmatprep.subr.mxu0 0.0
    %1872 = vmatpush2.msra.mxu0 0.0
    %1873 = vmatprep.subr.mxu0 0.0
    %1874 = vmatpush2.msra.mxu0 0.0
    %1875 = vmatprep.subr.mxu0 0.0
    %1876 = vmatpush2.msra.mxu0 0.0
    %1877 = vmatprep.mubr.f32.mxu0 0.0
    %v1878 = vand.u32 %v1621, 4294901760
    %1879 = vmatmul.mubr.f32.gmra.mxu0 %v1878
    %v1880 = vpop.f32.mrf.mxu0
    %v1881 = vadd.f32 %v1730, %v1880
    %v1882 = vpop.f32.mrf.mxu0
    %1883 = vdwg.mxu0
    %1884 = vmatprep.subr.mxu0 0.0
    %v1885 = vand.u32 %v1637, 4294901760
    %v1886 = vsub.f32 %v1637, %v1885
    %1887 = vmatpush1.msra.mxu0 %v1886
    %1888 = vmatprep.subr.mxu0 0.0
    %v1889 = vand.u32 %v1636, 4294901760
    %v1890 = vsub.f32 %v1636, %v1889
    %1891 = vmatpush1.msra.mxu0 %v1890
    %1892 = vmatprep.subr.mxu0 0.0
    %v1893 = vand.u32 %v1635, 4294901760
    %v1894 = vsub.f32 %v1635, %v1893
    %1895 = vmatpush1.msra.mxu0 %v1894
    %1896 = vmatprep.subr.mxu0 0.0
    %v1897 = vand.u32 %v1634, 4294901760
    %v1898 = vsub.f32 %v1634, %v1897
    %1899 = vmatpush1.msra.mxu0 %v1898
    %1900 = vmatprep.subr.mxu0 0.0
    %v1901 = vand.u32 %v1633, 4294901760
    %v1902 = vsub.f32 %v1633, %v1901
    %1903 = vmatpush1.msra.mxu0 %v1902
    %1904 = vmatprep.subr.mxu0 0.0
    %v1905 = vand.u32 %v1632, 4294901760
    %v1906 = vsub.f32 %v1632, %v1905
    %1907 = vmatpush1.msra.mxu0 %v1906
    %1908 = vmatprep.subr.mxu0 0.0
    %v1909 = vand.u32 %v1631, 4294901760
    %v1910 = vsub.f32 %v1631, %v1909
    %1911 = vmatpush1.msra.mxu0 %v1910
    %1912 = vmatprep.subr.mxu0 0.0
    %v1913 = vand.u32 %v1630, 4294901760
    %v1914 = vsub.f32 %v1630, %v1913
    %1915 = vmatpush1.msra.mxu0 %v1914
    %1916 = vmatprep.subr.mxu0 0.0
    %v1917 = vand.u32 %v1629, 4294901760
    %v1918 = vsub.f32 %v1629, %v1917
    %1919 = vmatpush1.msra.mxu0 %v1918
    %1920 = vmatprep.subr.mxu0 0.0
    %v1921 = vand.u32 %v1628, 4294901760
    %v1922 = vsub.f32 %v1628, %v1921
    %1923 = vmatpush1.msra.mxu0 %v1922
    %1924 = vmatprep.subr.mxu0 0.0
    %v1925 = vand.u32 %v1627, 4294901760
    %v1926 = vsub.f32 %v1627, %v1925
    %1927 = vmatpush1.msra.mxu0 %v1926
    %1928 = vmatprep.subr.mxu0 0.0
    %v1929 = vand.u32 %v1626, 4294901760
    %v1930 = vsub.f32 %v1626, %v1929
    %1931 = vmatpush1.msra.mxu0 %v1930
    %1932 = vmatprep.subr.mxu0 0.0
    %v1933 = vand.u32 %v1625, 4294901760
    %v1934 = vsub.f32 %v1625, %v1933
    %1935 = vmatpush1.msra.mxu0 %v1934
    %1936 = vmatprep.subr.mxu0 0.0
    %v1937 = vand.u32 %v1624, 4294901760
    %v1938 = vsub.f32 %v1624, %v1937
    %1939 = vmatpush1.msra.mxu0 %v1938
    %1940 = vmatprep.subr.mxu0 0.0
    %v1941 = vand.u32 %v1623, 4294901760
    %v1942 = vsub.f32 %v1623, %v1941
    %1943 = vmatpush1.msra.mxu0 %v1942
    %1944 = vmatprep.subr.mxu0 0.0
    %v1945 = vand.u32 %v1622, 4294901760
    %v1946 = vsub.f32 %v1622, %v1945
    %1947 = vmatpush1.msra.mxu0 %v1946
    %1948 = vmatprep.subr.mxu0 0.0
    %1949 = vmatpush2.msra.mxu0 0.0
    %1950 = vmatprep.subr.mxu0 0.0
    %1951 = vmatpush2.msra.mxu0 0.0
    %1952 = vmatprep.subr.mxu0 0.0
    %1953 = vmatpush2.msra.mxu0 0.0
    %1954 = vmatprep.subr.mxu0 0.0
    %1955 = vmatpush2.msra.mxu0 0.0
    %1956 = vmatprep.subr.mxu0 0.0
    %1957 = vmatpush2.msra.mxu0 0.0
    %1958 = vmatprep.subr.mxu0 0.0
    %1959 = vmatpush2.msra.mxu0 0.0
    %1960 = vmatprep.subr.mxu0 0.0
    %1961 = vmatpush2.msra.mxu0 0.0
    %1962 = vmatprep.subr.mxu0 0.0
    %1963 = vmatpush2.msra.mxu0 0.0
    %1964 = vmatprep.subr.mxu0 0.0
    %1965 = vmatpush2.msra.mxu0 0.0
    %1966 = vmatprep.subr.mxu0 0.0
    %1967 = vmatpush2.msra.mxu0 0.0
    %1968 = vmatprep.subr.mxu0 0.0
    %1969 = vmatpush2.msra.mxu0 0.0
    %1970 = vmatprep.subr.mxu0 0.0
    %1971 = vmatpush2.msra.mxu0 0.0
    %1972 = vmatprep.subr.mxu0 0.0
    %1973 = vmatpush2.msra.mxu0 0.0
    %1974 = vmatprep.subr.mxu0 0.0
    %1975 = vmatpush2.msra.mxu0 0.0
    %1976 = vmatprep.subr.mxu0 0.0
    %1977 = vmatpush2.msra.mxu0 0.0
    %1978 = vmatprep.subr.mxu0 0.0
    %1979 = vmatpush2.msra.mxu0 0.0
    %1980 = vmatprep.mubr.f32.mxu0 0.0
    %v1981 = vand.u32 %v1621, 4294901760
    %v1982 = vsub.f32 %v1621, %v1981
    %1983 = vmatmul.mubr.f32.gmra.mxu0 %v1982
    %v1984 = vpop.f32.mrf.mxu0
    %v1985 = vadd.f32 %v1881, %v1984
    %v1986 = vpop.f32.mrf.mxu0
    %1987 = vdwg.mxu0
    %1988 = vmatprep.subr.mxu0 0.0
    %v1989 = vand.u32 %v1637, 4294901760
    %1990 = vmatpush1.msra.mxu0 %v1989
    %1991 = vmatprep.subr.mxu0 0.0
    %v1992 = vand.u32 %v1636, 4294901760
    %1993 = vmatpush1.msra.mxu0 %v1992
    %1994 = vmatprep.subr.mxu0 0.0
    %v1995 = vand.u32 %v1635, 4294901760
    %1996 = vmatpush1.msra.mxu0 %v1995
    %1997 = vmatprep.subr.mxu0 0.0
    %v1998 = vand.u32 %v1634, 4294901760
    %1999 = vmatpush1.msra.mxu0 %v1998
    %2000 = vmatprep.subr.mxu0 0.0
    %v2001 = vand.u32 %v1633, 4294901760
    %2002 = vmatpush1.msra.mxu0 %v2001
    %2003 = vmatprep.subr.mxu0 0.0
    %v2004 = vand.u32 %v1632, 4294901760
    %2005 = vmatpush1.msra.mxu0 %v2004
    %2006 = vmatprep.subr.mxu0 0.0
    %v2007 = vand.u32 %v1631, 4294901760
    %2008 = vmatpush1.msra.mxu0 %v2007
    %2009 = vmatprep.subr.mxu0 0.0
    %v2010 = vand.u32 %v1630, 4294901760
    %2011 = vmatpush1.msra.mxu0 %v2010
    %2012 = vmatprep.subr.mxu0 0.0
    %v2013 = vand.u32 %v1629, 4294901760
    %2014 = vmatpush1.msra.mxu0 %v2013
    %2015 = vmatprep.subr.mxu0 0.0
    %v2016 = vand.u32 %v1628, 4294901760
    %2017 = vmatpush1.msra.mxu0 %v2016
    %2018 = vmatprep.subr.mxu0 0.0
    %v2019 = vand.u32 %v1627, 4294901760
    %2020 = vmatpush1.msra.mxu0 %v2019
    %2021 = vmatprep.subr.mxu0 0.0
    %v2022 = vand.u32 %v1626, 4294901760
    %2023 = vmatpush1.msra.mxu0 %v2022
    %2024 = vmatprep.subr.mxu0 0.0
    %v2025 = vand.u32 %v1625, 4294901760
    %2026 = vmatpush1.msra.mxu0 %v2025
    %2027 = vmatprep.subr.mxu0 0.0
    %v2028 = vand.u32 %v1624, 4294901760
    %2029 = vmatpush1.msra.mxu0 %v2028
    %2030 = vmatprep.subr.mxu0 0.0
    %v2031 = vand.u32 %v1623, 4294901760
    %2032 = vmatpush1.msra.mxu0 %v2031
    %2033 = vmatprep.subr.mxu0 0.0
    %v2034 = vand.u32 %v1622, 4294901760
    %2035 = vmatpush1.msra.mxu0 %v2034
    %2036 = vmatprep.subr.mxu0 0.0
    %2037 = vmatpush2.msra.mxu0 0.0
    %2038 = vmatprep.subr.mxu0 0.0
    %2039 = vmatpush2.msra.mxu0 0.0
    %2040 = vmatprep.subr.mxu0 0.0
    %2041 = vmatpush2.msra.mxu0 0.0
    %2042 = vmatprep.subr.mxu0 0.0
    %2043 = vmatpush2.msra.mxu0 0.0
    %2044 = vmatprep.subr.mxu0 0.0
    %2045 = vmatpush2.msra.mxu0 0.0
    %2046 = vmatprep.subr.mxu0 0.0
    %2047 = vmatpush2.msra.mxu0 0.0
    %2048 = vmatprep.subr.mxu0 0.0
    %2049 = vmatpush2.msra.mxu0 0.0
    %2050 = vmatprep.subr.mxu0 0.0
    %2051 = vmatpush2.msra.mxu0 0.0
    %2052 = vmatprep.subr.mxu0 0.0
    %2053 = vmatpush2.msra.mxu0 0.0
    %2054 = vmatprep.subr.mxu0 0.0
    %2055 = vmatpush2.msra.mxu0 0.0
    %2056 = vmatprep.subr.mxu0 0.0
    %2057 = vmatpush2.msra.mxu0 0.0
    %2058 = vmatprep.subr.mxu0 0.0
    %2059 = vmatpush2.msra.mxu0 0.0
    %2060 = vmatprep.subr.mxu0 0.0
    %2061 = vmatpush2.msra.mxu0 0.0
    %2062 = vmatprep.subr.mxu0 0.0
    %2063 = vmatpush2.msra.mxu0 0.0
    %2064 = vmatprep.subr.mxu0 0.0
    %2065 = vmatpush2.msra.mxu0 0.0
    %2066 = vmatprep.subr.mxu0 0.0
    %2067 = vmatpush2.msra.mxu0 0.0
    %2068 = vmatprep.mubr.f32.mxu0 0.0
    %v2069 = vand.u32 %v1621, 4294901760
    %v2070 = vsub.f32 %v1621, %v2069
    %v2071 = vand.u32 %v2070, 4294901760
    %2072 = vmatmul.mubr.f32.gmra.mxu0 %v2071
    %v2073 = vpop.f32.mrf.mxu0
    %v2074 = vadd.f32 %v1985, %v2073
    %v2075 = vpop.f32.mrf.mxu0
    %2076 = vdwg.mxu0
    %2077 = vmatprep.subr.mxu0 0.0
    %v2078 = vand.u32 %v1637, 4294901760
    %v2079 = vsub.f32 %v1637, %v2078
    %v2080 = vand.u32 %v2079, 4294901760
    %2081 = vmatpush1.msra.mxu0 %v2080
    %2082 = vmatprep.subr.mxu0 0.0
    %v2083 = vand.u32 %v1636, 4294901760
    %v2084 = vsub.f32 %v1636, %v2083
    %v2085 = vand.u32 %v2084, 4294901760
    %2086 = vmatpush1.msra.mxu0 %v2085
    %2087 = vmatprep.subr.mxu0 0.0
    %v2088 = vand.u32 %v1635, 4294901760
    %v2089 = vsub.f32 %v1635, %v2088
    %v2090 = vand.u32 %v2089, 4294901760
    %2091 = vmatpush1.msra.mxu0 %v2090
    %2092 = vmatprep.subr.mxu0 0.0
    %v2093 = vand.u32 %v1634, 4294901760
    %v2094 = vsub.f32 %v1634, %v2093
    %v2095 = vand.u32 %v2094, 4294901760
    %2096 = vmatpush1.msra.mxu0 %v2095
    %2097 = vmatprep.subr.mxu0 0.0
    %v2098 = vand.u32 %v1633, 4294901760
    %v2099 = vsub.f32 %v1633, %v2098
    %v2100 = vand.u32 %v2099, 4294901760
    %2101 = vmatpush1.msra.mxu0 %v2100
    %2102 = vmatprep.subr.mxu0 0.0
    %v2103 = vand.u32 %v1632, 4294901760
    %v2104 = vsub.f32 %v1632, %v2103
    %v2105 = vand.u32 %v2104, 4294901760
    %2106 = vmatpush1.msra.mxu0 %v2105
    %2107 = vmatprep.subr.mxu0 0.0
    %v2108 = vand.u32 %v1631, 4294901760
    %v2109 = vsub.f32 %v1631, %v2108
    %v2110 = vand.u32 %v2109, 4294901760
    %2111 = vmatpush1.msra.mxu0 %v2110
    %2112 = vmatprep.subr.mxu0 0.0
    %v2113 = vand.u32 %v1630, 4294901760
    %v2114 = vsub.f32 %v1630, %v2113
    %v2115 = vand.u32 %v2114, 4294901760
    %2116 = vmatpush1.msra.mxu0 %v2115
    %2117 = vmatprep.subr.mxu0 0.0
    %v2118 = vand.u32 %v1629, 4294901760
    %v2119 = vsub.f32 %v1629, %v2118
    %v2120 = vand.u32 %v2119, 4294901760
    %2121 = vmatpush1.msra.mxu0 %v2120
    %2122 = vmatprep.subr.mxu0 0.0
    %v2123 = vand.u32 %v1628, 4294901760
    %v2124 = vsub.f32 %v1628, %v2123
    %v2125 = vand.u32 %v2124, 4294901760
    %2126 = vmatpush1.msra.mxu0 %v2125
    %2127 = vmatprep.subr.mxu0 0.0
    %v2128 = vand.u32 %v1627, 4294901760
    %v2129 = vsub.f32 %v1627, %v2128
    %v2130 = vand.u32 %v2129, 4294901760
    %2131 = vmatpush1.msra.mxu0 %v2130
    %2132 = vmatprep.subr.mxu0 0.0
    %v2133 = vand.u32 %v1626, 4294901760
    %v2134 = vsub.f32 %v1626, %v2133
    %v2135 = vand.u32 %v2134, 4294901760
    %2136 = vmatpush1.msra.mxu0 %v2135
    %2137 = vmatprep.subr.mxu0 0.0
    %v2138 = vand.u32 %v1625, 4294901760
    %v2139 = vsub.f32 %v1625, %v2138
    %v2140 = vand.u32 %v2139, 4294901760
    %2141 = vmatpush1.msra.mxu0 %v2140
    %2142 = vmatprep.subr.mxu0 0.0
    %v2143 = vand.u32 %v1624, 4294901760
    %v2144 = vsub.f32 %v1624, %v2143
    %v2145 = vand.u32 %v2144, 4294901760
    %2146 = vmatpush1.msra.mxu0 %v2145
    %2147 = vmatprep.subr.mxu0 0.0
    %v2148 = vand.u32 %v1623, 4294901760
    %v2149 = vsub.f32 %v1623, %v2148
    %v2150 = vand.u32 %v2149, 4294901760
    %2151 = vmatpush1.msra.mxu0 %v2150
    %2152 = vmatprep.subr.mxu0 0.0
    %v2153 = vand.u32 %v1622, 4294901760
    %v2154 = vsub.f32 %v1622, %v2153
    %v2155 = vand.u32 %v2154, 4294901760
    %2156 = vmatpush1.msra.mxu0 %v2155
    %2157 = vmatprep.subr.mxu0 0.0
    %2158 = vmatpush2.msra.mxu0 0.0
    %2159 = vmatprep.subr.mxu0 0.0
    %2160 = vmatpush2.msra.mxu0 0.0
    %2161 = vmatprep.subr.mxu0 0.0
    %2162 = vmatpush2.msra.mxu0 0.0
    %2163 = vmatprep.subr.mxu0 0.0
    %2164 = vmatpush2.msra.mxu0 0.0
    %2165 = vmatprep.subr.mxu0 0.0
    %2166 = vmatpush2.msra.mxu0 0.0
    %2167 = vmatprep.subr.mxu0 0.0
    %2168 = vmatpush2.msra.mxu0 0.0
    %2169 = vmatprep.subr.mxu0 0.0
    %2170 = vmatpush2.msra.mxu0 0.0
    %2171 = vmatprep.subr.mxu0 0.0
    %2172 = vmatpush2.msra.mxu0 0.0
    %2173 = vmatprep.subr.mxu0 0.0
    %2174 = vmatpush2.msra.mxu0 0.0
    %2175 = vmatprep.subr.mxu0 0.0
    %2176 = vmatpush2.msra.mxu0 0.0
    %2177 = vmatprep.subr.mxu0 0.0
    %2178 = vmatpush2.msra.mxu0 0.0
    %2179 = vmatprep.subr.mxu0 0.0
    %2180 = vmatpush2.msra.mxu0 0.0
    %2181 = vmatprep.subr.mxu0 0.0
    %2182 = vmatpush2.msra.mxu0 0.0
    %2183 = vmatprep.subr.mxu0 0.0
    %2184 = vmatpush2.msra.mxu0 0.0
    %2185 = vmatprep.subr.mxu0 0.0
    %2186 = vmatpush2.msra.mxu0 0.0
    %2187 = vmatprep.subr.mxu0 0.0
    %2188 = vmatpush2.msra.mxu0 0.0
    %2189 = vmatprep.mubr.f32.mxu0 0.0
    %v2190 = vand.u32 %v1621, 4294901760
    %2191 = vmatmul.mubr.f32.gmra.mxu0 %v2190
    %v2192 = vpop.f32.mrf.mxu0
    %v2193 = vadd.f32 %v2074, %v2192
    %v2194 = vpop.f32.mrf.mxu0
    %2195 = vdwg.mxu0
    %2196 = vmatprep.subr.mxu0 0.0
    %v2197 = vand.u32 %v1637, 4294901760
    %2198 = vmatpush1.msra.mxu0 %v2197
    %2199 = vmatprep.subr.mxu0 0.0
    %v2200 = vand.u32 %v1636, 4294901760
    %2201 = vmatpush1.msra.mxu0 %v2200
    %2202 = vmatprep.subr.mxu0 0.0
    %v2203 = vand.u32 %v1635, 4294901760
    %2204 = vmatpush1.msra.mxu0 %v2203
    %2205 = vmatprep.subr.mxu0 0.0
    %v2206 = vand.u32 %v1634, 4294901760
    %2207 = vmatpush1.msra.mxu0 %v2206
    %2208 = vmatprep.subr.mxu0 0.0
    %v2209 = vand.u32 %v1633, 4294901760
    %2210 = vmatpush1.msra.mxu0 %v2209
    %2211 = vmatprep.subr.mxu0 0.0
    %v2212 = vand.u32 %v1632, 4294901760
    %2213 = vmatpush1.msra.mxu0 %v2212
    %2214 = vmatprep.subr.mxu0 0.0
    %v2215 = vand.u32 %v1631, 4294901760
    %2216 = vmatpush1.msra.mxu0 %v2215
    %2217 = vmatprep.subr.mxu0 0.0
    %v2218 = vand.u32 %v1630, 4294901760
    %2219 = vmatpush1.msra.mxu0 %v2218
    %2220 = vmatprep.subr.mxu0 0.0
    %v2221 = vand.u32 %v1629, 4294901760
    %2222 = vmatpush1.msra.mxu0 %v2221
    %2223 = vmatprep.subr.mxu0 0.0
    %v2224 = vand.u32 %v1628, 4294901760
    %2225 = vmatpush1.msra.mxu0 %v2224
    %2226 = vmatprep.subr.mxu0 0.0
    %v2227 = vand.u32 %v1627, 4294901760
    %2228 = vmatpush1.msra.mxu0 %v2227
    %2229 = vmatprep.subr.mxu0 0.0
    %v2230 = vand.u32 %v1626, 4294901760
    %2231 = vmatpush1.msra.mxu0 %v2230
    %2232 = vmatprep.subr.mxu0 0.0
    %v2233 = vand.u32 %v1625, 4294901760
    %2234 = vmatpush1.msra.mxu0 %v2233
    %2235 = vmatprep.subr.mxu0 0.0
    %v2236 = vand.u32 %v1624, 4294901760
    %2237 = vmatpush1.msra.mxu0 %v2236
    %2238 = vmatprep.subr.mxu0 0.0
    %v2239 = vand.u32 %v1623, 4294901760
    %2240 = vmatpush1.msra.mxu0 %v2239
    %2241 = vmatprep.subr.mxu0 0.0
    %v2242 = vand.u32 %v1622, 4294901760
    %2243 = vmatpush1.msra.mxu0 %v2242
    %2244 = vmatprep.subr.mxu0 0.0
    %2245 = vmatpush2.msra.mxu0 0.0
    %2246 = vmatprep.subr.mxu0 0.0
    %2247 = vmatpush2.msra.mxu0 0.0
    %2248 = vmatprep.subr.mxu0 0.0
    %2249 = vmatpush2.msra.mxu0 0.0
    %2250 = vmatprep.subr.mxu0 0.0
    %2251 = vmatpush2.msra.mxu0 0.0
    %2252 = vmatprep.subr.mxu0 0.0
    %2253 = vmatpush2.msra.mxu0 0.0
    %2254 = vmatprep.subr.mxu0 0.0
    %2255 = vmatpush2.msra.mxu0 0.0
    %2256 = vmatprep.subr.mxu0 0.0
    %2257 = vmatpush2.msra.mxu0 0.0
    %2258 = vmatprep.subr.mxu0 0.0
    %2259 = vmatpush2.msra.mxu0 0.0
    %2260 = vmatprep.subr.mxu0 0.0
    %2261 = vmatpush2.msra.mxu0 0.0
    %2262 = vmatprep.subr.mxu0 0.0
    %2263 = vmatpush2.msra.mxu0 0.0
    %2264 = vmatprep.subr.mxu0 0.0
    %2265 = vmatpush2.msra.mxu0 0.0
    %2266 = vmatprep.subr.mxu0 0.0
    %2267 = vmatpush2.msra.mxu0 0.0
    %2268 = vmatprep.subr.mxu0 0.0
    %2269 = vmatpush2.msra.mxu0 0.0
    %2270 = vmatprep.subr.mxu0 0.0
    %2271 = vmatpush2.msra.mxu0 0.0
    %2272 = vmatprep.subr.mxu0 0.0
    %2273 = vmatpush2.msra.mxu0 0.0
    %2274 = vmatprep.subr.mxu0 0.0
    %2275 = vmatpush2.msra.mxu0 0.0
    %2276 = vmatprep.mubr.f32.mxu0 0.0
    %v2277 = vand.u32 %v1621, 4294901760
    %2278 = vmatmul.mubr.f32.gmra.mxu0 %v2277
    %v2279 = vpop.f32.mrf.mxu0
    %v2280 = vadd.f32 %v2193, %v2279
    %v2281 = vpop.f32.mrf.mxu0
    %2282 = vdwg.mxu0
    %2283 = vset.pattern.permute.xlu0 1
    %2284 = vperm.xlu0 %2283, %v53
    %v2285 = vpop.permute.xlu0 %2284
    %v2287 = vlaneseq
    %v2288 = vshrl.u32 %v2287, 7
    %v2289 = vsub.s32 6, %v2288
    %v2290 = vrot.slane %v52, %v2289
    %v2291 = vmul.f32 %v2285, %v2290
    %2292 = vset.pattern.permute.xlu0 2
    %2293 = vperm.xlu0 %2292, %v53
    %v2294 = vpop.permute.xlu0 %2293
    %v2296 = vlaneseq
    %v2297 = vshrl.u32 %v2296, 7
    %v2298 = vsub.s32 7, %v2297
    %v2299 = vrot.slane %v52, %v2298
    %v2300 = vmul.f32 %v2294, %v2299
    %v2301 = vadd.f32 %v2291, %v2300
    %v2302 = vadd.f32 %v2301, %v2280
    %v2303 = vmul.f32 %v2302, 0.5
    %v2304 = vmul.f32 %v2302, 0.70710677
    %v2305 = vand.u32 2147483647, %v2304
    %v2306 = vmul.f32 %v2305, 0.3275911
    %v2307 = vadd.f32 %v2306, 1.0
    %v2308 = vrcp.pop %v2307
    %v2309 = vmul.f32 1.0, %v2308
    %v2310 = vmul.f32 %v2309, 1.0614054
    %v2311 = vadd.f32 %v2310, -1.4531521
    %v2312 = vmul.f32 %v2311, %v2309
    %v2313 = vadd.f32 %v2312, 1.4214138
    %v2314 = vmul.f32 %v2313, %v2309
    %v2315 = vadd.f32 %v2314, -0.28449672
    %v2316 = vmul.f32 %v2315, %v2309
    %v2317 = vadd.f32 %v2316, 0.2548296
    %v2318 = vmul.f32 %v2317, %v2309
    %v2319 = vmul.f32 %v2305, %v2305
    %v2320 = vsub.f32 0.0, %v2319
    %v2321 = vmul.f32 %v2320, 1.442695
    %v2322 = vpow.pop %v2321
    %v2323 = vmul.f32 %v2318, %v2322
    %v2324 = vsub.f32 1.0, %v2323
    %vm2325 = vcmp.lt.f32.partialorder %v2304, 0.0
    %v2326 = vsub.f32 0.0, %v2324
    %v2327 = vsel %vm2325, %v2326, %v2324
    %v2328 = vadd.f32 %v2327, 1.0
    %v2329 = vmul.f32 %v2303, %v2328
    %s2330 = scalar_lea.vmem [#allocation5], 128
    %v2331 = vld [vmem:[%s2330] sm:$0xff]
    %v2332 = vld [vmem:[%s2330 + $0x8] sm:$0xff]
    %v2333 = vld [vmem:[%s2330 + $0x10] sm:$0xff]
    %v2334 = vld [vmem:[%s2330 + $0x18] sm:$0xff]
    %v2335 = vld [vmem:[%s2330 + $0x20] sm:$0xff]
    %v2336 = vld [vmem:[%s2330 + $0x28] sm:$0xff]
    %v2337 = vld [vmem:[%s2330 + $0x30] sm:$0xff]
    %v2338 = vld [vmem:[%s2330 + $0x38] sm:$0xff]
    %v2339 = vld [vmem:[%s2330 + $0x40] sm:$0xff]
    %v2340 = vld [vmem:[%s2330 + $0x48] sm:$0xff]
    %v2341 = vld [vmem:[%s2330 + $0x50] sm:$0xff]
    %v2342 = vld [vmem:[%s2330 + $0x58] sm:$0xff]
    %v2343 = vld [vmem:[%s2330 + $0x60] sm:$0xff]
    %v2344 = vld [vmem:[%s2330 + $0x68] sm:$0xff]
    %v2345 = vld [vmem:[%s2330 + $0x70] sm:$0xff]
    %v2346 = vld [vmem:[%s2330 + $0x78] sm:$0xff]
    %v2347 = vlaneseq
    %v2348 = vshrl.u32 %v2347, 7
    %v2349 = vsub.s32 4, %v2348
    %v2350 = vrot.slane %v52, %v2349
    %2351 = vmatprep.subr.mxu0 0.0
    %v2352 = vand.u32 %v2346, 4294901760
    %2353 = vmatpush1.msra.mxu0 %v2352
    %2354 = vmatprep.subr.mxu0 0.0
    %v2355 = vand.u32 %v2345, 4294901760
    %2356 = vmatpush1.msra.mxu0 %v2355
    %2357 = vmatprep.subr.mxu0 0.0
    %v2358 = vand.u32 %v2344, 4294901760
    %2359 = vmatpush1.msra.mxu0 %v2358
    %2360 = vmatprep.subr.mxu0 0.0
    %v2361 = vand.u32 %v2343, 4294901760
    %2362 = vmatpush1.msra.mxu0 %v2361
    %2363 = vmatprep.subr.mxu0 0.0
    %v2364 = vand.u32 %v2342, 4294901760
    %2365 = vmatpush1.msra.mxu0 %v2364
    %2366 = vmatprep.subr.mxu0 0.0
    %v2367 = vand.u32 %v2341, 4294901760
    %2368 = vmatpush1.msra.mxu0 %v2367
    %2369 = vmatprep.subr.mxu0 0.0
    %v2370 = vand.u32 %v2340, 4294901760
    %2371 = vmatpush1.msra.mxu0 %v2370
    %2372 = vmatprep.subr.mxu0 0.0
    %v2373 = vand.u32 %v2339, 4294901760
    %2374 = vmatpush1.msra.mxu0 %v2373
    %2375 = vmatprep.subr.mxu0 0.0
    %v2376 = vand.u32 %v2338, 4294901760
    %2377 = vmatpush1.msra.mxu0 %v2376
    %2378 = vmatprep.subr.mxu0 0.0
    %v2379 = vand.u32 %v2337, 4294901760
    %2380 = vmatpush1.msra.mxu0 %v2379
    %2381 = vmatprep.subr.mxu0 0.0
    %v2382 = vand.u32 %v2336, 4294901760
    %2383 = vmatpush1.msra.mxu0 %v2382
    %2384 = vmatprep.subr.mxu0 0.0
    %v2385 = vand.u32 %v2335, 4294901760
    %2386 = vmatpush1.msra.mxu0 %v2385
    %2387 = vmatprep.subr.mxu0 0.0
    %v2388 = vand.u32 %v2334, 4294901760
    %2389 = vmatpush1.msra.mxu0 %v2388
    %2390 = vmatprep.subr.mxu0 0.0
    %v2391 = vand.u32 %v2333, 4294901760
    %2392 = vmatpush1.msra.mxu0 %v2391
    %2393 = vmatprep.subr.mxu0 0.0
    %v2394 = vand.u32 %v2332, 4294901760
    %2395 = vmatpush1.msra.mxu0 %v2394
    %2396 = vmatprep.subr.mxu0 0.0
    %v2397 = vand.u32 %v2331, 4294901760
    %2398 = vmatpush1.msra.mxu0 %v2397
    %2399 = vmatprep.subr.mxu0 0.0
    %2400 = vmatpush2.msra.mxu0 0.0
    %2401 = vmatprep.subr.mxu0 0.0
    %2402 = vmatpush2.msra.mxu0 0.0
    %2403 = vmatprep.subr.mxu0 0.0
    %2404 = vmatpush2.msra.mxu0 0.0
    %2405 = vmatprep.subr.mxu0 0.0
    %2406 = vmatpush2.msra.mxu0 0.0
    %2407 = vmatprep.subr.mxu0 0.0
    %2408 = vmatpush2.msra.mxu0 0.0
    %2409 = vmatprep.subr.mxu0 0.0
    %2410 = vmatpush2.msra.mxu0 0.0
    %2411 = vmatprep.subr.mxu0 0.0
    %2412 = vmatpush2.msra.mxu0 0.0
    %2413 = vmatprep.subr.mxu0 0.0
    %2414 = vmatpush2.msra.mxu0 0.0
    %2415 = vmatprep.subr.mxu0 0.0
    %2416 = vmatpush2.msra.mxu0 0.0
    %2417 = vmatprep.subr.mxu0 0.0
    %2418 = vmatpush2.msra.mxu0 0.0
    %2419 = vmatprep.subr.mxu0 0.0
    %2420 = vmatpush2.msra.mxu0 0.0
    %2421 = vmatprep.subr.mxu0 0.0
    %2422 = vmatpush2.msra.mxu0 0.0
    %2423 = vmatprep.subr.mxu0 0.0
    %2424 = vmatpush2.msra.mxu0 0.0
    %2425 = vmatprep.subr.mxu0 0.0
    %2426 = vmatpush2.msra.mxu0 0.0
    %2427 = vmatprep.subr.mxu0 0.0
    %2428 = vmatpush2.msra.mxu0 0.0
    %2429 = vmatprep.subr.mxu0 0.0
    %2430 = vmatpush2.msra.mxu0 0.0
    %2431 = vmatprep.mubr.f32.mxu0 0.0
    %v2432 = vand.u32 %v2329, 4294901760
    %v2433 = vsub.f32 %v2329, %v2432
    %v2434 = vand.u32 %v2433, 4294901760
    %v2435 = vsub.f32 %v2433, %v2434
    %v2436 = vand.u32 %v2435, 4294901760
    %2437 = vmatmul.mubr.f32.gmra.mxu0 %v2436
    %v2438 = vpop.f32.mrf.mxu0
    %v2439 = vadd.f32 %v2350, %v2438
    %v2440 = vpop.f32.mrf.mxu0
    %2441 = vdwg.mxu0
    %2442 = vmatprep.subr.mxu0 0.0
    %v2443 = vand.u32 %v2346, 4294901760
    %v2444 = vsub.f32 %v2346, %v2443
    %v2445 = vand.u32 %v2444, 4294901760
    %v2446 = vsub.f32 %v2444, %v2445
    %v2447 = vand.u32 %v2446, 4294901760
    %2448 = vmatpush1.msra.mxu0 %v2447
    %2449 = vmatprep.subr.mxu0 0.0
    %v2450 = vand.u32 %v2345, 4294901760
    %v2451 = vsub.f32 %v2345, %v2450
    %v2452 = vand.u32 %v2451, 4294901760
    %v2453 = vsub.f32 %v2451, %v2452
    %v2454 = vand.u32 %v2453, 4294901760
    %2455 = vmatpush1.msra.mxu0 %v2454
    %2456 = vmatprep.subr.mxu0 0.0
    %v2457 = vand.u32 %v2344, 4294901760
    %v2458 = vsub.f32 %v2344, %v2457
    %v2459 = vand.u32 %v2458, 4294901760
    %v2460 = vsub.f32 %v2458, %v2459
    %v2461 = vand.u32 %v2460, 4294901760
    %2462 = vmatpush1.msra.mxu0 %v2461
    %2463 = vmatprep.subr.mxu0 0.0
    %v2464 = vand.u32 %v2343, 4294901760
    %v2465 = vsub.f32 %v2343, %v2464
    %v2466 = vand.u32 %v2465, 4294901760
    %v2467 = vsub.f32 %v2465, %v2466
    %v2468 = vand.u32 %v2467, 4294901760
    %2469 = vmatpush1.msra.mxu0 %v2468
    %2470 = vmatprep.subr.mxu0 0.0
    %v2471 = vand.u32 %v2342, 4294901760
    %v2472 = vsub.f32 %v2342, %v2471
    %v2473 = vand.u32 %v2472, 4294901760
    %v2474 = vsub.f32 %v2472, %v2473
    %v2475 = vand.u32 %v2474, 4294901760
    %2476 = vmatpush1.msra.mxu0 %v2475
    %2477 = vmatprep.subr.mxu0 0.0
    %v2478 = vand.u32 %v2341, 4294901760
    %v2479 = vsub.f32 %v2341, %v2478
    %v2480 = vand.u32 %v2479, 4294901760
    %v2481 = vsub.f32 %v2479, %v2480
    %v2482 = vand.u32 %v2481, 4294901760
    %2483 = vmatpush1.msra.mxu0 %v2482
    %2484 = vmatprep.subr.mxu0 0.0
    %v2485 = vand.u32 %v2340, 4294901760
    %v2486 = vsub.f32 %v2340, %v2485
    %v2487 = vand.u32 %v2486, 4294901760
    %v2488 = vsub.f32 %v2486, %v2487
    %v2489 = vand.u32 %v2488, 4294901760
    %2490 = vmatpush1.msra.mxu0 %v2489
    %2491 = vmatprep.subr.mxu0 0.0
    %v2492 = vand.u32 %v2339, 4294901760
    %v2493 = vsub.f32 %v2339, %v2492
    %v2494 = vand.u32 %v2493, 4294901760
    %v2495 = vsub.f32 %v2493, %v2494
    %v2496 = vand.u32 %v2495, 4294901760
    %2497 = vmatpush1.msra.mxu0 %v2496
    %2498 = vmatprep.subr.mxu0 0.0
    %v2499 = vand.u32 %v2338, 4294901760
    %v2500 = vsub.f32 %v2338, %v2499
    %v2501 = vand.u32 %v2500, 4294901760
    %v2502 = vsub.f32 %v2500, %v2501
    %v2503 = vand.u32 %v2502, 4294901760
    %2504 = vmatpush1.msra.mxu0 %v2503
    %2505 = vmatprep.subr.mxu0 0.0
    %v2506 = vand.u32 %v2337, 4294901760
    %v2507 = vsub.f32 %v2337, %v2506
    %v2508 = vand.u32 %v2507, 4294901760
    %v2509 = vsub.f32 %v2507, %v2508
    %v2510 = vand.u32 %v2509, 4294901760
    %2511 = vmatpush1.msra.mxu0 %v2510
    %2512 = vmatprep.subr.mxu0 0.0
    %v2513 = vand.u32 %v2336, 4294901760
    %v2514 = vsub.f32 %v2336, %v2513
    %v2515 = vand.u32 %v2514, 4294901760
    %v2516 = vsub.f32 %v2514, %v2515
    %v2517 = vand.u32 %v2516, 4294901760
    %2518 = vmatpush1.msra.mxu0 %v2517
    %2519 = vmatprep.subr.mxu0 0.0
    %v2520 = vand.u32 %v2335, 4294901760
    %v2521 = vsub.f32 %v2335, %v2520
    %v2522 = vand.u32 %v2521, 4294901760
    %v2523 = vsub.f32 %v2521, %v2522
    %v2524 = vand.u32 %v2523, 4294901760
    %2525 = vmatpush1.msra.mxu0 %v2524
    %2526 = vmatprep.subr.mxu0 0.0
    %v2527 = vand.u32 %v2334, 4294901760
    %v2528 = vsub.f32 %v2334, %v2527
    %v2529 = vand.u32 %v2528, 4294901760
    %v2530 = vsub.f32 %v2528, %v2529
    %v2531 = vand.u32 %v2530, 4294901760
    %2532 = vmatpush1.msra.mxu0 %v2531
    %2533 = vmatprep.subr.mxu0 0.0
    %v2534 = vand.u32 %v2333, 4294901760
    %v2535 = vsub.f32 %v2333, %v2534
    %v2536 = vand.u32 %v2535, 4294901760
    %v2537 = vsub.f32 %v2535, %v2536
    %v2538 = vand.u32 %v2537, 4294901760
    %2539 = vmatpush1.msra.mxu0 %v2538
    %2540 = vmatprep.subr.mxu0 0.0
    %v2541 = vand.u32 %v2332, 4294901760
    %v2542 = vsub.f32 %v2332, %v2541
    %v2543 = vand.u32 %v2542, 4294901760
    %v2544 = vsub.f32 %v2542, %v2543
    %v2545 = vand.u32 %v2544, 4294901760
    %2546 = vmatpush1.msra.mxu0 %v2545
    %2547 = vmatprep.subr.mxu0 0.0
    %v2548 = vand.u32 %v2331, 4294901760
    %v2549 = vsub.f32 %v2331, %v2548
    %v2550 = vand.u32 %v2549, 4294901760
    %v2551 = vsub.f32 %v2549, %v2550
    %v2552 = vand.u32 %v2551, 4294901760
    %2553 = vmatpush1.msra.mxu0 %v2552
    %2554 = vmatprep.subr.mxu0 0.0
    %2555 = vmatpush2.msra.mxu0 0.0
    %2556 = vmatprep.subr.mxu0 0.0
    %2557 = vmatpush2.msra.mxu0 0.0
    %2558 = vmatprep.subr.mxu0 0.0
    %2559 = vmatpush2.msra.mxu0 0.0
    %2560 = vmatprep.subr.mxu0 0.0
    %2561 = vmatpush2.msra.mxu0 0.0
    %2562 = vmatprep.subr.mxu0 0.0
    %2563 = vmatpush2.msra.mxu0 0.0
    %2564 = vmatprep.subr.mxu0 0.0
    %2565 = vmatpush2.msra.mxu0 0.0
    %2566 = vmatprep.subr.mxu0 0.0
    %2567 = vmatpush2.msra.mxu0 0.0
    %2568 = vmatprep.subr.mxu0 0.0
    %2569 = vmatpush2.msra.mxu0 0.0
    %2570 = vmatprep.subr.mxu0 0.0
    %2571 = vmatpush2.msra.mxu0 0.0
    %2572 = vmatprep.subr.mxu0 0.0
    %2573 = vmatpush2.msra.mxu0 0.0
    %2574 = vmatprep.subr.mxu0 0.0
    %2575 = vmatpush2.msra.mxu0 0.0
    %2576 = vmatprep.subr.mxu0 0.0
    %2577 = vmatpush2.msra.mxu0 0.0
    %2578 = vmatprep.subr.mxu0 0.0
    %2579 = vmatpush2.msra.mxu0 0.0
    %2580 = vmatprep.subr.mxu0 0.0
    %2581 = vmatpush2.msra.mxu0 0.0
    %2582 = vmatprep.subr.mxu0 0.0
    %2583 = vmatpush2.msra.mxu0 0.0
    %2584 = vmatprep.subr.mxu0 0.0
    %2585 = vmatpush2.msra.mxu0 0.0
    %2586 = vmatprep.mubr.f32.mxu0 0.0
    %v2587 = vand.u32 %v2329, 4294901760
    %2588 = vmatmul.mubr.f32.gmra.mxu0 %v2587
    %v2589 = vpop.f32.mrf.mxu0
    %v2590 = vadd.f32 %v2439, %v2589
    %v2591 = vpop.f32.mrf.mxu0
    %2592 = vdwg.mxu0
    %2593 = vmatprep.subr.mxu0 0.0
    %v2594 = vand.u32 %v2346, 4294901760
    %v2595 = vsub.f32 %v2346, %v2594
    %2596 = vmatpush1.msra.mxu0 %v2595
    %2597 = vmatprep.subr.mxu0 0.0
    %v2598 = vand.u32 %v2345, 4294901760
    %v2599 = vsub.f32 %v2345, %v2598
    %2600 = vmatpush1.msra.mxu0 %v2599
    %2601 = vmatprep.subr.mxu0 0.0
    %v2602 = vand.u32 %v2344, 4294901760
    %v2603 = vsub.f32 %v2344, %v2602
    %2604 = vmatpush1.msra.mxu0 %v2603
    %2605 = vmatprep.subr.mxu0 0.0
    %v2606 = vand.u32 %v2343, 4294901760
    %v2607 = vsub.f32 %v2343, %v2606
    %2608 = vmatpush1.msra.mxu0 %v2607
    %2609 = vmatprep.subr.mxu0 0.0
    %v2610 = vand.u32 %v2342, 4294901760
    %v2611 = vsub.f32 %v2342, %v2610
    %2612 = vmatpush1.msra.mxu0 %v2611
    %2613 = vmatprep.subr.mxu0 0.0
    %v2614 = vand.u32 %v2341, 4294901760
    %v2615 = vsub.f32 %v2341, %v2614
    %2616 = vmatpush1.msra.mxu0 %v2615
    %2617 = vmatprep.subr.mxu0 0.0
    %v2618 = vand.u32 %v2340, 4294901760
    %v2619 = vsub.f32 %v2340, %v2618
    %2620 = vmatpush1.msra.mxu0 %v2619
    %2621 = vmatprep.subr.mxu0 0.0
    %v2622 = vand.u32 %v2339, 4294901760
    %v2623 = vsub.f32 %v2339, %v2622
    %2624 = vmatpush1.msra.mxu0 %v2623
    %2625 = vmatprep.subr.mxu0 0.0
    %v2626 = vand.u32 %v2338, 4294901760
    %v2627 = vsub.f32 %v2338, %v2626
    %2628 = vmatpush1.msra.mxu0 %v2627
    %2629 = vmatprep.subr.mxu0 0.0
    %v2630 = vand.u32 %v2337, 4294901760
    %v2631 = vsub.f32 %v2337, %v2630
    %2632 = vmatpush1.msra.mxu0 %v2631
    %2633 = vmatprep.subr.mxu0 0.0
    %v2634 = vand.u32 %v2336, 4294901760
    %v2635 = vsub.f32 %v2336, %v2634
    %2636 = vmatpush1.msra.mxu0 %v2635
    %2637 = vmatprep.subr.mxu0 0.0
    %v2638 = vand.u32 %v2335, 4294901760
    %v2639 = vsub.f32 %v2335, %v2638
    %2640 = vmatpush1.msra.mxu0 %v2639
    %2641 = vmatprep.subr.mxu0 0.0
    %v2642 = vand.u32 %v2334, 4294901760
    %v2643 = vsub.f32 %v2334, %v2642
    %2644 = vmatpush1.msra.mxu0 %v2643
    %2645 = vmatprep.subr.mxu0 0.0
    %v2646 = vand.u32 %v2333, 4294901760
    %v2647 = vsub.f32 %v2333, %v2646
    %2648 = vmatpush1.msra.mxu0 %v2647
    %2649 = vmatprep.subr.mxu0 0.0
    %v2650 = vand.u32 %v2332, 4294901760
    %v2651 = vsub.f32 %v2332, %v2650
    %2652 = vmatpush1.msra.mxu0 %v2651
    %2653 = vmatprep.subr.mxu0 0.0
    %v2654 = vand.u32 %v2331, 4294901760
    %v2655 = vsub.f32 %v2331, %v2654
    %2656 = vmatpush1.msra.mxu0 %v2655
    %2657 = vmatprep.subr.mxu0 0.0
    %2658 = vmatpush2.msra.mxu0 0.0
    %2659 = vmatprep.subr.mxu0 0.0
    %2660 = vmatpush2.msra.mxu0 0.0
    %2661 = vmatprep.subr.mxu0 0.0
    %2662 = vmatpush2.msra.mxu0 0.0
    %2663 = vmatprep.subr.mxu0 0.0
    %2664 = vmatpush2.msra.mxu0 0.0
    %2665 = vmatprep.subr.mxu0 0.0
    %2666 = vmatpush2.msra.mxu0 0.0
    %2667 = vmatprep.subr.mxu0 0.0
    %2668 = vmatpush2.msra.mxu0 0.0
    %2669 = vmatprep.subr.mxu0 0.0
    %2670 = vmatpush2.msra.mxu0 0.0
    %2671 = vmatprep.subr.mxu0 0.0
    %2672 = vmatpush2.msra.mxu0 0.0
    %2673 = vmatprep.subr.mxu0 0.0
    %2674 = vmatpush2.msra.mxu0 0.0
    %2675 = vmatprep.subr.mxu0 0.0
    %2676 = vmatpush2.msra.mxu0 0.0
    %2677 = vmatprep.subr.mxu0 0.0
    %2678 = vmatpush2.msra.mxu0 0.0
    %2679 = vmatprep.subr.mxu0 0.0
    %2680 = vmatpush2.msra.mxu0 0.0
    %2681 = vmatprep.subr.mxu0 0.0
    %2682 = vmatpush2.msra.mxu0 0.0
    %2683 = vmatprep.subr.mxu0 0.0
    %2684 = vmatpush2.msra.mxu0 0.0
    %2685 = vmatprep.subr.mxu0 0.0
    %2686 = vmatpush2.msra.mxu0 0.0
    %2687 = vmatprep.subr.mxu0 0.0
    %2688 = vmatpush2.msra.mxu0 0.0
    %2689 = vmatprep.mubr.f32.mxu0 0.0
    %v2690 = vand.u32 %v2329, 4294901760
    %v2691 = vsub.f32 %v2329, %v2690
    %2692 = vmatmul.mubr.f32.gmra.mxu0 %v2691
    %v2693 = vpop.f32.mrf.mxu0
    %v2694 = vadd.f32 %v2590, %v2693
    %v2695 = vpop.f32.mrf.mxu0
    %2696 = vdwg.mxu0
    %2697 = vmatprep.subr.mxu0 0.0
    %v2698 = vand.u32 %v2346, 4294901760
    %2699 = vmatpush1.msra.mxu0 %v2698
    %2700 = vmatprep.subr.mxu0 0.0
    %v2701 = vand.u32 %v2345, 4294901760
    %2702 = vmatpush1.msra.mxu0 %v2701
    %2703 = vmatprep.subr.mxu0 0.0
    %v2704 = vand.u32 %v2344, 4294901760
    %2705 = vmatpush1.msra.mxu0 %v2704
    %2706 = vmatprep.subr.mxu0 0.0
    %v2707 = vand.u32 %v2343, 4294901760
    %2708 = vmatpush1.msra.mxu0 %v2707
    %2709 = vmatprep.subr.mxu0 0.0
    %v2710 = vand.u32 %v2342, 4294901760
    %2711 = vmatpush1.msra.mxu0 %v2710
    %2712 = vmatprep.subr.mxu0 0.0
    %v2713 = vand.u32 %v2341, 4294901760
    %2714 = vmatpush1.msra.mxu0 %v2713
    %2715 = vmatprep.subr.mxu0 0.0
    %v2716 = vand.u32 %v2340, 4294901760
    %2717 = vmatpush1.msra.mxu0 %v2716
    %2718 = vmatprep.subr.mxu0 0.0
    %v2719 = vand.u32 %v2339, 4294901760
    %2720 = vmatpush1.msra.mxu0 %v2719
    %2721 = vmatprep.subr.mxu0 0.0
    %v2722 = vand.u32 %v2338, 4294901760
    %2723 = vmatpush1.msra.mxu0 %v2722
    %2724 = vmatprep.subr.mxu0 0.0
    %v2725 = vand.u32 %v2337, 4294901760
    %2726 = vmatpush1.msra.mxu0 %v2725
    %2727 = vmatprep.subr.mxu0 0.0
    %v2728 = vand.u32 %v2336, 4294901760
    %2729 = vmatpush1.msra.mxu0 %v2728
    %2730 = vmatprep.subr.mxu0 0.0
    %v2731 = vand.u32 %v2335, 4294901760
    %2732 = vmatpush1.msra.mxu0 %v2731
    %2733 = vmatprep.subr.mxu0 0.0
    %v2734 = vand.u32 %v2334, 4294901760
    %2735 = vmatpush1.msra.mxu0 %v2734
    %2736 = vmatprep.subr.mxu0 0.0
    %v2737 = vand.u32 %v2333, 4294901760
    %2738 = vmatpush1.msra.mxu0 %v2737
    %2739 = vmatprep.subr.mxu0 0.0
    %v2740 = vand.u32 %v2332, 4294901760
    %2741 = vmatpush1.msra.mxu0 %v2740
    %2742 = vmatprep.subr.mxu0 0.0
    %v2743 = vand.u32 %v2331, 4294901760
    %2744 = vmatpush1.msra.mxu0 %v2743
    %2745 = vmatprep.subr.mxu0 0.0
    %2746 = vmatpush2.msra.mxu0 0.0
    %2747 = vmatprep.subr.mxu0 0.0
    %2748 = vmatpush2.msra.mxu0 0.0
    %2749 = vmatprep.subr.mxu0 0.0
    %2750 = vmatpush2.msra.mxu0 0.0
    %2751 = vmatprep.subr.mxu0 0.0
    %2752 = vmatpush2.msra.mxu0 0.0
    %2753 = vmatprep.subr.mxu0 0.0
    %2754 = vmatpush2.msra.mxu0 0.0
    %2755 = vmatprep.subr.mxu0 0.0
    %2756 = vmatpush2.msra.mxu0 0.0
    %2757 = vmatprep.subr.mxu0 0.0
    %2758 = vmatpush2.msra.mxu0 0.0
    %2759 = vmatprep.subr.mxu0 0.0
    %2760 = vmatpush2.msra.mxu0 0.0
    %2761 = vmatprep.subr.mxu0 0.0
    %2762 = vmatpush2.msra.mxu0 0.0
    %2763 = vmatprep.subr.mxu0 0.0
    %2764 = vmatpush2.msra.mxu0 0.0
    %2765 = vmatprep.subr.mxu0 0.0
    %2766 = vmatpush2.msra.mxu0 0.0
    %2767 = vmatprep.subr.mxu0 0.0
    %2768 = vmatpush2.msra.mxu0 0.0
    %2769 = vmatprep.subr.mxu0 0.0
    %2770 = vmatpush2.msra.mxu0 0.0
    %2771 = vmatprep.subr.mxu0 0.0
    %2772 = vmatpush2.msra.mxu0 0.0
    %2773 = vmatprep.subr.mxu0 0.0
    %2774 = vmatpush2.msra.mxu0 0.0
    %2775 = vmatprep.subr.mxu0 0.0
    %2776 = vmatpush2.msra.mxu0 0.0
    %2777 = vmatprep.mubr.f32.mxu0 0.0
    %v2778 = vand.u32 %v2329, 4294901760
    %v2779 = vsub.f32 %v2329, %v2778
    %v2780 = vand.u32 %v2779, 4294901760
    %2781 = vmatmul.mubr.f32.gmra.mxu0 %v2780
    %v2782 = vpop.f32.mrf.mxu0
    %v2783 = vadd.f32 %v2694, %v2782
    %v2784 = vpop.f32.mrf.mxu0
    %2785 = vdwg.mxu0
    %2786 = vmatprep.subr.mxu0 0.0
    %v2787 = vand.u32 %v2346, 4294901760
    %v2788 = vsub.f32 %v2346, %v2787
    %v2789 = vand.u32 %v2788, 4294901760
    %2790 = vmatpush1.msra.mxu0 %v2789
    %2791 = vmatprep.subr.mxu0 0.0
    %v2792 = vand.u32 %v2345, 4294901760
    %v2793 = vsub.f32 %v2345, %v2792
    %v2794 = vand.u32 %v2793, 4294901760
    %2795 = vmatpush1.msra.mxu0 %v2794
    %2796 = vmatprep.subr.mxu0 0.0
    %v2797 = vand.u32 %v2344, 4294901760
    %v2798 = vsub.f32 %v2344, %v2797
    %v2799 = vand.u32 %v2798, 4294901760
    %2800 = vmatpush1.msra.mxu0 %v2799
    %2801 = vmatprep.subr.mxu0 0.0
    %v2802 = vand.u32 %v2343, 4294901760
    %v2803 = vsub.f32 %v2343, %v2802
    %v2804 = vand.u32 %v2803, 4294901760
    %2805 = vmatpush1.msra.mxu0 %v2804
    %2806 = vmatprep.subr.mxu0 0.0
    %v2807 = vand.u32 %v2342, 4294901760
    %v2808 = vsub.f32 %v2342, %v2807
    %v2809 = vand.u32 %v2808, 4294901760
    %2810 = vmatpush1.msra.mxu0 %v2809
    %2811 = vmatprep.subr.mxu0 0.0
    %v2812 = vand.u32 %v2341, 4294901760
    %v2813 = vsub.f32 %v2341, %v2812
    %v2814 = vand.u32 %v2813, 4294901760
    %2815 = vmatpush1.msra.mxu0 %v2814
    %2816 = vmatprep.subr.mxu0 0.0
    %v2817 = vand.u32 %v2340, 4294901760
    %v2818 = vsub.f32 %v2340, %v2817
    %v2819 = vand.u32 %v2818, 4294901760
    %2820 = vmatpush1.msra.mxu0 %v2819
    %2821 = vmatprep.subr.mxu0 0.0
    %v2822 = vand.u32 %v2339, 4294901760
    %v2823 = vsub.f32 %v2339, %v2822
    %v2824 = vand.u32 %v2823, 4294901760
    %2825 = vmatpush1.msra.mxu0 %v2824
    %2826 = vmatprep.subr.mxu0 0.0
    %v2827 = vand.u32 %v2338, 4294901760
    %v2828 = vsub.f32 %v2338, %v2827
    %v2829 = vand.u32 %v2828, 4294901760
    %2830 = vmatpush1.msra.mxu0 %v2829
    %2831 = vmatprep.subr.mxu0 0.0
    %v2832 = vand.u32 %v2337, 4294901760
    %v2833 = vsub.f32 %v2337, %v2832
    %v2834 = vand.u32 %v2833, 4294901760
    %2835 = vmatpush1.msra.mxu0 %v2834
    %2836 = vmatprep.subr.mxu0 0.0
    %v2837 = vand.u32 %v2336, 4294901760
    %v2838 = vsub.f32 %v2336, %v2837
    %v2839 = vand.u32 %v2838, 4294901760
    %2840 = vmatpush1.msra.mxu0 %v2839
    %2841 = vmatprep.subr.mxu0 0.0
    %v2842 = vand.u32 %v2335, 4294901760
    %v2843 = vsub.f32 %v2335, %v2842
    %v2844 = vand.u32 %v2843, 4294901760
    %2845 = vmatpush1.msra.mxu0 %v2844
    %2846 = vmatprep.subr.mxu0 0.0
    %v2847 = vand.u32 %v2334, 4294901760
    %v2848 = vsub.f32 %v2334, %v2847
    %v2849 = vand.u32 %v2848, 4294901760
    %2850 = vmatpush1.msra.mxu0 %v2849
    %2851 = vmatprep.subr.mxu0 0.0
    %v2852 = vand.u32 %v2333, 4294901760
    %v2853 = vsub.f32 %v2333, %v2852
    %v2854 = vand.u32 %v2853, 4294901760
    %2855 = vmatpush1.msra.mxu0 %v2854
    %2856 = vmatprep.subr.mxu0 0.0
    %v2857 = vand.u32 %v2332, 4294901760
    %v2858 = vsub.f32 %v2332, %v2857
    %v2859 = vand.u32 %v2858, 4294901760
    %2860 = vmatpush1.msra.mxu0 %v2859
    %2861 = vmatprep.subr.mxu0 0.0
    %v2862 = vand.u32 %v2331, 4294901760
    %v2863 = vsub.f32 %v2331, %v2862
    %v2864 = vand.u32 %v2863, 4294901760
    %2865 = vmatpush1.msra.mxu0 %v2864
    %2866 = vmatprep.subr.mxu0 0.0
    %2867 = vmatpush2.msra.mxu0 0.0
    %2868 = vmatprep.subr.mxu0 0.0
    %2869 = vmatpush2.msra.mxu0 0.0
    %2870 = vmatprep.subr.mxu0 0.0
    %2871 = vmatpush2.msra.mxu0 0.0
    %2872 = vmatprep.subr.mxu0 0.0
    %2873 = vmatpush2.msra.mxu0 0.0
    %2874 = vmatprep.subr.mxu0 0.0
    %2875 = vmatpush2.msra.mxu0 0.0
    %2876 = vmatprep.subr.mxu0 0.0
    %2877 = vmatpush2.msra.mxu0 0.0
    %2878 = vmatprep.subr.mxu0 0.0
    %2879 = vmatpush2.msra.mxu0 0.0
    %2880 = vmatprep.subr.mxu0 0.0
    %2881 = vmatpush2.msra.mxu0 0.0
    %2882 = vmatprep.subr.mxu0 0.0
    %2883 = vmatpush2.msra.mxu0 0.0
    %2884 = vmatprep.subr.mxu0 0.0
    %2885 = vmatpush2.msra.mxu0 0.0
    %2886 = vmatprep.subr.mxu0 0.0
    %2887 = vmatpush2.msra.mxu0 0.0
    %2888 = vmatprep.subr.mxu0 0.0
    %2889 = vmatpush2.msra.mxu0 0.0
    %2890 = vmatprep.subr.mxu0 0.0
    %2891 = vmatpush2.msra.mxu0 0.0
    %2892 = vmatprep.subr.mxu0 0.0
    %2893 = vmatpush2.msra.mxu0 0.0
    %2894 = vmatprep.subr.mxu0 0.0
    %2895 = vmatpush2.msra.mxu0 0.0
    %2896 = vmatprep.subr.mxu0 0.0
    %2897 = vmatpush2.msra.mxu0 0.0
    %2898 = vmatprep.mubr.f32.mxu0 0.0
    %v2899 = vand.u32 %v2329, 4294901760
    %2900 = vmatmul.mubr.f32.gmra.mxu0 %v2899
    %v2901 = vpop.f32.mrf.mxu0
    %v2902 = vadd.f32 %v2783, %v2901
    %v2903 = vpop.f32.mrf.mxu0
    %2904 = vdwg.mxu0
    %2905 = vmatprep.subr.mxu0 0.0
    %v2906 = vand.u32 %v2346, 4294901760
    %2907 = vmatpush1.msra.mxu0 %v2906
    %2908 = vmatprep.subr.mxu0 0.0
    %v2909 = vand.u32 %v2345, 4294901760
    %2910 = vmatpush1.msra.mxu0 %v2909
    %2911 = vmatprep.subr.mxu0 0.0
    %v2912 = vand.u32 %v2344, 4294901760
    %2913 = vmatpush1.msra.mxu0 %v2912
    %2914 = vmatprep.subr.mxu0 0.0
    %v2915 = vand.u32 %v2343, 4294901760
    %2916 = vmatpush1.msra.mxu0 %v2915
    %2917 = vmatprep.subr.mxu0 0.0
    %v2918 = vand.u32 %v2342, 4294901760
    %2919 = vmatpush1.msra.mxu0 %v2918
    %2920 = vmatprep.subr.mxu0 0.0
    %v2921 = vand.u32 %v2341, 4294901760
    %2922 = vmatpush1.msra.mxu0 %v2921
    %2923 = vmatprep.subr.mxu0 0.0
    %v2924 = vand.u32 %v2340, 4294901760
    %2925 = vmatpush1.msra.mxu0 %v2924
    %2926 = vmatprep.subr.mxu0 0.0
    %v2927 = vand.u32 %v2339, 4294901760
    %2928 = vmatpush1.msra.mxu0 %v2927
    %2929 = vmatprep.subr.mxu0 0.0
    %v2930 = vand.u32 %v2338, 4294901760
    %2931 = vmatpush1.msra.mxu0 %v2930
    %2932 = vmatprep.subr.mxu0 0.0
    %v2933 = vand.u32 %v2337, 4294901760
    %2934 = vmatpush1.msra.mxu0 %v2933
    %2935 = vmatprep.subr.mxu0 0.0
    %v2936 = vand.u32 %v2336, 4294901760
    %2937 = vmatpush1.msra.mxu0 %v2936
    %2938 = vmatprep.subr.mxu0 0.0
    %v2939 = vand.u32 %v2335, 4294901760
    %2940 = vmatpush1.msra.mxu0 %v2939
    %2941 = vmatprep.subr.mxu0 0.0
    %v2942 = vand.u32 %v2334, 4294901760
    %2943 = vmatpush1.msra.mxu0 %v2942
    %2944 = vmatprep.subr.mxu0 0.0
    %v2945 = vand.u32 %v2333, 4294901760
    %2946 = vmatpush1.msra.mxu0 %v2945
    %2947 = vmatprep.subr.mxu0 0.0
    %v2948 = vand.u32 %v2332, 4294901760
    %2949 = vmatpush1.msra.mxu0 %v2948
    %2950 = vmatprep.subr.mxu0 0.0
    %v2951 = vand.u32 %v2331, 4294901760
    %2952 = vmatpush1.msra.mxu0 %v2951
    %2953 = vmatprep.subr.mxu0 0.0
    %2954 = vmatpush2.msra.mxu0 0.0
    %2955 = vmatprep.subr.mxu0 0.0
    %2956 = vmatpush2.msra.mxu0 0.0
    %2957 = vmatprep.subr.mxu0 0.0
    %2958 = vmatpush2.msra.mxu0 0.0
    %2959 = vmatprep.subr.mxu0 0.0
    %2960 = vmatpush2.msra.mxu0 0.0
    %2961 = vmatprep.subr.mxu0 0.0
    %2962 = vmatpush2.msra.mxu0 0.0
    %2963 = vmatprep.subr.mxu0 0.0
    %2964 = vmatpush2.msra.mxu0 0.0
    %2965 = vmatprep.subr.mxu0 0.0
    %2966 = vmatpush2.msra.mxu0 0.0
    %2967 = vmatprep.subr.mxu0 0.0
    %2968 = vmatpush2.msra.mxu0 0.0
    %2969 = vmatprep.subr.mxu0 0.0
    %2970 = vmatpush2.msra.mxu0 0.0
    %2971 = vmatprep.subr.mxu0 0.0
    %2972 = vmatpush2.msra.mxu0 0.0
    %2973 = vmatprep.subr.mxu0 0.0
    %2974 = vmatpush2.msra.mxu0 0.0
    %2975 = vmatprep.subr.mxu0 0.0
    %2976 = vmatpush2.msra.mxu0 0.0
    %2977 = vmatprep.subr.mxu0 0.0
    %2978 = vmatpush2.msra.mxu0 0.0
    %2979 = vmatprep.subr.mxu0 0.0
    %2980 = vmatpush2.msra.mxu0 0.0
    %2981 = vmatprep.subr.mxu0 0.0
    %2982 = vmatpush2.msra.mxu0 0.0
    %2983 = vmatprep.subr.mxu0 0.0
    %2984 = vmatpush2.msra.mxu0 0.0
    %2985 = vmatprep.mubr.f32.mxu0 0.0
    %v2986 = vand.u32 %v2329, 4294901760
    %2987 = vmatmul.mubr.f32.gmra.mxu0 %v2986
    %v2988 = vpop.f32.mrf.mxu0
    %v2989 = vadd.f32 %v2902, %v2988
    %v2990 = vpop.f32.mrf.mxu0
    %2991 = vdwg.mxu0
    %v2992 = vmul.f32 %v2989, 0.5
    %v2993 = vmul.f32 %v2989, 0.70710677
    %v2994 = vand.u32 2147483647, %v2993
    %v2995 = vmul.f32 %v2994, 0.3275911
    %v2996 = vadd.f32 %v2995, 1.0
    %v2997 = vrcp.pop %v2996
    %v2998 = vmul.f32 1.0, %v2997
    %v2999 = vmul.f32 %v2998, 1.0614054
    %v3000 = vadd.f32 %v2999, -1.4531521
    %v3001 = vmul.f32 %v3000, %v2998
    %v3002 = vadd.f32 %v3001, 1.4214138
    %v3003 = vmul.f32 %v3002, %v2998
    %v3004 = vadd.f32 %v3003, -0.28449672
    %v3005 = vmul.f32 %v3004, %v2998
    %v3006 = vadd.f32 %v3005, 0.2548296
    %v3007 = vmul.f32 %v3006, %v2998
    %v3008 = vmul.f32 %v2994, %v2994
    %v3009 = vsub.f32 0.0, %v3008
    %v3010 = vmul.f32 %v3009, 1.442695
    %v3011 = vpow.pop %v3010
    %v3012 = vmul.f32 %v3007, %v3011
    %v3013 = vsub.f32 1.0, %v3012
    %vm3014 = vcmp.lt.f32.partialorder %v2993, 0.0
    %v3015 = vsub.f32 0.0, %v3013
    %v3016 = vsel %vm3014, %v3015, %v3013
    %v3017 = vadd.f32 %v3016, 1.0
    %v3018 = vmul.f32 %v2992, %v3017
    %s3019 = scalar_lea.vmem [#allocation5], 256
    %v3020 = vld [vmem:[%s3019] sm:$0xff]
    %v3021 = vld [vmem:[%s3019 + $0x8] sm:$0xff]
    %v3022 = vld [vmem:[%s3019 + $0x10] sm:$0xff]
    %v3023 = vld [vmem:[%s3019 + $0x18] sm:$0xff]
    %v3024 = vld [vmem:[%s3019 + $0x20] sm:$0xff]
    %v3025 = vld [vmem:[%s3019 + $0x28] sm:$0xff]
    %v3026 = vld [vmem:[%s3019 + $0x30] sm:$0xff]
    %v3027 = vld [vmem:[%s3019 + $0x38] sm:$0xff]
    %v3028 = vld [vmem:[%s3019 + $0x40] sm:$0xff]
    %v3029 = vld [vmem:[%s3019 + $0x48] sm:$0xff]
    %v3030 = vld [vmem:[%s3019 + $0x50] sm:$0xff]
    %v3031 = vld [vmem:[%s3019 + $0x58] sm:$0xff]
    %v3032 = vld [vmem:[%s3019 + $0x60] sm:$0xff]
    %v3033 = vld [vmem:[%s3019 + $0x68] sm:$0xff]
    %v3034 = vld [vmem:[%s3019 + $0x70] sm:$0xff]
    %v3035 = vld [vmem:[%s3019 + $0x78] sm:$0xff]
    %v3036 = vlaneseq
    %v3037 = vshrl.u32 %v3036, 7
    %v3038 = vsub.s32 5, %v3037
    %v3039 = vrot.slane %v52, %v3038
    %3040 = vmatprep.subr.mxu0 0.0
    %v3041 = vand.u32 %v3035, 4294901760
    %3042 = vmatpush1.msra.mxu0 %v3041
    %3043 = vmatprep.subr.mxu0 0.0
    %v3044 = vand.u32 %v3034, 4294901760
    %3045 = vmatpush1.msra.mxu0 %v3044
    %3046 = vmatprep.subr.mxu0 0.0
    %v3047 = vand.u32 %v3033, 4294901760
    %3048 = vmatpush1.msra.mxu0 %v3047
    %3049 = vmatprep.subr.mxu0 0.0
    %v3050 = vand.u32 %v3032, 4294901760
    %3051 = vmatpush1.msra.mxu0 %v3050
    %3052 = vmatprep.subr.mxu0 0.0
    %v3053 = vand.u32 %v3031, 4294901760
    %3054 = vmatpush1.msra.mxu0 %v3053
    %3055 = vmatprep.subr.mxu0 0.0
    %v3056 = vand.u32 %v3030, 4294901760
    %3057 = vmatpush1.msra.mxu0 %v3056
    %3058 = vmatprep.subr.mxu0 0.0
    %v3059 = vand.u32 %v3029, 4294901760
    %3060 = vmatpush1.msra.mxu0 %v3059
    %3061 = vmatprep.subr.mxu0 0.0
    %v3062 = vand.u32 %v3028, 4294901760
    %3063 = vmatpush1.msra.mxu0 %v3062
    %3064 = vmatprep.subr.mxu0 0.0
    %v3065 = vand.u32 %v3027, 4294901760
    %3066 = vmatpush1.msra.mxu0 %v3065
    %3067 = vmatprep.subr.mxu0 0.0
    %v3068 = vand.u32 %v3026, 4294901760
    %3069 = vmatpush1.msra.mxu0 %v3068
    %3070 = vmatprep.subr.mxu0 0.0
    %v3071 = vand.u32 %v3025, 4294901760
    %3072 = vmatpush1.msra.mxu0 %v3071
    %3073 = vmatprep.subr.mxu0 0.0
    %v3074 = vand.u32 %v3024, 4294901760
    %3075 = vmatpush1.msra.mxu0 %v3074
    %3076 = vmatprep.subr.mxu0 0.0
    %v3077 = vand.u32 %v3023, 4294901760
    %3078 = vmatpush1.msra.mxu0 %v3077
    %3079 = vmatprep.subr.mxu0 0.0
    %v3080 = vand.u32 %v3022, 4294901760
    %3081 = vmatpush1.msra.mxu0 %v3080
    %3082 = vmatprep.subr.mxu0 0.0
    %v3083 = vand.u32 %v3021, 4294901760
    %3084 = vmatpush1.msra.mxu0 %v3083
    %3085 = vmatprep.subr.mxu0 0.0
    %v3086 = vand.u32 %v3020, 4294901760
    %3087 = vmatpush1.msra.mxu0 %v3086
    %3088 = vmatprep.subr.mxu0 0.0
    %3089 = vmatpush2.msra.mxu0 0.0
    %3090 = vmatprep.subr.mxu0 0.0
    %3091 = vmatpush2.msra.mxu0 0.0
    %3092 = vmatprep.subr.mxu0 0.0
    %3093 = vmatpush2.msra.mxu0 0.0
    %3094 = vmatprep.subr.mxu0 0.0
    %3095 = vmatpush2.msra.mxu0 0.0
    %3096 = vmatprep.subr.mxu0 0.0
    %3097 = vmatpush2.msra.mxu0 0.0
    %3098 = vmatprep.subr.mxu0 0.0
    %3099 = vmatpush2.msra.mxu0 0.0
    %3100 = vmatprep.subr.mxu0 0.0
    %3101 = vmatpush2.msra.mxu0 0.0
    %3102 = vmatprep.subr.mxu0 0.0
    %3103 = vmatpush2.msra.mxu0 0.0
    %3104 = vmatprep.subr.mxu0 0.0
    %3105 = vmatpush2.msra.mxu0 0.0
    %3106 = vmatprep.subr.mxu0 0.0
    %3107 = vmatpush2.msra.mxu0 0.0
    %3108 = vmatprep.subr.mxu0 0.0
    %3109 = vmatpush2.msra.mxu0 0.0
    %3110 = vmatprep.subr.mxu0 0.0
    %3111 = vmatpush2.msra.mxu0 0.0
    %3112 = vmatprep.subr.mxu0 0.0
    %3113 = vmatpush2.msra.mxu0 0.0
    %3114 = vmatprep.subr.mxu0 0.0
    %3115 = vmatpush2.msra.mxu0 0.0
    %3116 = vmatprep.subr.mxu0 0.0
    %3117 = vmatpush2.msra.mxu0 0.0
    %3118 = vmatprep.subr.mxu0 0.0
    %3119 = vmatpush2.msra.mxu0 0.0
    %3120 = vmatprep.mubr.f32.mxu0 0.0
    %v3121 = vand.u32 %v3018, 4294901760
    %v3122 = vsub.f32 %v3018, %v3121
    %v3123 = vand.u32 %v3122, 4294901760
    %v3124 = vsub.f32 %v3122, %v3123
    %v3125 = vand.u32 %v3124, 4294901760
    %3126 = vmatmul.mubr.f32.gmra.mxu0 %v3125
    %v3127 = vpop.f32.mrf.mxu0
    %v3128 = vadd.f32 %v3039, %v3127
    %v3129 = vpop.f32.mrf.mxu0
    %3130 = vdwg.mxu0
    %3131 = vmatprep.subr.mxu0 0.0
    %v3132 = vand.u32 %v3035, 4294901760
    %v3133 = vsub.f32 %v3035, %v3132
    %v3134 = vand.u32 %v3133, 4294901760
    %v3135 = vsub.f32 %v3133, %v3134
    %v3136 = vand.u32 %v3135, 4294901760
    %3137 = vmatpush1.msra.mxu0 %v3136
    %3138 = vmatprep.subr.mxu0 0.0
    %v3139 = vand.u32 %v3034, 4294901760
    %v3140 = vsub.f32 %v3034, %v3139
    %v3141 = vand.u32 %v3140, 4294901760
    %v3142 = vsub.f32 %v3140, %v3141
    %v3143 = vand.u32 %v3142, 4294901760
    %3144 = vmatpush1.msra.mxu0 %v3143
    %3145 = vmatprep.subr.mxu0 0.0
    %v3146 = vand.u32 %v3033, 4294901760
    %v3147 = vsub.f32 %v3033, %v3146
    %v3148 = vand.u32 %v3147, 4294901760
    %v3149 = vsub.f32 %v3147, %v3148
    %v3150 = vand.u32 %v3149, 4294901760
    %3151 = vmatpush1.msra.mxu0 %v3150
    %3152 = vmatprep.subr.mxu0 0.0
    %v3153 = vand.u32 %v3032, 4294901760
    %v3154 = vsub.f32 %v3032, %v3153
    %v3155 = vand.u32 %v3154, 4294901760
    %v3156 = vsub.f32 %v3154, %v3155
    %v3157 = vand.u32 %v3156, 4294901760
    %3158 = vmatpush1.msra.mxu0 %v3157
    %3159 = vmatprep.subr.mxu0 0.0
    %v3160 = vand.u32 %v3031, 4294901760
    %v3161 = vsub.f32 %v3031, %v3160
    %v3162 = vand.u32 %v3161, 4294901760
    %v3163 = vsub.f32 %v3161, %v3162
    %v3164 = vand.u32 %v3163, 4294901760
    %3165 = vmatpush1.msra.mxu0 %v3164
    %3166 = vmatprep.subr.mxu0 0.0
    %v3167 = vand.u32 %v3030, 4294901760
    %v3168 = vsub.f32 %v3030, %v3167
    %v3169 = vand.u32 %v3168, 4294901760
    %v3170 = vsub.f32 %v3168, %v3169
    %v3171 = vand.u32 %v3170, 4294901760
    %3172 = vmatpush1.msra.mxu0 %v3171
    %3173 = vmatprep.subr.mxu0 0.0
    %v3174 = vand.u32 %v3029, 4294901760
    %v3175 = vsub.f32 %v3029, %v3174
    %v3176 = vand.u32 %v3175, 4294901760
    %v3177 = vsub.f32 %v3175, %v3176
    %v3178 = vand.u32 %v3177, 4294901760
    %3179 = vmatpush1.msra.mxu0 %v3178
    %3180 = vmatprep.subr.mxu0 0.0
    %v3181 = vand.u32 %v3028, 4294901760
    %v3182 = vsub.f32 %v3028, %v3181
    %v3183 = vand.u32 %v3182, 4294901760
    %v3184 = vsub.f32 %v3182, %v3183
    %v3185 = vand.u32 %v3184, 4294901760
    %3186 = vmatpush1.msra.mxu0 %v3185
    %3187 = vmatprep.subr.mxu0 0.0
    %v3188 = vand.u32 %v3027, 4294901760
    %v3189 = vsub.f32 %v3027, %v3188
    %v3190 = vand.u32 %v3189, 4294901760
    %v3191 = vsub.f32 %v3189, %v3190
    %v3192 = vand.u32 %v3191, 4294901760
    %3193 = vmatpush1.msra.mxu0 %v3192
    %3194 = vmatprep.subr.mxu0 0.0
    %v3195 = vand.u32 %v3026, 4294901760
    %v3196 = vsub.f32 %v3026, %v3195
    %v3197 = vand.u32 %v3196, 4294901760
    %v3198 = vsub.f32 %v3196, %v3197
    %v3199 = vand.u32 %v3198, 4294901760
    %3200 = vmatpush1.msra.mxu0 %v3199
    %3201 = vmatprep.subr.mxu0 0.0
    %v3202 = vand.u32 %v3025, 4294901760
    %v3203 = vsub.f32 %v3025, %v3202
    %v3204 = vand.u32 %v3203, 4294901760
    %v3205 = vsub.f32 %v3203, %v3204
    %v3206 = vand.u32 %v3205, 4294901760
    %3207 = vmatpush1.msra.mxu0 %v3206
    %3208 = vmatprep.subr.mxu0 0.0
    %v3209 = vand.u32 %v3024, 4294901760
    %v3210 = vsub.f32 %v3024, %v3209
    %v3211 = vand.u32 %v3210, 4294901760
    %v3212 = vsub.f32 %v3210, %v3211
    %v3213 = vand.u32 %v3212, 4294901760
    %3214 = vmatpush1.msra.mxu0 %v3213
    %3215 = vmatprep.subr.mxu0 0.0
    %v3216 = vand.u32 %v3023, 4294901760
    %v3217 = vsub.f32 %v3023, %v3216
    %v3218 = vand.u32 %v3217, 4294901760
    %v3219 = vsub.f32 %v3217, %v3218
    %v3220 = vand.u32 %v3219, 4294901760
    %3221 = vmatpush1.msra.mxu0 %v3220
    %3222 = vmatprep.subr.mxu0 0.0
    %v3223 = vand.u32 %v3022, 4294901760
    %v3224 = vsub.f32 %v3022, %v3223
    %v3225 = vand.u32 %v3224, 4294901760
    %v3226 = vsub.f32 %v3224, %v3225
    %v3227 = vand.u32 %v3226, 4294901760
    %3228 = vmatpush1.msra.mxu0 %v3227
    %3229 = vmatprep.subr.mxu0 0.0
    %v3230 = vand.u32 %v3021, 4294901760
    %v3231 = vsub.f32 %v3021, %v3230
    %v3232 = vand.u32 %v3231, 4294901760
    %v3233 = vsub.f32 %v3231, %v3232
    %v3234 = vand.u32 %v3233, 4294901760
    %3235 = vmatpush1.msra.mxu0 %v3234
    %3236 = vmatprep.subr.mxu0 0.0
    %v3237 = vand.u32 %v3020, 4294901760
    %v3238 = vsub.f32 %v3020, %v3237
    %v3239 = vand.u32 %v3238, 4294901760
    %v3240 = vsub.f32 %v3238, %v3239
    %v3241 = vand.u32 %v3240, 4294901760
    %3242 = vmatpush1.msra.mxu0 %v3241
    %3243 = vmatprep.subr.mxu0 0.0
    %3244 = vmatpush2.msra.mxu0 0.0
    %3245 = vmatprep.subr.mxu0 0.0
    %3246 = vmatpush2.msra.mxu0 0.0
    %3247 = vmatprep.subr.mxu0 0.0
    %3248 = vmatpush2.msra.mxu0 0.0
    %3249 = vmatprep.subr.mxu0 0.0
    %3250 = vmatpush2.msra.mxu0 0.0
    %3251 = vmatprep.subr.mxu0 0.0
    %3252 = vmatpush2.msra.mxu0 0.0
    %3253 = vmatprep.subr.mxu0 0.0
    %3254 = vmatpush2.msra.mxu0 0.0
    %3255 = vmatprep.subr.mxu0 0.0
    %3256 = vmatpush2.msra.mxu0 0.0
    %3257 = vmatprep.subr.mxu0 0.0
    %3258 = vmatpush2.msra.mxu0 0.0
    %3259 = vmatprep.subr.mxu0 0.0
    %3260 = vmatpush2.msra.mxu0 0.0
    %3261 = vmatprep.subr.mxu0 0.0
    %3262 = vmatpush2.msra.mxu0 0.0
    %3263 = vmatprep.subr.mxu0 0.0
    %3264 = vmatpush2.msra.mxu0 0.0
    %3265 = vmatprep.subr.mxu0 0.0
    %3266 = vmatpush2.msra.mxu0 0.0
    %3267 = vmatprep.subr.mxu0 0.0
    %3268 = vmatpush2.msra.mxu0 0.0
    %3269 = vmatprep.subr.mxu0 0.0
    %3270 = vmatpush2.msra.mxu0 0.0
    %3271 = vmatprep.subr.mxu0 0.0
    %3272 = vmatpush2.msra.mxu0 0.0
    %3273 = vmatprep.subr.mxu0 0.0
    %3274 = vmatpush2.msra.mxu0 0.0
    %3275 = vmatprep.mubr.f32.mxu0 0.0
    %v3276 = vand.u32 %v3018, 4294901760
    %3277 = vmatmul.mubr.f32.gmra.mxu0 %v3276
    %v3278 = vpop.f32.mrf.mxu0
    %v3279 = vadd.f32 %v3128, %v3278
    %v3280 = vpop.f32.mrf.mxu0
    %3281 = vdwg.mxu0
    %3282 = vmatprep.subr.mxu0 0.0
    %v3283 = vand.u32 %v3035, 4294901760
    %v3284 = vsub.f32 %v3035, %v3283
    %3285 = vmatpush1.msra.mxu0 %v3284
    %3286 = vmatprep.subr.mxu0 0.0
    %v3287 = vand.u32 %v3034, 4294901760
    %v3288 = vsub.f32 %v3034, %v3287
    %3289 = vmatpush1.msra.mxu0 %v3288
    %3290 = vmatprep.subr.mxu0 0.0
    %v3291 = vand.u32 %v3033, 4294901760
    %v3292 = vsub.f32 %v3033, %v3291
    %3293 = vmatpush1.msra.mxu0 %v3292
    %3294 = vmatprep.subr.mxu0 0.0
    %v3295 = vand.u32 %v3032, 4294901760
    %v3296 = vsub.f32 %v3032, %v3295
    %3297 = vmatpush1.msra.mxu0 %v3296
    %3298 = vmatprep.subr.mxu0 0.0
    %v3299 = vand.u32 %v3031, 4294901760
    %v3300 = vsub.f32 %v3031, %v3299
    %3301 = vmatpush1.msra.mxu0 %v3300
    %3302 = vmatprep.subr.mxu0 0.0
    %v3303 = vand.u32 %v3030, 4294901760
    %v3304 = vsub.f32 %v3030, %v3303
    %3305 = vmatpush1.msra.mxu0 %v3304
    %3306 = vmatprep.subr.mxu0 0.0
    %v3307 = vand.u32 %v3029, 4294901760
    %v3308 = vsub.f32 %v3029, %v3307
    %3309 = vmatpush1.msra.mxu0 %v3308
    %3310 = vmatprep.subr.mxu0 0.0
    %v3311 = vand.u32 %v3028, 4294901760
    %v3312 = vsub.f32 %v3028, %v3311
    %3313 = vmatpush1.msra.mxu0 %v3312
    %3314 = vmatprep.subr.mxu0 0.0
    %v3315 = vand.u32 %v3027, 4294901760
    %v3316 = vsub.f32 %v3027, %v3315
    %3317 = vmatpush1.msra.mxu0 %v3316
    %3318 = vmatprep.subr.mxu0 0.0
    %v3319 = vand.u32 %v3026, 4294901760
    %v3320 = vsub.f32 %v3026, %v3319
    %3321 = vmatpush1.msra.mxu0 %v3320
    %3322 = vmatprep.subr.mxu0 0.0
    %v3323 = vand.u32 %v3025, 4294901760
    %v3324 = vsub.f32 %v3025, %v3323
    %3325 = vmatpush1.msra.mxu0 %v3324
    %3326 = vmatprep.subr.mxu0 0.0
    %v3327 = vand.u32 %v3024, 4294901760
    %v3328 = vsub.f32 %v3024, %v3327
    %3329 = vmatpush1.msra.mxu0 %v3328
    %3330 = vmatprep.subr.mxu0 0.0
    %v3331 = vand.u32 %v3023, 4294901760
    %v3332 = vsub.f32 %v3023, %v3331
    %3333 = vmatpush1.msra.mxu0 %v3332
    %3334 = vmatprep.subr.mxu0 0.0
    %v3335 = vand.u32 %v3022, 4294901760
    %v3336 = vsub.f32 %v3022, %v3335
    %3337 = vmatpush1.msra.mxu0 %v3336
    %3338 = vmatprep.subr.mxu0 0.0
    %v3339 = vand.u32 %v3021, 4294901760
    %v3340 = vsub.f32 %v3021, %v3339
    %3341 = vmatpush1.msra.mxu0 %v3340
    %3342 = vmatprep.subr.mxu0 0.0
    %v3343 = vand.u32 %v3020, 4294901760
    %v3344 = vsub.f32 %v3020, %v3343
    %3345 = vmatpush1.msra.mxu0 %v3344
    %3346 = vmatprep.subr.mxu0 0.0
    %3347 = vmatpush2.msra.mxu0 0.0
    %3348 = vmatprep.subr.mxu0 0.0
    %3349 = vmatpush2.msra.mxu0 0.0
    %3350 = vmatprep.subr.mxu0 0.0
    %3351 = vmatpush2.msra.mxu0 0.0
    %3352 = vmatprep.subr.mxu0 0.0
    %3353 = vmatpush2.msra.mxu0 0.0
    %3354 = vmatprep.subr.mxu0 0.0
    %3355 = vmatpush2.msra.mxu0 0.0
    %3356 = vmatprep.subr.mxu0 0.0
    %3357 = vmatpush2.msra.mxu0 0.0
    %3358 = vmatprep.subr.mxu0 0.0
    %3359 = vmatpush2.msra.mxu0 0.0
    %3360 = vmatprep.subr.mxu0 0.0
    %3361 = vmatpush2.msra.mxu0 0.0
    %3362 = vmatprep.subr.mxu0 0.0
    %3363 = vmatpush2.msra.mxu0 0.0
    %3364 = vmatprep.subr.mxu0 0.0
    %3365 = vmatpush2.msra.mxu0 0.0
    %3366 = vmatprep.subr.mxu0 0.0
    %3367 = vmatpush2.msra.mxu0 0.0
    %3368 = vmatprep.subr.mxu0 0.0
    %3369 = vmatpush2.msra.mxu0 0.0
    %3370 = vmatprep.subr.mxu0 0.0
    %3371 = vmatpush2.msra.mxu0 0.0
    %3372 = vmatprep.subr.mxu0 0.0
    %3373 = vmatpush2.msra.mxu0 0.0
    %3374 = vmatprep.subr.mxu0 0.0
    %3375 = vmatpush2.msra.mxu0 0.0
    %3376 = vmatprep.subr.mxu0 0.0
    %3377 = vmatpush2.msra.mxu0 0.0
    %3378 = vmatprep.mubr.f32.mxu0 0.0
    %v3379 = vand.u32 %v3018, 4294901760
    %v3380 = vsub.f32 %v3018, %v3379
    %3381 = vmatmul.mubr.f32.gmra.mxu0 %v3380
    %v3382 = vpop.f32.mrf.mxu0
    %v3383 = vadd.f32 %v3279, %v3382
    %v3384 = vpop.f32.mrf.mxu0
    %3385 = vdwg.mxu0
    %3386 = vmatprep.subr.mxu0 0.0
    %v3387 = vand.u32 %v3035, 4294901760
    %3388 = vmatpush1.msra.mxu0 %v3387
    %3389 = vmatprep.subr.mxu0 0.0
    %v3390 = vand.u32 %v3034, 4294901760
    %3391 = vmatpush1.msra.mxu0 %v3390
    %3392 = vmatprep.subr.mxu0 0.0
    %v3393 = vand.u32 %v3033, 4294901760
    %3394 = vmatpush1.msra.mxu0 %v3393
    %3395 = vmatprep.subr.mxu0 0.0
    %v3396 = vand.u32 %v3032, 4294901760
    %3397 = vmatpush1.msra.mxu0 %v3396
    %3398 = vmatprep.subr.mxu0 0.0
    %v3399 = vand.u32 %v3031, 4294901760
    %3400 = vmatpush1.msra.mxu0 %v3399
    %3401 = vmatprep.subr.mxu0 0.0
    %v3402 = vand.u32 %v3030, 4294901760
    %3403 = vmatpush1.msra.mxu0 %v3402
    %3404 = vmatprep.subr.mxu0 0.0
    %v3405 = vand.u32 %v3029, 4294901760
    %3406 = vmatpush1.msra.mxu0 %v3405
    %3407 = vmatprep.subr.mxu0 0.0
    %v3408 = vand.u32 %v3028, 4294901760
    %3409 = vmatpush1.msra.mxu0 %v3408
    %3410 = vmatprep.subr.mxu0 0.0
    %v3411 = vand.u32 %v3027, 4294901760
    %3412 = vmatpush1.msra.mxu0 %v3411
    %3413 = vmatprep.subr.mxu0 0.0
    %v3414 = vand.u32 %v3026, 4294901760
    %3415 = vmatpush1.msra.mxu0 %v3414
    %3416 = vmatprep.subr.mxu0 0.0
    %v3417 = vand.u32 %v3025, 4294901760
    %3418 = vmatpush1.msra.mxu0 %v3417
    %3419 = vmatprep.subr.mxu0 0.0
    %v3420 = vand.u32 %v3024, 4294901760
    %3421 = vmatpush1.msra.mxu0 %v3420
    %3422 = vmatprep.subr.mxu0 0.0
    %v3423 = vand.u32 %v3023, 4294901760
    %3424 = vmatpush1.msra.mxu0 %v3423
    %3425 = vmatprep.subr.mxu0 0.0
    %v3426 = vand.u32 %v3022, 4294901760
    %3427 = vmatpush1.msra.mxu0 %v3426
    %3428 = vmatprep.subr.mxu0 0.0
    %v3429 = vand.u32 %v3021, 4294901760
    %3430 = vmatpush1.msra.mxu0 %v3429
    %3431 = vmatprep.subr.mxu0 0.0
    %v3432 = vand.u32 %v3020, 4294901760
    %3433 = vmatpush1.msra.mxu0 %v3432
    %3434 = vmatprep.subr.mxu0 0.0
    %3435 = vmatpush2.msra.mxu0 0.0
    %3436 = vmatprep.subr.mxu0 0.0
    %3437 = vmatpush2.msra.mxu0 0.0
    %3438 = vmatprep.subr.mxu0 0.0
    %3439 = vmatpush2.msra.mxu0 0.0
    %3440 = vmatprep.subr.mxu0 0.0
    %3441 = vmatpush2.msra.mxu0 0.0
    %3442 = vmatprep.subr.mxu0 0.0
    %3443 = vmatpush2.msra.mxu0 0.0
    %3444 = vmatprep.subr.mxu0 0.0
    %3445 = vmatpush2.msra.mxu0 0.0
    %3446 = vmatprep.subr.mxu0 0.0
    %3447 = vmatpush2.msra.mxu0 0.0
    %3448 = vmatprep.subr.mxu0 0.0
    %3449 = vmatpush2.msra.mxu0 0.0
    %3450 = vmatprep.subr.mxu0 0.0
    %3451 = vmatpush2.msra.mxu0 0.0
    %3452 = vmatprep.subr.mxu0 0.0
    %3453 = vmatpush2.msra.mxu0 0.0
    %3454 = vmatprep.subr.mxu0 0.0
    %3455 = vmatpush2.msra.mxu0 0.0
    %3456 = vmatprep.subr.mxu0 0.0
    %3457 = vmatpush2.msra.mxu0 0.0
    %3458 = vmatprep.subr.mxu0 0.0
    %3459 = vmatpush2.msra.mxu0 0.0
    %3460 = vmatprep.subr.mxu0 0.0
    %3461 = vmatpush2.msra.mxu0 0.0
    %3462 = vmatprep.subr.mxu0 0.0
    %3463 = vmatpush2.msra.mxu0 0.0
    %3464 = vmatprep.subr.mxu0 0.0
    %3465 = vmatpush2.msra.mxu0 0.0
    %3466 = vmatprep.mubr.f32.mxu0 0.0
    %v3467 = vand.u32 %v3018, 4294901760
    %v3468 = vsub.f32 %v3018, %v3467
    %v3469 = vand.u32 %v3468, 4294901760
    %3470 = vmatmul.mubr.f32.gmra.mxu0 %v3469
    %v3471 = vpop.f32.mrf.mxu0
    %v3472 = vadd.f32 %v3383, %v3471
    %v3473 = vpop.f32.mrf.mxu0
    %3474 = vdwg.mxu0
    %3475 = vmatprep.subr.mxu0 0.0
    %v3476 = vand.u32 %v3035, 4294901760
    %v3477 = vsub.f32 %v3035, %v3476
    %v3478 = vand.u32 %v3477, 4294901760
    %3479 = vmatpush1.msra.mxu0 %v3478
    %3480 = vmatprep.subr.mxu0 0.0
    %v3481 = vand.u32 %v3034, 4294901760
    %v3482 = vsub.f32 %v3034, %v3481
    %v3483 = vand.u32 %v3482, 4294901760
    %3484 = vmatpush1.msra.mxu0 %v3483
    %3485 = vmatprep.subr.mxu0 0.0
    %v3486 = vand.u32 %v3033, 4294901760
    %v3487 = vsub.f32 %v3033, %v3486
    %v3488 = vand.u32 %v3487, 4294901760
    %3489 = vmatpush1.msra.mxu0 %v3488
    %3490 = vmatprep.subr.mxu0 0.0
    %v3491 = vand.u32 %v3032, 4294901760
    %v3492 = vsub.f32 %v3032, %v3491
    %v3493 = vand.u32 %v3492, 4294901760
    %3494 = vmatpush1.msra.mxu0 %v3493
    %3495 = vmatprep.subr.mxu0 0.0
    %v3496 = vand.u32 %v3031, 4294901760
    %v3497 = vsub.f32 %v3031, %v3496
    %v3498 = vand.u32 %v3497, 4294901760
    %3499 = vmatpush1.msra.mxu0 %v3498
    %3500 = vmatprep.subr.mxu0 0.0
    %v3501 = vand.u32 %v3030, 4294901760
    %v3502 = vsub.f32 %v3030, %v3501
    %v3503 = vand.u32 %v3502, 4294901760
    %3504 = vmatpush1.msra.mxu0 %v3503
    %3505 = vmatprep.subr.mxu0 0.0
    %v3506 = vand.u32 %v3029, 4294901760
    %v3507 = vsub.f32 %v3029, %v3506
    %v3508 = vand.u32 %v3507, 4294901760
    %3509 = vmatpush1.msra.mxu0 %v3508
    %3510 = vmatprep.subr.mxu0 0.0
    %v3511 = vand.u32 %v3028, 4294901760
    %v3512 = vsub.f32 %v3028, %v3511
    %v3513 = vand.u32 %v3512, 4294901760
    %3514 = vmatpush1.msra.mxu0 %v3513
    %3515 = vmatprep.subr.mxu0 0.0
    %v3516 = vand.u32 %v3027, 4294901760
    %v3517 = vsub.f32 %v3027, %v3516
    %v3518 = vand.u32 %v3517, 4294901760
    %3519 = vmatpush1.msra.mxu0 %v3518
    %3520 = vmatprep.subr.mxu0 0.0
    %v3521 = vand.u32 %v3026, 4294901760
    %v3522 = vsub.f32 %v3026, %v3521
    %v3523 = vand.u32 %v3522, 4294901760
    %3524 = vmatpush1.msra.mxu0 %v3523
    %3525 = vmatprep.subr.mxu0 0.0
    %v3526 = vand.u32 %v3025, 4294901760
    %v3527 = vsub.f32 %v3025, %v3526
    %v3528 = vand.u32 %v3527, 4294901760
    %3529 = vmatpush1.msra.mxu0 %v3528
    %3530 = vmatprep.subr.mxu0 0.0
    %v3531 = vand.u32 %v3024, 4294901760
    %v3532 = vsub.f32 %v3024, %v3531
    %v3533 = vand.u32 %v3532, 4294901760
    %3534 = vmatpush1.msra.mxu0 %v3533
    %3535 = vmatprep.subr.mxu0 0.0
    %v3536 = vand.u32 %v3023, 4294901760
    %v3537 = vsub.f32 %v3023, %v3536
    %v3538 = vand.u32 %v3537, 4294901760
    %3539 = vmatpush1.msra.mxu0 %v3538
    %3540 = vmatprep.subr.mxu0 0.0
    %v3541 = vand.u32 %v3022, 4294901760
    %v3542 = vsub.f32 %v3022, %v3541
    %v3543 = vand.u32 %v3542, 4294901760
    %3544 = vmatpush1.msra.mxu0 %v3543
    %3545 = vmatprep.subr.mxu0 0.0
    %v3546 = vand.u32 %v3021, 4294901760
    %v3547 = vsub.f32 %v3021, %v3546
    %v3548 = vand.u32 %v3547, 4294901760
    %3549 = vmatpush1.msra.mxu0 %v3548
    %3550 = vmatprep.subr.mxu0 0.0
    %v3551 = vand.u32 %v3020, 4294901760
    %v3552 = vsub.f32 %v3020, %v3551
    %v3553 = vand.u32 %v3552, 4294901760
    %3554 = vmatpush1.msra.mxu0 %v3553
    %3555 = vmatprep.subr.mxu0 0.0
    %3556 = vmatpush2.msra.mxu0 0.0
    %3557 = vmatprep.subr.mxu0 0.0
    %3558 = vmatpush2.msra.mxu0 0.0
    %3559 = vmatprep.subr.mxu0 0.0
    %3560 = vmatpush2.msra.mxu0 0.0
    %3561 = vmatprep.subr.mxu0 0.0
    %3562 = vmatpush2.msra.mxu0 0.0
    %3563 = vmatprep.subr.mxu0 0.0
    %3564 = vmatpush2.msra.mxu0 0.0
    %3565 = vmatprep.subr.mxu0 0.0
    %3566 = vmatpush2.msra.mxu0 0.0
    %3567 = vmatprep.subr.mxu0 0.0
    %3568 = vmatpush2.msra.mxu0 0.0
    %3569 = vmatprep.subr.mxu0 0.0
    %3570 = vmatpush2.msra.mxu0 0.0
    %3571 = vmatprep.subr.mxu0 0.0
    %3572 = vmatpush2.msra.mxu0 0.0
    %3573 = vmatprep.subr.mxu0 0.0
    %3574 = vmatpush2.msra.mxu0 0.0
    %3575 = vmatprep.subr.mxu0 0.0
    %3576 = vmatpush2.msra.mxu0 0.0
    %3577 = vmatprep.subr.mxu0 0.0
    %3578 = vmatpush2.msra.mxu0 0.0
    %3579 = vmatprep.subr.mxu0 0.0
    %3580 = vmatpush2.msra.mxu0 0.0
    %3581 = vmatprep.subr.mxu0 0.0
    %3582 = vmatpush2.msra.mxu0 0.0
    %3583 = vmatprep.subr.mxu0 0.0
    %3584 = vmatpush2.msra.mxu0 0.0
    %3585 = vmatprep.subr.mxu0 0.0
    %3586 = vmatpush2.msra.mxu0 0.0
    %3587 = vmatprep.mubr.f32.mxu0 0.0
    %v3588 = vand.u32 %v3018, 4294901760
    %3589 = vmatmul.mubr.f32.gmra.mxu0 %v3588
    %v3590 = vpop.f32.mrf.mxu0
    %v3591 = vadd.f32 %v3472, %v3590
    %v3592 = vpop.f32.mrf.mxu0
    %3593 = vdwg.mxu0
    %3594 = vmatprep.subr.mxu0 0.0
    %v3595 = vand.u32 %v3035, 4294901760
    %3596 = vmatpush1.msra.mxu0 %v3595
    %3597 = vmatprep.subr.mxu0 0.0
    %v3598 = vand.u32 %v3034, 4294901760
    %3599 = vmatpush1.msra.mxu0 %v3598
    %3600 = vmatprep.subr.mxu0 0.0
    %v3601 = vand.u32 %v3033, 4294901760
    %3602 = vmatpush1.msra.mxu0 %v3601
    %3603 = vmatprep.subr.mxu0 0.0
    %v3604 = vand.u32 %v3032, 4294901760
    %3605 = vmatpush1.msra.mxu0 %v3604
    %3606 = vmatprep.subr.mxu0 0.0
    %v3607 = vand.u32 %v3031, 4294901760
    %3608 = vmatpush1.msra.mxu0 %v3607
    %3609 = vmatprep.subr.mxu0 0.0
    %v3610 = vand.u32 %v3030, 4294901760
    %3611 = vmatpush1.msra.mxu0 %v3610
    %3612 = vmatprep.subr.mxu0 0.0
    %v3613 = vand.u32 %v3029, 4294901760
    %3614 = vmatpush1.msra.mxu0 %v3613
    %3615 = vmatprep.subr.mxu0 0.0
    %v3616 = vand.u32 %v3028, 4294901760
    %3617 = vmatpush1.msra.mxu0 %v3616
    %3618 = vmatprep.subr.mxu0 0.0
    %v3619 = vand.u32 %v3027, 4294901760
    %3620 = vmatpush1.msra.mxu0 %v3619
    %3621 = vmatprep.subr.mxu0 0.0
    %v3622 = vand.u32 %v3026, 4294901760
    %3623 = vmatpush1.msra.mxu0 %v3622
    %3624 = vmatprep.subr.mxu0 0.0
    %v3625 = vand.u32 %v3025, 4294901760
    %3626 = vmatpush1.msra.mxu0 %v3625
    %3627 = vmatprep.subr.mxu0 0.0
    %v3628 = vand.u32 %v3024, 4294901760
    %3629 = vmatpush1.msra.mxu0 %v3628
    %3630 = vmatprep.subr.mxu0 0.0
    %v3631 = vand.u32 %v3023, 4294901760
    %3632 = vmatpush1.msra.mxu0 %v3631
    %3633 = vmatprep.subr.mxu0 0.0
    %v3634 = vand.u32 %v3022, 4294901760
    %3635 = vmatpush1.msra.mxu0 %v3634
    %3636 = vmatprep.subr.mxu0 0.0
    %v3637 = vand.u32 %v3021, 4294901760
    %3638 = vmatpush1.msra.mxu0 %v3637
    %3639 = vmatprep.subr.mxu0 0.0
    %v3640 = vand.u32 %v3020, 4294901760
    %3641 = vmatpush1.msra.mxu0 %v3640
    %3642 = vmatprep.subr.mxu0 0.0
    %3643 = vmatpush2.msra.mxu0 0.0
    %3644 = vmatprep.subr.mxu0 0.0
    %3645 = vmatpush2.msra.mxu0 0.0
    %3646 = vmatprep.subr.mxu0 0.0
    %3647 = vmatpush2.msra.mxu0 0.0
    %3648 = vmatprep.subr.mxu0 0.0
    %3649 = vmatpush2.msra.mxu0 0.0
    %3650 = vmatprep.subr.mxu0 0.0
    %3651 = vmatpush2.msra.mxu0 0.0
    %3652 = vmatprep.subr.mxu0 0.0
    %3653 = vmatpush2.msra.mxu0 0.0
    %3654 = vmatprep.subr.mxu0 0.0
    %3655 = vmatpush2.msra.mxu0 0.0
    %3656 = vmatprep.subr.mxu0 0.0
    %3657 = vmatpush2.msra.mxu0 0.0
    %3658 = vmatprep.subr.mxu0 0.0
    %3659 = vmatpush2.msra.mxu0 0.0
    %3660 = vmatprep.subr.mxu0 0.0
    %3661 = vmatpush2.msra.mxu0 0.0
    %3662 = vmatprep.subr.mxu0 0.0
    %3663 = vmatpush2.msra.mxu0 0.0
    %3664 = vmatprep.subr.mxu0 0.0
    %3665 = vmatpush2.msra.mxu0 0.0
    %3666 = vmatprep.subr.mxu0 0.0
    %3667 = vmatpush2.msra.mxu0 0.0
    %3668 = vmatprep.subr.mxu0 0.0
    %3669 = vmatpush2.msra.mxu0 0.0
    %3670 = vmatprep.subr.mxu0 0.0
    %3671 = vmatpush2.msra.mxu0 0.0
    %3672 = vmatprep.subr.mxu0 0.0
    %3673 = vmatpush2.msra.mxu0 0.0
    %3674 = vmatprep.mubr.f32.mxu0 0.0
    %v3675 = vand.u32 %v3018, 4294901760
    %3676 = vmatmul.mubr.f32.gmra.mxu0 %v3675
    %v3677 = vpop.f32.mrf.mxu0
    %v3678 = vadd.f32 %v3591, %v3677
    %v3679 = vpop.f32.mrf.mxu0
    %3680 = vdwg.mxu0
    %v3681 = vmul.f32 %v3678, 0.5
    %v3682 = vmul.f32 %v3678, 0.70710677
    %v3683 = vand.u32 2147483647, %v3682
    %v3684 = vmul.f32 %v3683, 0.3275911
    %v3685 = vadd.f32 %v3684, 1.0
    %v3686 = vrcp.pop %v3685
    %v3687 = vmul.f32 1.0, %v3686
    %v3688 = vmul.f32 %v3687, 1.0614054
    %v3689 = vadd.f32 %v3688, -1.4531521
    %v3690 = vmul.f32 %v3689, %v3687
    %v3691 = vadd.f32 %v3690, 1.4214138
    %v3692 = vmul.f32 %v3691, %v3687
    %v3693 = vadd.f32 %v3692, -0.28449672
    %v3694 = vmul.f32 %v3693, %v3687
    %v3695 = vadd.f32 %v3694, 0.2548296
    %v3696 = vmul.f32 %v3695, %v3687
    %v3697 = vmul.f32 %v3683, %v3683
    %v3698 = vsub.f32 0.0, %v3697
    %v3699 = vmul.f32 %v3698, 1.442695
    %v3700 = vpow.pop %v3699
    %v3701 = vmul.f32 %v3696, %v3700
    %v3702 = vsub.f32 1.0, %v3701
    %vm3703 = vcmp.lt.f32.partialorder %v3682, 0.0
    %v3704 = vsub.f32 0.0, %v3702
    %v3705 = vsel %vm3703, %v3704, %v3702
    %v3706 = vadd.f32 %v3705, 1.0
    %v3707 = vmul.f32 %v3681, %v3706
    %v3708 = vld [vmem:[%s4] sm:$0xff]
    %v3709 = vld [vmem:[%s4 + $0x8] sm:$0xff]
    %v3710 = vld [vmem:[%s4 + $0x10] sm:$0xff]
    %v3711 = vld [vmem:[%s4 + $0x18] sm:$0xff]
    %v3712 = vld [vmem:[%s4 + $0x20] sm:$0xff]
    %v3713 = vld [vmem:[%s4 + $0x28] sm:$0xff]
    %v3714 = vld [vmem:[%s4 + $0x30] sm:$0xff]
    %v3715 = vld [vmem:[%s4 + $0x38] sm:$0xff]
    %v3716 = vld [vmem:[%s4 + $0x40] sm:$0xff]
    %v3717 = vld [vmem:[%s4 + $0x48] sm:$0xff]
    %v3718 = vld [vmem:[%s4 + $0x50] sm:$0xff]
    %v3719 = vld [vmem:[%s4 + $0x58] sm:$0xff]
    %v3720 = vld [vmem:[%s4 + $0x60] sm:$0xff]
    %v3721 = vld [vmem:[%s4 + $0x68] sm:$0xff]
    %v3722 = vld [vmem:[%s4 + $0x70] sm:$0xff]
    %v3723 = vld [vmem:[%s4 + $0x78] sm:$0xff]
    %v3724 = vld [vmem:[%s5] sm:$0x1]
    %v3726 = vlaneseq
    %v3727 = vshrl.u32 %v3726, 7
    %v3728 = vsub.s32 0, %v3727
    %v3729 = vrot.slane %v3724, %v3728
    %3731 = vmatprep.subr.mxu0 0.0
    %v3732 = vand.u32 %v3723, 4294901760
    %3733 = vmatpush1.msra.mxu0 %v3732
    %3734 = vmatprep.subr.mxu0 0.0
    %v3735 = vand.u32 %v3722, 4294901760
    %3736 = vmatpush1.msra.mxu0 %v3735
    %3737 = vmatprep.subr.mxu0 0.0
    %v3738 = vand.u32 %v3721, 4294901760
    %3739 = vmatpush1.msra.mxu0 %v3738
    %3740 = vmatprep.subr.mxu0 0.0
    %v3741 = vand.u32 %v3720, 4294901760
    %3742 = vmatpush1.msra.mxu0 %v3741
    %3743 = vmatprep.subr.mxu0 0.0
    %v3744 = vand.u32 %v3719, 4294901760
    %3745 = vmatpush1.msra.mxu0 %v3744
    %3746 = vmatprep.subr.mxu0 0.0
    %v3747 = vand.u32 %v3718, 4294901760
    %3748 = vmatpush1.msra.mxu0 %v3747
    %3749 = vmatprep.subr.mxu0 0.0
    %v3750 = vand.u32 %v3717, 4294901760
    %3751 = vmatpush1.msra.mxu0 %v3750
    %3752 = vmatprep.subr.mxu0 0.0
    %v3753 = vand.u32 %v3716, 4294901760
    %3754 = vmatpush1.msra.mxu0 %v3753
    %3755 = vmatprep.subr.mxu0 0.0
    %v3756 = vand.u32 %v3715, 4294901760
    %3757 = vmatpush1.msra.mxu0 %v3756
    %3758 = vmatprep.subr.mxu0 0.0
    %v3759 = vand.u32 %v3714, 4294901760
    %3760 = vmatpush1.msra.mxu0 %v3759
    %3761 = vmatprep.subr.mxu0 0.0
    %v3762 = vand.u32 %v3713, 4294901760
    %3763 = vmatpush1.msra.mxu0 %v3762
    %3764 = vmatprep.subr.mxu0 0.0
    %v3765 = vand.u32 %v3712, 4294901760
    %3766 = vmatpush1.msra.mxu0 %v3765
    %3767 = vmatprep.subr.mxu0 0.0
    %v3768 = vand.u32 %v3711, 4294901760
    %3769 = vmatpush1.msra.mxu0 %v3768
    %3770 = vmatprep.subr.mxu0 0.0
    %v3771 = vand.u32 %v3710, 4294901760
    %3772 = vmatpush1.msra.mxu0 %v3771
    %3773 = vmatprep.subr.mxu0 0.0
    %v3774 = vand.u32 %v3709, 4294901760
    %3775 = vmatpush1.msra.mxu0 %v3774
    %3776 = vmatprep.subr.mxu0 0.0
    %v3777 = vand.u32 %v3708, 4294901760
    %3778 = vmatpush1.msra.mxu0 %v3777
    %3779 = vmatprep.subr.mxu0 0.0
    %3780 = vmatpush2.msra.mxu0 0.0
    %3781 = vmatprep.subr.mxu0 0.0
    %3782 = vmatpush2.msra.mxu0 0.0
    %3783 = vmatprep.subr.mxu0 0.0
    %3784 = vmatpush2.msra.mxu0 0.0
    %3785 = vmatprep.subr.mxu0 0.0
    %3786 = vmatpush2.msra.mxu0 0.0
    %3787 = vmatprep.subr.mxu0 0.0
    %3788 = vmatpush2.msra.mxu0 0.0
    %3789 = vmatprep.subr.mxu0 0.0
    %3790 = vmatpush2.msra.mxu0 0.0
    %3791 = vmatprep.subr.mxu0 0.0
    %3792 = vmatpush2.msra.mxu0 0.0
    %3793 = vmatprep.subr.mxu0 0.0
    %3794 = vmatpush2.msra.mxu0 0.0
    %3795 = vmatprep.subr.mxu0 0.0
    %3796 = vmatpush2.msra.mxu0 0.0
    %3797 = vmatprep.subr.mxu0 0.0
    %3798 = vmatpush2.msra.mxu0 0.0
    %3799 = vmatprep.subr.mxu0 0.0
    %3800 = vmatpush2.msra.mxu0 0.0
    %3801 = vmatprep.subr.mxu0 0.0
    %3802 = vmatpush2.msra.mxu0 0.0
    %3803 = vmatprep.subr.mxu0 0.0
    %3804 = vmatpush2.msra.mxu0 0.0
    %3805 = vmatprep.subr.mxu0 0.0
    %3806 = vmatpush2.msra.mxu0 0.0
    %3807 = vmatprep.subr.mxu0 0.0
    %3808 = vmatpush2.msra.mxu0 0.0
    %3809 = vmatprep.subr.mxu0 0.0
    %3810 = vmatpush2.msra.mxu0 0.0
    %3811 = vmatprep.mubr.f32.mxu0 0.0
    %v3812 = vand.u32 %v3707, 4294901760
    %v3813 = vsub.f32 %v3707, %v3812
    %v3814 = vand.u32 %v3813, 4294901760
    %v3815 = vsub.f32 %v3813, %v3814
    %v3816 = vand.u32 %v3815, 4294901760
    %3817 = vmatmul.mubr.f32.gmra.mxu0 %v3816
    %v3818 = vpop.f32.mrf.mxu0
    %v3819 = vadd.f32 %v3729, %v3818
    %v3820 = vpop.f32.mrf.mxu0
    %3821 = vdwg.mxu0
    %3822 = vmatprep.subr.mxu0 0.0
    %v3823 = vand.u32 %v3723, 4294901760
    %v3824 = vsub.f32 %v3723, %v3823
    %v3825 = vand.u32 %v3824, 4294901760
    %v3826 = vsub.f32 %v3824, %v3825
    %v3827 = vand.u32 %v3826, 4294901760
    %3828 = vmatpush1.msra.mxu0 %v3827
    %3829 = vmatprep.subr.mxu0 0.0
    %v3830 = vand.u32 %v3722, 4294901760
    %v3831 = vsub.f32 %v3722, %v3830
    %v3832 = vand.u32 %v3831, 4294901760
    %v3833 = vsub.f32 %v3831, %v3832
    %v3834 = vand.u32 %v3833, 4294901760
    %3835 = vmatpush1.msra.mxu0 %v3834
    %3836 = vmatprep.subr.mxu0 0.0
    %v3837 = vand.u32 %v3721, 4294901760
    %v3838 = vsub.f32 %v3721, %v3837
    %v3839 = vand.u32 %v3838, 4294901760
    %v3840 = vsub.f32 %v3838, %v3839
    %v3841 = vand.u32 %v3840, 4294901760
    %3842 = vmatpush1.msra.mxu0 %v3841
    %3843 = vmatprep.subr.mxu0 0.0
    %v3844 = vand.u32 %v3720, 4294901760
    %v3845 = vsub.f32 %v3720, %v3844
    %v3846 = vand.u32 %v3845, 4294901760
    %v3847 = vsub.f32 %v3845, %v3846
    %v3848 = vand.u32 %v3847, 4294901760
    %3849 = vmatpush1.msra.mxu0 %v3848
    %3850 = vmatprep.subr.mxu0 0.0
    %v3851 = vand.u32 %v3719, 4294901760
    %v3852 = vsub.f32 %v3719, %v3851
    %v3853 = vand.u32 %v3852, 4294901760
    %v3854 = vsub.f32 %v3852, %v3853
    %v3855 = vand.u32 %v3854, 4294901760
    %3856 = vmatpush1.msra.mxu0 %v3855
    %3857 = vmatprep.subr.mxu0 0.0
    %v3858 = vand.u32 %v3718, 4294901760
    %v3859 = vsub.f32 %v3718, %v3858
    %v3860 = vand.u32 %v3859, 4294901760
    %v3861 = vsub.f32 %v3859, %v3860
    %v3862 = vand.u32 %v3861, 4294901760
    %3863 = vmatpush1.msra.mxu0 %v3862
    %3864 = vmatprep.subr.mxu0 0.0
    %v3865 = vand.u32 %v3717, 4294901760
    %v3866 = vsub.f32 %v3717, %v3865
    %v3867 = vand.u32 %v3866, 4294901760
    %v3868 = vsub.f32 %v3866, %v3867
    %v3869 = vand.u32 %v3868, 4294901760
    %3870 = vmatpush1.msra.mxu0 %v3869
    %3871 = vmatprep.subr.mxu0 0.0
    %v3872 = vand.u32 %v3716, 4294901760
    %v3873 = vsub.f32 %v3716, %v3872
    %v3874 = vand.u32 %v3873, 4294901760
    %v3875 = vsub.f32 %v3873, %v3874
    %v3876 = vand.u32 %v3875, 4294901760
    %3877 = vmatpush1.msra.mxu0 %v3876
    %3878 = vmatprep.subr.mxu0 0.0
    %v3879 = vand.u32 %v3715, 4294901760
    %v3880 = vsub.f32 %v3715, %v3879
    %v3881 = vand.u32 %v3880, 4294901760
    %v3882 = vsub.f32 %v3880, %v3881
    %v3883 = vand.u32 %v3882, 4294901760
    %3884 = vmatpush1.msra.mxu0 %v3883
    %3885 = vmatprep.subr.mxu0 0.0
    %v3886 = vand.u32 %v3714, 4294901760
    %v3887 = vsub.f32 %v3714, %v3886
    %v3888 = vand.u32 %v3887, 4294901760
    %v3889 = vsub.f32 %v3887, %v3888
    %v3890 = vand.u32 %v3889, 4294901760
    %3891 = vmatpush1.msra.mxu0 %v3890
    %3892 = vmatprep.subr.mxu0 0.0
    %v3893 = vand.u32 %v3713, 4294901760
    %v3894 = vsub.f32 %v3713, %v3893
    %v3895 = vand.u32 %v3894, 4294901760
    %v3896 = vsub.f32 %v3894, %v3895
    %v3897 = vand.u32 %v3896, 4294901760
    %3898 = vmatpush1.msra.mxu0 %v3897
    %3899 = vmatprep.subr.mxu0 0.0
    %v3900 = vand.u32 %v3712, 4294901760
    %v3901 = vsub.f32 %v3712, %v3900
    %v3902 = vand.u32 %v3901, 4294901760
    %v3903 = vsub.f32 %v3901, %v3902
    %v3904 = vand.u32 %v3903, 4294901760
    %3905 = vmatpush1.msra.mxu0 %v3904
    %3906 = vmatprep.subr.mxu0 0.0
    %v3907 = vand.u32 %v3711, 4294901760
    %v3908 = vsub.f32 %v3711, %v3907
    %v3909 = vand.u32 %v3908, 4294901760
    %v3910 = vsub.f32 %v3908, %v3909
    %v3911 = vand.u32 %v3910, 4294901760
    %3912 = vmatpush1.msra.mxu0 %v3911
    %3913 = vmatprep.subr.mxu0 0.0
    %v3914 = vand.u32 %v3710, 4294901760
    %v3915 = vsub.f32 %v3710, %v3914
    %v3916 = vand.u32 %v3915, 4294901760
    %v3917 = vsub.f32 %v3915, %v3916
    %v3918 = vand.u32 %v3917, 4294901760
    %3919 = vmatpush1.msra.mxu0 %v3918
    %3920 = vmatprep.subr.mxu0 0.0
    %v3921 = vand.u32 %v3709, 4294901760
    %v3922 = vsub.f32 %v3709, %v3921
    %v3923 = vand.u32 %v3922, 4294901760
    %v3924 = vsub.f32 %v3922, %v3923
    %v3925 = vand.u32 %v3924, 4294901760
    %3926 = vmatpush1.msra.mxu0 %v3925
    %3927 = vmatprep.subr.mxu0 0.0
    %v3928 = vand.u32 %v3708, 4294901760
    %v3929 = vsub.f32 %v3708, %v3928
    %v3930 = vand.u32 %v3929, 4294901760
    %v3931 = vsub.f32 %v3929, %v3930
    %v3932 = vand.u32 %v3931, 4294901760
    %3933 = vmatpush1.msra.mxu0 %v3932
    %3934 = vmatprep.subr.mxu0 0.0
    %3935 = vmatpush2.msra.mxu0 0.0
    %3936 = vmatprep.subr.mxu0 0.0
    %3937 = vmatpush2.msra.mxu0 0.0
    %3938 = vmatprep.subr.mxu0 0.0
    %3939 = vmatpush2.msra.mxu0 0.0
    %3940 = vmatprep.subr.mxu0 0.0
    %3941 = vmatpush2.msra.mxu0 0.0
    %3942 = vmatprep.subr.mxu0 0.0
    %3943 = vmatpush2.msra.mxu0 0.0
    %3944 = vmatprep.subr.mxu0 0.0
    %3945 = vmatpush2.msra.mxu0 0.0
    %3946 = vmatprep.subr.mxu0 0.0
    %3947 = vmatpush2.msra.mxu0 0.0
    %3948 = vmatprep.subr.mxu0 0.0
    %3949 = vmatpush2.msra.mxu0 0.0
    %3950 = vmatprep.subr.mxu0 0.0
    %3951 = vmatpush2.msra.mxu0 0.0
    %3952 = vmatprep.subr.mxu0 0.0
    %3953 = vmatpush2.msra.mxu0 0.0
    %3954 = vmatprep.subr.mxu0 0.0
    %3955 = vmatpush2.msra.mxu0 0.0
    %3956 = vmatprep.subr.mxu0 0.0
    %3957 = vmatpush2.msra.mxu0 0.0
    %3958 = vmatprep.subr.mxu0 0.0
    %3959 = vmatpush2.msra.mxu0 0.0
    %3960 = vmatprep.subr.mxu0 0.0
    %3961 = vmatpush2.msra.mxu0 0.0
    %3962 = vmatprep.subr.mxu0 0.0
    %3963 = vmatpush2.msra.mxu0 0.0
    %3964 = vmatprep.subr.mxu0 0.0
    %3965 = vmatpush2.msra.mxu0 0.0
    %3966 = vmatprep.mubr.f32.mxu0 0.0
    %v3967 = vand.u32 %v3707, 4294901760
    %3968 = vmatmul.mubr.f32.gmra.mxu0 %v3967
    %v3969 = vpop.f32.mrf.mxu0
    %v3970 = vadd.f32 %v3819, %v3969
    %v3971 = vpop.f32.mrf.mxu0
    %3972 = vdwg.mxu0
    %3973 = vmatprep.subr.mxu0 0.0
    %v3974 = vand.u32 %v3723, 4294901760
    %v3975 = vsub.f32 %v3723, %v3974
    %3976 = vmatpush1.msra.mxu0 %v3975
    %3977 = vmatprep.subr.mxu0 0.0
    %v3978 = vand.u32 %v3722, 4294901760
    %v3979 = vsub.f32 %v3722, %v3978
    %3980 = vmatpush1.msra.mxu0 %v3979
    %3981 = vmatprep.subr.mxu0 0.0
    %v3982 = vand.u32 %v3721, 4294901760
    %v3983 = vsub.f32 %v3721, %v3982
    %3984 = vmatpush1.msra.mxu0 %v3983
    %3985 = vmatprep.subr.mxu0 0.0
    %v3986 = vand.u32 %v3720, 4294901760
    %v3987 = vsub.f32 %v3720, %v3986
    %3988 = vmatpush1.msra.mxu0 %v3987
    %3989 = vmatprep.subr.mxu0 0.0
    %v3990 = vand.u32 %v3719, 4294901760
    %v3991 = vsub.f32 %v3719, %v3990
    %3992 = vmatpush1.msra.mxu0 %v3991
    %3993 = vmatprep.subr.mxu0 0.0
    %v3994 = vand.u32 %v3718, 4294901760
    %v3995 = vsub.f32 %v3718, %v3994
    %3996 = vmatpush1.msra.mxu0 %v3995
    %3997 = vmatprep.subr.mxu0 0.0
    %v3998 = vand.u32 %v3717, 4294901760
    %v3999 = vsub.f32 %v3717, %v3998
    %4000 = vmatpush1.msra.mxu0 %v3999
    %4001 = vmatprep.subr.mxu0 0.0
    %v4002 = vand.u32 %v3716, 4294901760
    %v4003 = vsub.f32 %v3716, %v4002
    %4004 = vmatpush1.msra.mxu0 %v4003
    %4005 = vmatprep.subr.mxu0 0.0
    %v4006 = vand.u32 %v3715, 4294901760
    %v4007 = vsub.f32 %v3715, %v4006
    %4008 = vmatpush1.msra.mxu0 %v4007
    %4009 = vmatprep.subr.mxu0 0.0
    %v4010 = vand.u32 %v3714, 4294901760
    %v4011 = vsub.f32 %v3714, %v4010
    %4012 = vmatpush1.msra.mxu0 %v4011
    %4013 = vmatprep.subr.mxu0 0.0
    %v4014 = vand.u32 %v3713, 4294901760
    %v4015 = vsub.f32 %v3713, %v4014
    %4016 = vmatpush1.msra.mxu0 %v4015
    %4017 = vmatprep.subr.mxu0 0.0
    %v4018 = vand.u32 %v3712, 4294901760
    %v4019 = vsub.f32 %v3712, %v4018
    %4020 = vmatpush1.msra.mxu0 %v4019
    %4021 = vmatprep.subr.mxu0 0.0
    %v4022 = vand.u32 %v3711, 4294901760
    %v4023 = vsub.f32 %v3711, %v4022
    %4024 = vmatpush1.msra.mxu0 %v4023
    %4025 = vmatprep.subr.mxu0 0.0
    %v4026 = vand.u32 %v3710, 4294901760
    %v4027 = vsub.f32 %v3710, %v4026
    %4028 = vmatpush1.msra.mxu0 %v4027
    %4029 = vmatprep.subr.mxu0 0.0
    %v4030 = vand.u32 %v3709, 4294901760
    %v4031 = vsub.f32 %v3709, %v4030
    %4032 = vmatpush1.msra.mxu0 %v4031
    %4033 = vmatprep.subr.mxu0 0.0
    %v4034 = vand.u32 %v3708, 4294901760
    %v4035 = vsub.f32 %v3708, %v4034
    %4036 = vmatpush1.msra.mxu0 %v4035
    %4037 = vmatprep.subr.mxu0 0.0
    %4038 = vmatpush2.msra.mxu0 0.0
    %4039 = vmatprep.subr.mxu0 0.0
    %4040 = vmatpush2.msra.mxu0 0.0
    %4041 = vmatprep.subr.mxu0 0.0
    %4042 = vmatpush2.msra.mxu0 0.0
    %4043 = vmatprep.subr.mxu0 0.0
    %4044 = vmatpush2.msra.mxu0 0.0
    %4045 = vmatprep.subr.mxu0 0.0
    %4046 = vmatpush2.msra.mxu0 0.0
    %4047 = vmatprep.subr.mxu0 0.0
    %4048 = vmatpush2.msra.mxu0 0.0
    %4049 = vmatprep.subr.mxu0 0.0
    %4050 = vmatpush2.msra.mxu0 0.0
    %4051 = vmatprep.subr.mxu0 0.0
    %4052 = vmatpush2.msra.mxu0 0.0
    %4053 = vmatprep.subr.mxu0 0.0
    %4054 = vmatpush2.msra.mxu0 0.0
    %4055 = vmatprep.subr.mxu0 0.0
    %4056 = vmatpush2.msra.mxu0 0.0
    %4057 = vmatprep.subr.mxu0 0.0
    %4058 = vmatpush2.msra.mxu0 0.0
    %4059 = vmatprep.subr.mxu0 0.0
    %4060 = vmatpush2.msra.mxu0 0.0
    %4061 = vmatprep.subr.mxu0 0.0
    %4062 = vmatpush2.msra.mxu0 0.0
    %4063 = vmatprep.subr.mxu0 0.0
    %4064 = vmatpush2.msra.mxu0 0.0
    %4065 = vmatprep.subr.mxu0 0.0
    %4066 = vmatpush2.msra.mxu0 0.0
    %4067 = vmatprep.subr.mxu0 0.0
    %4068 = vmatpush2.msra.mxu0 0.0
    %4069 = vmatprep.mubr.f32.mxu0 0.0
    %v4070 = vand.u32 %v3707, 4294901760
    %v4071 = vsub.f32 %v3707, %v4070
    %4072 = vmatmul.mubr.f32.gmra.mxu0 %v4071
    %v4073 = vpop.f32.mrf.mxu0
    %v4074 = vadd.f32 %v3970, %v4073
    %v4075 = vpop.f32.mrf.mxu0
    %4076 = vdwg.mxu0
    %4077 = vmatprep.subr.mxu0 0.0
    %v4078 = vand.u32 %v3723, 4294901760
    %4079 = vmatpush1.msra.mxu0 %v4078
    %4080 = vmatprep.subr.mxu0 0.0
    %v4081 = vand.u32 %v3722, 4294901760
    %4082 = vmatpush1.msra.mxu0 %v4081
    %4083 = vmatprep.subr.mxu0 0.0
    %v4084 = vand.u32 %v3721, 4294901760
    %4085 = vmatpush1.msra.mxu0 %v4084
    %4086 = vmatprep.subr.mxu0 0.0
    %v4087 = vand.u32 %v3720, 4294901760
    %4088 = vmatpush1.msra.mxu0 %v4087
    %4089 = vmatprep.subr.mxu0 0.0
    %v4090 = vand.u32 %v3719, 4294901760
    %4091 = vmatpush1.msra.mxu0 %v4090
    %4092 = vmatprep.subr.mxu0 0.0
    %v4093 = vand.u32 %v3718, 4294901760
    %4094 = vmatpush1.msra.mxu0 %v4093
    %4095 = vmatprep.subr.mxu0 0.0
    %v4096 = vand.u32 %v3717, 4294901760
    %4097 = vmatpush1.msra.mxu0 %v4096
    %4098 = vmatprep.subr.mxu0 0.0
    %v4099 = vand.u32 %v3716, 4294901760
    %4100 = vmatpush1.msra.mxu0 %v4099
    %4101 = vmatprep.subr.mxu0 0.0
    %v4102 = vand.u32 %v3715, 4294901760
    %4103 = vmatpush1.msra.mxu0 %v4102
    %4104 = vmatprep.subr.mxu0 0.0
    %v4105 = vand.u32 %v3714, 4294901760
    %4106 = vmatpush1.msra.mxu0 %v4105
    %4107 = vmatprep.subr.mxu0 0.0
    %v4108 = vand.u32 %v3713, 4294901760
    %4109 = vmatpush1.msra.mxu0 %v4108
    %4110 = vmatprep.subr.mxu0 0.0
    %v4111 = vand.u32 %v3712, 4294901760
    %4112 = vmatpush1.msra.mxu0 %v4111
    %4113 = vmatprep.subr.mxu0 0.0
    %v4114 = vand.u32 %v3711, 4294901760
    %4115 = vmatpush1.msra.mxu0 %v4114
    %4116 = vmatprep.subr.mxu0 0.0
    %v4117 = vand.u32 %v3710, 4294901760
    %4118 = vmatpush1.msra.mxu0 %v4117
    %4119 = vmatprep.subr.mxu0 0.0
    %v4120 = vand.u32 %v3709, 4294901760
    %4121 = vmatpush1.msra.mxu0 %v4120
    %4122 = vmatprep.subr.mxu0 0.0
    %v4123 = vand.u32 %v3708, 4294901760
    %4124 = vmatpush1.msra.mxu0 %v4123
    %4125 = vmatprep.subr.mxu0 0.0
    %4126 = vmatpush2.msra.mxu0 0.0
    %4127 = vmatprep.subr.mxu0 0.0
    %4128 = vmatpush2.msra.mxu0 0.0
    %4129 = vmatprep.subr.mxu0 0.0
    %4130 = vmatpush2.msra.mxu0 0.0
    %4131 = vmatprep.subr.mxu0 0.0
    %4132 = vmatpush2.msra.mxu0 0.0
    %4133 = vmatprep.subr.mxu0 0.0
    %4134 = vmatpush2.msra.mxu0 0.0
    %4135 = vmatprep.subr.mxu0 0.0
    %4136 = vmatpush2.msra.mxu0 0.0
    %4137 = vmatprep.subr.mxu0 0.0
    %4138 = vmatpush2.msra.mxu0 0.0
    %4139 = vmatprep.subr.mxu0 0.0
    %4140 = vmatpush2.msra.mxu0 0.0
    %4141 = vmatprep.subr.mxu0 0.0
    %4142 = vmatpush2.msra.mxu0 0.0
    %4143 = vmatprep.subr.mxu0 0.0
    %4144 = vmatpush2.msra.mxu0 0.0
    %4145 = vmatprep.subr.mxu0 0.0
    %4146 = vmatpush2.msra.mxu0 0.0
    %4147 = vmatprep.subr.mxu0 0.0
    %4148 = vmatpush2.msra.mxu0 0.0
    %4149 = vmatprep.subr.mxu0 0.0
    %4150 = vmatpush2.msra.mxu0 0.0
    %4151 = vmatprep.subr.mxu0 0.0
    %4152 = vmatpush2.msra.mxu0 0.0
    %4153 = vmatprep.subr.mxu0 0.0
    %4154 = vmatpush2.msra.mxu0 0.0
    %4155 = vmatprep.subr.mxu0 0.0
    %4156 = vmatpush2.msra.mxu0 0.0
    %4157 = vmatprep.mubr.f32.mxu0 0.0
    %v4158 = vand.u32 %v3707, 4294901760
    %v4159 = vsub.f32 %v3707, %v4158
    %v4160 = vand.u32 %v4159, 4294901760
    %4161 = vmatmul.mubr.f32.gmra.mxu0 %v4160
    %v4162 = vpop.f32.mrf.mxu0
    %v4163 = vadd.f32 %v4074, %v4162
    %v4164 = vpop.f32.mrf.mxu0
    %4165 = vdwg.mxu0
    %4166 = vmatprep.subr.mxu0 0.0
    %v4167 = vand.u32 %v3723, 4294901760
    %v4168 = vsub.f32 %v3723, %v4167
    %v4169 = vand.u32 %v4168, 4294901760
    %4170 = vmatpush1.msra.mxu0 %v4169
    %4171 = vmatprep.subr.mxu0 0.0
    %v4172 = vand.u32 %v3722, 4294901760
    %v4173 = vsub.f32 %v3722, %v4172
    %v4174 = vand.u32 %v4173, 4294901760
    %4175 = vmatpush1.msra.mxu0 %v4174
    %4176 = vmatprep.subr.mxu0 0.0
    %v4177 = vand.u32 %v3721, 4294901760
    %v4178 = vsub.f32 %v3721, %v4177
    %v4179 = vand.u32 %v4178, 4294901760
    %4180 = vmatpush1.msra.mxu0 %v4179
    %4181 = vmatprep.subr.mxu0 0.0
    %v4182 = vand.u32 %v3720, 4294901760
    %v4183 = vsub.f32 %v3720, %v4182
    %v4184 = vand.u32 %v4183, 4294901760
    %4185 = vmatpush1.msra.mxu0 %v4184
    %4186 = vmatprep.subr.mxu0 0.0
    %v4187 = vand.u32 %v3719, 4294901760
    %v4188 = vsub.f32 %v3719, %v4187
    %v4189 = vand.u32 %v4188, 4294901760
    %4190 = vmatpush1.msra.mxu0 %v4189
    %4191 = vmatprep.subr.mxu0 0.0
    %v4192 = vand.u32 %v3718, 4294901760
    %v4193 = vsub.f32 %v3718, %v4192
    %v4194 = vand.u32 %v4193, 4294901760
    %4195 = vmatpush1.msra.mxu0 %v4194
    %4196 = vmatprep.subr.mxu0 0.0
    %v4197 = vand.u32 %v3717, 4294901760
    %v4198 = vsub.f32 %v3717, %v4197
    %v4199 = vand.u32 %v4198, 4294901760
    %4200 = vmatpush1.msra.mxu0 %v4199
    %4201 = vmatprep.subr.mxu0 0.0
    %v4202 = vand.u32 %v3716, 4294901760
    %v4203 = vsub.f32 %v3716, %v4202
    %v4204 = vand.u32 %v4203, 4294901760
    %4205 = vmatpush1.msra.mxu0 %v4204
    %4206 = vmatprep.subr.mxu0 0.0
    %v4207 = vand.u32 %v3715, 4294901760
    %v4208 = vsub.f32 %v3715, %v4207
    %v4209 = vand.u32 %v4208, 4294901760
    %4210 = vmatpush1.msra.mxu0 %v4209
    %4211 = vmatprep.subr.mxu0 0.0
    %v4212 = vand.u32 %v3714, 4294901760
    %v4213 = vsub.f32 %v3714, %v4212
    %v4214 = vand.u32 %v4213, 4294901760
    %4215 = vmatpush1.msra.mxu0 %v4214
    %4216 = vmatprep.subr.mxu0 0.0
    %v4217 = vand.u32 %v3713, 4294901760
    %v4218 = vsub.f32 %v3713, %v4217
    %v4219 = vand.u32 %v4218, 4294901760
    %4220 = vmatpush1.msra.mxu0 %v4219
    %4221 = vmatprep.subr.mxu0 0.0
    %v4222 = vand.u32 %v3712, 4294901760
    %v4223 = vsub.f32 %v3712, %v4222
    %v4224 = vand.u32 %v4223, 4294901760
    %4225 = vmatpush1.msra.mxu0 %v4224
    %4226 = vmatprep.subr.mxu0 0.0
    %v4227 = vand.u32 %v3711, 4294901760
    %v4228 = vsub.f32 %v3711, %v4227
    %v4229 = vand.u32 %v4228, 4294901760
    %4230 = vmatpush1.msra.mxu0 %v4229
    %4231 = vmatprep.subr.mxu0 0.0
    %v4232 = vand.u32 %v3710, 4294901760
    %v4233 = vsub.f32 %v3710, %v4232
    %v4234 = vand.u32 %v4233, 4294901760
    %4235 = vmatpush1.msra.mxu0 %v4234
    %4236 = vmatprep.subr.mxu0 0.0
    %v4237 = vand.u32 %v3709, 4294901760
    %v4238 = vsub.f32 %v3709, %v4237
    %v4239 = vand.u32 %v4238, 4294901760
    %4240 = vmatpush1.msra.mxu0 %v4239
    %4241 = vmatprep.subr.mxu0 0.0
    %v4242 = vand.u32 %v3708, 4294901760
    %v4243 = vsub.f32 %v3708, %v4242
    %v4244 = vand.u32 %v4243, 4294901760
    %4245 = vmatpush1.msra.mxu0 %v4244
    %4246 = vmatprep.subr.mxu0 0.0
    %4247 = vmatpush2.msra.mxu0 0.0
    %4248 = vmatprep.subr.mxu0 0.0
    %4249 = vmatpush2.msra.mxu0 0.0
    %4250 = vmatprep.subr.mxu0 0.0
    %4251 = vmatpush2.msra.mxu0 0.0
    %4252 = vmatprep.subr.mxu0 0.0
    %4253 = vmatpush2.msra.mxu0 0.0
    %4254 = vmatprep.subr.mxu0 0.0
    %4255 = vmatpush2.msra.mxu0 0.0
    %4256 = vmatprep.subr.mxu0 0.0
    %4257 = vmatpush2.msra.mxu0 0.0
    %4258 = vmatprep.subr.mxu0 0.0
    %4259 = vmatpush2.msra.mxu0 0.0
    %4260 = vmatprep.subr.mxu0 0.0
    %4261 = vmatpush2.msra.mxu0 0.0
    %4262 = vmatprep.subr.mxu0 0.0
    %4263 = vmatpush2.msra.mxu0 0.0
    %4264 = vmatprep.subr.mxu0 0.0
    %4265 = vmatpush2.msra.mxu0 0.0
    %4266 = vmatprep.subr.mxu0 0.0
    %4267 = vmatpush2.msra.mxu0 0.0
    %4268 = vmatprep.subr.mxu0 0.0
    %4269 = vmatpush2.msra.mxu0 0.0
    %4270 = vmatprep.subr.mxu0 0.0
    %4271 = vmatpush2.msra.mxu0 0.0
    %4272 = vmatprep.subr.mxu0 0.0
    %4273 = vmatpush2.msra.mxu0 0.0
    %4274 = vmatprep.subr.mxu0 0.0
    %4275 = vmatpush2.msra.mxu0 0.0
    %4276 = vmatprep.subr.mxu0 0.0
    %4277 = vmatpush2.msra.mxu0 0.0
    %4278 = vmatprep.mubr.f32.mxu0 0.0
    %v4279 = vand.u32 %v3707, 4294901760
    %4280 = vmatmul.mubr.f32.gmra.mxu0 %v4279
    %v4281 = vpop.f32.mrf.mxu0
    %v4282 = vadd.f32 %v4163, %v4281
    %v4283 = vpop.f32.mrf.mxu0
    %4284 = vdwg.mxu0
    %4285 = vmatprep.subr.mxu0 0.0
    %v4286 = vand.u32 %v3723, 4294901760
    %4287 = vmatpush1.msra.mxu0 %v4286
    %4288 = vmatprep.subr.mxu0 0.0
    %v4289 = vand.u32 %v3722, 4294901760
    %4290 = vmatpush1.msra.mxu0 %v4289
    %4291 = vmatprep.subr.mxu0 0.0
    %v4292 = vand.u32 %v3721, 4294901760
    %4293 = vmatpush1.msra.mxu0 %v4292
    %4294 = vmatprep.subr.mxu0 0.0
    %v4295 = vand.u32 %v3720, 4294901760
    %4296 = vmatpush1.msra.mxu0 %v4295
    %4297 = vmatprep.subr.mxu0 0.0
    %v4298 = vand.u32 %v3719, 4294901760
    %4299 = vmatpush1.msra.mxu0 %v4298
    %4300 = vmatprep.subr.mxu0 0.0
    %v4301 = vand.u32 %v3718, 4294901760
    %4302 = vmatpush1.msra.mxu0 %v4301
    %4303 = vmatprep.subr.mxu0 0.0
    %v4304 = vand.u32 %v3717, 4294901760
    %4305 = vmatpush1.msra.mxu0 %v4304
    %4306 = vmatprep.subr.mxu0 0.0
    %v4307 = vand.u32 %v3716, 4294901760
    %4308 = vmatpush1.msra.mxu0 %v4307
    %4309 = vmatprep.subr.mxu0 0.0
    %v4310 = vand.u32 %v3715, 4294901760
    %4311 = vmatpush1.msra.mxu0 %v4310
    %4312 = vmatprep.subr.mxu0 0.0
    %v4313 = vand.u32 %v3714, 4294901760
    %4314 = vmatpush1.msra.mxu0 %v4313
    %4315 = vmatprep.subr.mxu0 0.0
    %v4316 = vand.u32 %v3713, 4294901760
    %4317 = vmatpush1.msra.mxu0 %v4316
    %4318 = vmatprep.subr.mxu0 0.0
    %v4319 = vand.u32 %v3712, 4294901760
    %4320 = vmatpush1.msra.mxu0 %v4319
    %4321 = vmatprep.subr.mxu0 0.0
    %v4322 = vand.u32 %v3711, 4294901760
    %4323 = vmatpush1.msra.mxu0 %v4322
    %4324 = vmatprep.subr.mxu0 0.0
    %v4325 = vand.u32 %v3710, 4294901760
    %4326 = vmatpush1.msra.mxu0 %v4325
    %4327 = vmatprep.subr.mxu0 0.0
    %v4328 = vand.u32 %v3709, 4294901760
    %4329 = vmatpush1.msra.mxu0 %v4328
    %4330 = vmatprep.subr.mxu0 0.0
    %v4331 = vand.u32 %v3708, 4294901760
    %4332 = vmatpush1.msra.mxu0 %v4331
    %4333 = vmatprep.subr.mxu0 0.0
    %4334 = vmatpush2.msra.mxu0 0.0
    %4335 = vmatprep.subr.mxu0 0.0
    %4336 = vmatpush2.msra.mxu0 0.0
    %4337 = vmatprep.subr.mxu0 0.0
    %4338 = vmatpush2.msra.mxu0 0.0
    %4339 = vmatprep.subr.mxu0 0.0
    %4340 = vmatpush2.msra.mxu0 0.0
    %4341 = vmatprep.subr.mxu0 0.0
    %4342 = vmatpush2.msra.mxu0 0.0
    %4343 = vmatprep.subr.mxu0 0.0
    %4344 = vmatpush2.msra.mxu0 0.0
    %4345 = vmatprep.subr.mxu0 0.0
    %4346 = vmatpush2.msra.mxu0 0.0
    %4347 = vmatprep.subr.mxu0 0.0
    %4348 = vmatpush2.msra.mxu0 0.0
    %4349 = vmatprep.subr.mxu0 0.0
    %4350 = vmatpush2.msra.mxu0 0.0
    %4351 = vmatprep.subr.mxu0 0.0
    %4352 = vmatpush2.msra.mxu0 0.0
    %4353 = vmatprep.subr.mxu0 0.0
    %4354 = vmatpush2.msra.mxu0 0.0
    %4355 = vmatprep.subr.mxu0 0.0
    %4356 = vmatpush2.msra.mxu0 0.0
    %4357 = vmatprep.subr.mxu0 0.0
    %4358 = vmatpush2.msra.mxu0 0.0
    %4359 = vmatprep.subr.mxu0 0.0
    %4360 = vmatpush2.msra.mxu0 0.0
    %4361 = vmatprep.subr.mxu0 0.0
    %4362 = vmatpush2.msra.mxu0 0.0
    %4363 = vmatprep.subr.mxu0 0.0
    %4364 = vmatpush2.msra.mxu0 0.0
    %4365 = vmatprep.mubr.f32.mxu0 0.0
    %v4366 = vand.u32 %v3707, 4294901760
    %4367 = vmatmul.mubr.f32.gmra.mxu0 %v4366
    %v4368 = vpop.f32.mrf.mxu0
    %v4369 = vadd.f32 %v4282, %v4368
    %v4370 = vpop.f32.mrf.mxu0
    %4371 = vdwg.mxu0
    %vm4372 = vcmask 64512
    %4373 = vst.msk [vmem:[#allocation7] sm:$0xff] %vm4372, %v4369
    // Predicated region
    $region34: #{tpu_custom_call.1} parent=1 // pred_check
      _
    $region35: #{tpu_custom_call.1} parent=1 // pred_check_branch
      %4375 = sbr.rel (0) target = $region37
    $region36: #{tpu_custom_call.1} parent=1 // pred_region
      %s4377 = ssub.s32 128, 128
      %4378 = vsyncadd [#allocation4], %s4377
      %s4380 = sshll.u32 [#allocation7], 4
      %s4381 = int_to_ptr.vmem [resolvable:$true] %s4380
      %4383 = dma.vmem_to_hbm [thread:$0]  %s4381, 128, %s6, [#allocation4]
    $region37: #{tpu_custom_call.1} parent=1 // pred_fallthru
      _
    // Predicated region
    $region38: #{tpu_custom_call.1} parent=1 // pred_check
      _
    $region39: #{tpu_custom_call.1} parent=1 // pred_check_branch
      %4385 = sbr.rel (0) target = $region41
    $region40: #{tpu_custom_call.1} parent=1 // pred_region
      %4386 = dma.done [#allocation4], 128
    $region41: #{tpu_custom_call.1} parent=1 // pred_fallthru
      _
    %4387 = vsyncpa [#allocation3], 1
    %4388 = vsyncpa [#allocation6], 1
    %4389 = vsyncpa [#allocation4], 1

</llo_original>
